<compile_context>
chip_gen: v7x
topology: tpu7x:2x2x1
jax: 0.10.0
libtpu: 0.0.40
codegen_flags: <defaults>
</compile_context>

<pallas_src>
import functools

import jax
import jax.numpy as jnp
from jax.experimental import pallas as pl
from jax.experimental.pallas import tpu as pltpu

BN_EPS = 1e-5       # nn.BatchNorm default eps
NORM_EPS = 1e-12    # F.normalize default eps


def _round_up(x, m):
    return ((x + m - 1) // m) * m


# --------------------------- in-kernel helpers ------------------------------

def _group_select(n_groups, rows_per_group):
    """sel[g, r] = 1.0 iff row r belongs to contiguous group g.  [G, R]."""
    rows = n_groups * rows_per_group
    r = jax.lax.broadcasted_iota(jnp.int32, (n_groups, rows), 1)
    g = jax.lax.broadcasted_iota(jnp.int32, (n_groups, rows), 0)
    lo = g * rows_per_group
    return ((r >= lo) & (r < lo + rows_per_group)).astype(jnp.float32)


def _group_scatter(n_groups, rows_per_group):
    """scat[r, g] = 1.0 iff row r belongs to contiguous group g.  [R, G]."""
    rows = n_groups * rows_per_group
    r = jax.lax.broadcasted_iota(jnp.int32, (rows, n_groups), 0)
    g = jax.lax.broadcasted_iota(jnp.int32, (rows, n_groups), 1)
    lo = g * rows_per_group
    return ((r >= lo) & (r < lo + rows_per_group)).astype(jnp.float32)


def _bn_relu_per_view(h, gamma, beta, n_views, rows_per_view):
    """Training-mode BatchNorm (biased var, one-pass stats) + ReLU.

    Stats are computed independently per contiguous row group (= per view),
    matching the separate per-view module calls in the PyTorch reference.
    Group reduce/broadcast use small selection-matrix matmuls (MXU) to avoid
    in-kernel sublane slicing/concat.
    """
    sel = _group_select(n_views, rows_per_view)      # [V, R]
    scat = _group_scatter(n_views, rows_per_view)    # [R, V]
    inv_n = 1.0 / float(rows_per_view)
    mean = jnp.dot(sel, h, preferred_element_type=jnp.float32) * inv_n
    mean_sq = jnp.dot(sel, h * h, preferred_element_type=jnp.float32) * inv_n
    var = jnp.maximum(mean_sq - mean * mean, 0.0)
    scale = gamma * jax.lax.rsqrt(var + BN_EPS)      # [V, C]
    shift = beta - mean * scale                      # [V, C]
    y = (h * jnp.dot(scat, scale, preferred_element_type=jnp.float32)
         + jnp.dot(scat, shift, preferred_element_type=jnp.float32))
    return jnp.maximum(y, 0.0)


def _l2_normalize(x):
    """F.normalize(x, p=2, dim=1, eps=1e-12): x / max(||x||, eps), via rsqrt."""
    ss = jnp.sum(x * x, axis=-1, keepdims=True)
    return x * jax.lax.rsqrt(jnp.maximum(ss, NORM_EPS * NORM_EPS))


def _mlp_block(x, w1, b1, g, be, w2, b2, n_views, rows_per_view):
    """Linear -> BatchNorm1d(train batch stats, per view) -> ReLU -> Linear."""
    h = jnp.dot(x, w1, preferred_element_type=jnp.float32) + b1
    h = _bn_relu_per_view(h, g, be, n_views, rows_per_view)
    return jnp.dot(h, w2, preferred_element_type=jnp.float32) + b2


# ----------------------------- Pallas kernels ------------------------------

def conv_bn_relu_kernel(p_ref, w_ref, g_ref, b_ref, o_ref, *, n_views,
                        rows_per_view):
    # fused conv-as-matmul (bf16 operands, f32 MXU acc) + BN(train, per view) + ReLU
    acc = jnp.dot(p_ref[...], w_ref[...], preferred_element_type=jnp.float32)
    o_ref[...] = _bn_relu_per_view(acc, g_ref[...], b_ref[...],
                                   n_views, rows_per_view).astype(o_ref.dtype)


def pool_gap_kernel(taps_ref, o_ref, *, n_taps, n_samples, rows_per_sample):
    # fused 3x3/s2 maxpool tap-reduction + global average pool
    pooled = taps_ref[0].astype(jnp.float32)
    for t in range(1, n_taps):
        pooled = jnp.maximum(pooled, taps_ref[t].astype(jnp.float32))
    sel = _group_select(n_samples, rows_per_sample)           # [S, R]
    o_ref[...] = (jnp.dot(sel, pooled, preferred_element_type=jnp.float32)
                  * (1.0 / float(rows_per_sample))).astype(o_ref.dtype)


def online_head_kernel(x_ref, pw1, pb1, pg, pbe, pw2, pb2,
                       qw1, qb1, qg, qbe, qw2, qb2, o_ref, *, n_views,
                       rows_per_view):
    # projection MLP -> prediction MLP -> l2 normalize  (online branch)
    x = x_ref[...].astype(jnp.float32)
    z = _mlp_block(x, pw1[...], pb1[...], pg[...], pbe[...], pw2[...], pb2[...],
                   n_views, rows_per_view)
    p = _mlp_block(z, qw1[...], qb1[...], qg[...], qbe[...], qw2[...], qb2[...],
                   n_views, rows_per_view)
    o_ref[...] = _l2_normalize(p).astype(o_ref.dtype)


def target_head_kernel(x_ref, w1, b1, g, be, w2, b2, o_ref, *, n_views,
                       rows_per_view):
    # projection MLP -> l2 normalize  (target branch; no_grad in torch)
    x = x_ref[...].astype(jnp.float32)
    z = _mlp_block(x, w1[...], b1[...], g[...], be[...], w2[...], b2[...],
                   n_views, rows_per_view)
    o_ref[...] = _l2_normalize(z).astype(o_ref.dtype)


# --------------------------- pallas_call wrapper ----------------------------

def _vmem_spec():
    return pl.BlockSpec(memory_space=pltpu.MemorySpace.VMEM)


def _pcall(kernel, out_shape, *args):
    # Demo shapes fit whole-array VMEM blocks comfortably (few hundred KiB).
    return pl.pallas_call(
        kernel,
        out_shape=out_shape,
        in_specs=[_vmem_spec() for _ in args],
        out_specs=_vmem_spec(),
    )(*args)


# ------------------- XLA layout glue (im2col / pool taps) -------------------

def im2col_7x7_s2_p3(x):
    """x: [B, C, H, W] NCHW -> patches [B*OH*OW, C*7*7], (C, kh, kw) order."""
    k, stride, pad = 7, 2, 3
    B, C, H, W = x.shape
    OH = (H + 2 * pad - k) // stride + 1
    OW = (W + 2 * pad - k) // stride + 1
    xp = jnp.pad(x, ((0, 0), (0, 0), (pad, pad), (pad, pad)))
    taps = []
    for i in range(k):
        for j in range(k):
            taps.append(xp[:, :, i:i + stride * (OH - 1) + 1:stride,
                              j:j + stride * (OW - 1) + 1:stride])
    patches = jnp.stack(taps, axis=0).reshape(k, k, B, C, OH, OW)
    patches = patches.transpose(2, 4, 5, 3, 0, 1).reshape(B * OH * OW, C * k * k)
    return patches, OH, OW


def maxpool_taps_3x3_s2_p1(x_nhwc):
    """x: [B, H, W, C] -> taps [9, B*PH*PW, C] (-inf padded), PH, PW."""
    B, H, W, C = x_nhwc.shape
    PH = (H + 2 - 3) // 2 + 1
    PW = (W + 2 - 3) // 2 + 1
    xp = jnp.pad(x_nhwc, ((0, 0), (1, 1), (1, 1), (0, 0)),
                 constant_values=-jnp.inf)
    taps = []
    for i in range(3):
        for j in range(3):
            taps.append(xp[:, i:i + 2 * (PH - 1) + 1:2, j:j + 2 * (PW - 1) + 1:2, :])
    return jnp.stack(taps, axis=0).reshape(9, B * PH * PW, C), PH, PW


# ------------------------------ BYOL forward --------------------------------

def encoder_forward(x, enc_online, enc_target):
    """Reduced ResNet stem for BOTH branches at once (weights lane-stacked).

    x: [NB, C, H, W] with NB = 2*B (both views).  Returns feat [NB, 128]:
    columns [:64] are online-encoder features, [64:] target-encoder features.
    """
    NB = x.shape[0]
    patches, OH, OW = im2col_7x7_s2_p3(x)                         # [NB*OH*OW, C*49]
    k_pad = _round_up(patches.shape[1], 128)
    patches = jnp.pad(patches, ((0, 0), (0, k_pad - patches.shape[1])))
    patches = patches.astype(jnp.bfloat16)                        # MXU operands bf16

    conv_w = jnp.concatenate([enc_online['conv_w'], enc_target['conv_w']],
                             axis=1).astype(jnp.bfloat16)          # [k_pad, 128]
    bn_g = jnp.concatenate([enc_online['bn_g'], enc_target['bn_g']], axis=1)
    bn_b = jnp.concatenate([enc_online['bn_b'], enc_target['bn_b']], axis=1)

    rows = patches.shape[0]
    rows_per_view = rows // 2
    c_out = conv_w.shape[1]
    act = _pcall(functools.partial(conv_bn_relu_kernel, n_views=2,
                                   rows_per_view=rows_per_view),
                 jax.ShapeDtypeStruct((rows, c_out), jnp.float32),
                 patches, conv_w, bn_g, bn_b)                      # [rows, 128]

    act = act.reshape(NB, OH, OW, c_out)
    taps, PH, PW = maxpool_taps_3x3_s2_p1(act)                     # [9, NB*PH*PW, 128]
    feat = _pcall(functools.partial(pool_gap_kernel, n_taps=9, n_samples=NB,
                                    rows_per_sample=PH * PW),
                  jax.ShapeDtypeStruct((NB, c_out), jnp.float32), taps)
    return feat                                                    # [NB, 128]


def byol_forward(params, x1, x2):
    B = x1.shape[0]
    x = jnp.concatenate([x1, x2], axis=0)                          # [2B, C, H, W]
    feat = encoder_forward(x, params['online_enc'], params['target_enc'])

    on_proj = params['online_proj']
    on_pred = params['online_pred']
    tg_proj = params['target_proj']

    # Zero-pad each projection's first Linear so it consumes the full stacked
    # 128-lane feature vector (zero rows select the matching encoder half ->
    # lane-dense head input, no wrapper-side slicing of feat).
    zeros = jnp.zeros_like(on_proj['w1'])
    pw1 = jnp.concatenate([on_proj['w1'], zeros], axis=0)          # [128, hidden]
    tw1 = jnp.concatenate([zeros, tg_proj['w1']], axis=0)          # [128, hidden]

    out_dim = on_pred['w2'].shape[1]
    out_on = _pcall(
        functools.partial(online_head_kernel, n_views=2, rows_per_view=B),
        jax.ShapeDtypeStruct((2 * B, out_dim), jnp.float32),
        feat, pw1, on_proj['b1'], on_proj['g'], on_proj['be'],
        on_proj['w2'], on_proj['b2'],
        on_pred['w1'], on_pred['b1'], on_pred['g'], on_pred['be'],
        on_pred['w2'], on_pred['b2'])                              # [2B, out_dim]

    out_tg = _pcall(
        functools.partial(target_head_kernel, n_views=2, rows_per_view=B),
        jax.ShapeDtypeStruct((2 * B, tg_proj['w2'].shape[1]), jnp.float32),
        feat, tw1, tg_proj['b1'], tg_proj['g'], tg_proj['be'],
        tg_proj['w2'], tg_proj['b2'])                              # [2B, out_dim]

    return out_on[:B], out_on[B:], out_tg[:B], out_tg[B:]


# ------------------------------ parameter init -------------------------------

def init_params(key, c_in=4, stem_c=64, hidden_dim=32, out_dim=16,
                momentum_decay_rate=0.99):
    feat_dim = stem_c  # encoder_inf of the reduced encoder
    ks = list(jax.random.split(key, 8))

    def dense(k, fan_in, fan_out):
        w = jax.random.normal(k, (fan_in, fan_out), jnp.float32) / jnp.sqrt(float(fan_in))
        b = jnp.zeros((1, fan_out), jnp.float32)
        return w, b

    k_raw = c_in * 49
    k_pad = _round_up(k_raw, 128)
    conv_w = (jax.random.normal(ks[0], (k_raw, stem_c), jnp.float32)
              / jnp.sqrt(float(k_raw)))
    conv_w = jnp.pad(conv_w, ((0, k_pad - k_raw), (0, 0)))          # zero rows: exact
    enc = dict(conv_w=conv_w,
               bn_g=jnp.ones((1, stem_c), jnp.float32),
               bn_b=jnp.zeros((1, stem_c), jnp.float32))

    def head(k1, k2, d_in, d_hid, d_out):
        w1, b1 = dense(k1, d_in, d_hid)
        w2, b2 = dense(k2, d_hid, d_out)
        return dict(w1=w1, b1=b1,
                    g=jnp.ones((1, d_hid), jnp.float32),
                    be=jnp.zeros((1, d_hid), jnp.float32),
                    w2=w2, b2=b2)

    online_proj = head(ks[1], ks[2], feat_dim, hidden_dim, out_dim)
    online_pred = head(ks[3], ks[4], out_dim, hidden_dim, out_dim)

    # target = deepcopy(online); update_targetNetwork(decay) leaves identical
    # copies unchanged: decay*t + (1-decay)*o == t when t == o at init.
    ema = lambda t, o: momentum_decay_rate * t + (1.0 - momentum_decay_rate) * o
    target_enc = jax.tree_util.tree_map(ema, enc, enc)
    target_proj = jax.tree_util.tree_map(ema, online_proj, online_proj)

    return dict(online_enc=enc, online_proj=online_proj, online_pred=online_pred,
                target_enc=target_enc, target_proj=target_proj)


# ----------------------------------- main ------------------------------------

if __name__ == "__main__":
    key = jax.random.PRNGKey(0)
    kp, k1, k2 = jax.random.split(key, 3)

    B, C, H, W = 2, 4, 16, 16
    x1 = jax.random.normal(k1, (B, C, H, W), jnp.float32)
    x2 = jax.random.normal(k2, (B, C, H, W), jnp.float32)

    params = init_params(kp, c_in=C, stem_c=64, hidden_dim=32, out_dim=16,
                         momentum_decay_rate=0.99)

    fwd = jax.jit(functools.partial(byol_forward, params))
    outs = fwd(x1, x2)
    outs = jax.block_until_ready(outs)

    # sanity: finite outputs, unit L2 rows, expected shapes
    for o in outs:
        assert o.shape == (B, 16), o.shape
        assert bool(jnp.all(jnp.isfinite(o)))
        assert bool(jnp.allclose(jnp.linalg.norm(o, axis=1), 1.0, atol=1e-4))

    print("KERNEL_OK")
</pallas_src>

<mosaic_0001>
module attributes {stable_mosaic.version = 11 : i64} {
  func.func @conv_bn_relu_kernel(%arg0: memref<256x256xbf16, #tpu.memory_space<vmem>>, %arg1: memref<256x128xbf16, #tpu.memory_space<vmem>>, %arg2: memref<1x128xf32, #tpu.memory_space<vmem>>, %arg3: memref<1x128xf32, #tpu.memory_space<vmem>>, %arg4: memref<256x128xf32, #tpu.memory_space<vmem>>) attributes {dimension_semantics = [], scalar_prefetch = 0 : i64, scratch_operands = 0 : i64, tpu.core_type = #tpu.core_type<tc>} {
    %c0 = arith.constant 0 : index
    %c0_0 = arith.constant 0 : index
    %0 = vector.load %arg0[%c0, %c0_0] : memref<256x256xbf16, #tpu.memory_space<vmem>>, vector<256x256xbf16>
    %c0_1 = arith.constant 0 : index
    %c0_2 = arith.constant 0 : index
    %1 = vector.load %arg1[%c0_1, %c0_2] : memref<256x128xbf16, #tpu.memory_space<vmem>>, vector<256x128xbf16>
    %cst = arith.constant dense<0.000000e+00> : vector<256x128xf32>
    %2 = tpu.matmul %0, %1, %cst {dimension_numbers = #tpu.dot_dimension_numbers<[1], [0], [0], [1], [0, 0, 1, 1], [], []>} : vector<256x256xbf16>, vector<256x128xbf16>, vector<256x128xf32> -> vector<256x128xf32>
    %c0_3 = arith.constant 0 : index
    %c0_4 = arith.constant 0 : index
    %3 = vector.load %arg2[%c0_3, %c0_4] : memref<1x128xf32, #tpu.memory_space<vmem>>, vector<1x128xf32>
    %c0_5 = arith.constant 0 : index
    %c0_6 = arith.constant 0 : index
    %4 = vector.load %arg3[%c0_5, %c0_6] : memref<1x128xf32, #tpu.memory_space<vmem>>, vector<1x128xf32>
    %5 = tpu.iota {dimensions = array<i32: 1>} : vector<2x256xi32>
    %6 = tpu.iota {dimensions = array<i32: 0>} : vector<2x256xi32>
    %c128_i32 = arith.constant 128 : i32
    %7 = vector.broadcast %c128_i32 : i32 to vector<2x256xi32>
    %8 = arith.muli %6, %7 : vector<2x256xi32>
    %9 = arith.cmpi sge, %5, %8 : vector<2x256xi32>
    %c128_i32_7 = arith.constant 128 : i32
    %10 = vector.broadcast %c128_i32_7 : i32 to vector<2x256xi32>
    %11 = arith.addi %8, %10 : vector<2x256xi32>
    %12 = arith.cmpi slt, %5, %11 : vector<2x256xi32>
    %13 = arith.andi %9, %12 : vector<2x256xi1>
    %14 = arith.extui %13 : vector<2x256xi1> to vector<2x256xi32>
    %15 = arith.sitofp %14 : vector<2x256xi32> to vector<2x256xf32>
    %16 = tpu.iota {dimensions = array<i32: 0>} : vector<256x2xi32>
    %17 = tpu.iota {dimensions = array<i32: 1>} : vector<256x2xi32>
    %c128_i32_8 = arith.constant 128 : i32
    %18 = vector.broadcast %c128_i32_8 : i32 to vector<256x2xi32>
    %19 = arith.muli %17, %18 : vector<256x2xi32>
    %20 = arith.cmpi sge, %16, %19 : vector<256x2xi32>
    %c128_i32_9 = arith.constant 128 : i32
    %21 = vector.broadcast %c128_i32_9 : i32 to vector<256x2xi32>
    %22 = arith.addi %19, %21 : vector<256x2xi32>
    %23 = arith.cmpi slt, %16, %22 : vector<256x2xi32>
    %24 = arith.andi %20, %23 : vector<256x2xi1>
    %25 = arith.extui %24 : vector<256x2xi1> to vector<256x2xi32>
    %26 = arith.sitofp %25 : vector<256x2xi32> to vector<256x2xf32>
    %cst_10 = arith.constant dense<0.000000e+00> : vector<2x128xf32>
    %27 = tpu.matmul %15, %2, %cst_10 {dimension_numbers = #tpu.dot_dimension_numbers<[1], [0], [0], [1], [0, 0, 1, 1], [], []>} : vector<2x256xf32>, vector<256x128xf32>, vector<2x128xf32> -> vector<2x128xf32>
    %cst_11 = arith.constant 7.812500e-03 : f32
    %28 = vector.broadcast %cst_11 : f32 to vector<2x128xf32>
    %29 = arith.mulf %27, %28 : vector<2x128xf32>
    %30 = arith.mulf %2, %2 : vector<256x128xf32>
    %cst_12 = arith.constant dense<0.000000e+00> : vector<2x128xf32>
    %31 = tpu.matmul %15, %30, %cst_12 {dimension_numbers = #tpu.dot_dimension_numbers<[1], [0], [0], [1], [0, 0, 1, 1], [], []>} : vector<2x256xf32>, vector<256x128xf32>, vector<2x128xf32> -> vector<2x128xf32>
    %cst_13 = arith.constant 7.812500e-03 : f32
    %32 = vector.broadcast %cst_13 : f32 to vector<2x128xf32>
    %33 = arith.mulf %31, %32 : vector<2x128xf32>
    %34 = arith.mulf %29, %29 : vector<2x128xf32>
    %35 = arith.subf %33, %34 : vector<2x128xf32>
    %cst_14 = arith.constant 0.000000e+00 : f32
    %36 = vector.broadcast %cst_14 : f32 to vector<2x128xf32>
    %37 = arith.maximumf %35, %36 : vector<2x128xf32>
    %cst_15 = arith.constant 9.99999974E-6 : f32
    %38 = vector.broadcast %cst_15 : f32 to vector<2x128xf32>
    %39 = arith.addf %37, %38 : vector<2x128xf32>
    %40 = math.rsqrt %39 : vector<2x128xf32>
    %41 = vector.broadcast %3 : vector<1x128xf32> to vector<2x128xf32>
    %42 = arith.mulf %41, %40 : vector<2x128xf32>
    %43 = arith.mulf %29, %42 : vector<2x128xf32>
    %44 = vector.broadcast %4 : vector<1x128xf32> to vector<2x128xf32>
    %45 = arith.subf %44, %43 : vector<2x128xf32>
    %cst_16 = arith.constant dense<0.000000e+00> : vector<256x128xf32>
    %46 = tpu.matmul %26, %42, %cst_16 {dimension_numbers = #tpu.dot_dimension_numbers<[1], [0], [0], [1], [0, 0, 1, 1], [], []>} : vector<256x2xf32>, vector<2x128xf32>, vector<256x128xf32> -> vector<256x128xf32>
    %47 = arith.mulf %2, %46 : vector<256x128xf32>
    %cst_17 = arith.constant dense<0.000000e+00> : vector<256x128xf32>
    %48 = tpu.matmul %26, %45, %cst_17 {dimension_numbers = #tpu.dot_dimension_numbers<[1], [0], [0], [1], [0, 0, 1, 1], [], []>} : vector<256x2xf32>, vector<2x128xf32>, vector<256x128xf32> -> vector<256x128xf32>
    %49 = arith.addf %47, %48 : vector<256x128xf32>
    %cst_18 = arith.constant 0.000000e+00 : f32
    %50 = vector.broadcast %cst_18 : f32 to vector<256x128xf32>
    %51 = arith.maximumf %49, %50 : vector<256x128xf32>
    %c0_19 = arith.constant 0 : index
    %c0_20 = arith.constant 0 : index
    %52 = vector.load %arg4[%c0_19, %c0_20] : memref<256x128xf32, #tpu.memory_space<vmem>>, vector<256x128xf32>
    tpu.vector_store %arg4[%c0_19, %c0_20], %51 {strides = array<i32>} : memref<256x128xf32, #tpu.memory_space<vmem>>, vector<256x128xf32>,
    return
  }
}

module attributes {stable_mosaic.version = 11 : i64} {
  func.func @online_head_kernel(%arg0: memref<4x128xf32, #tpu.memory_space<vmem>>, %arg1: memref<128x32xf32, #tpu.memory_space<vmem>>, %arg2: memref<1x32xf32, #tpu.memory_space<vmem>>, %arg3: memref<1x32xf32, #tpu.memory_space<vmem>>, %arg4: memref<1x32xf32, #tpu.memory_space<vmem>>, %arg5: memref<32x16xf32, #tpu.memory_space<vmem>>, %arg6: memref<1x16xf32, #tpu.memory_space<vmem>>, %arg7: memref<16x32xf32, #tpu.memory_space<vmem>>, %arg8: memref<1x32xf32, #tpu.memory_space<vmem>>, %arg9: memref<1x32xf32, #tpu.memory_space<vmem>>, %arg10: memref<1x32xf32, #tpu.memory_space<vmem>>, %arg11: memref<32x16xf32, #tpu.memory_space<vmem>>, %arg12: memref<1x16xf32, #tpu.memory_space<vmem>>, %arg13: memref<4x16xf32, #tpu.memory_space<vmem>>) attributes {dimension_semantics = [], scalar_prefetch = 0 : i64, scratch_operands = 0 : i64, tpu.core_type = #tpu.core_type<tc>} {
    %c0 = arith.constant 0 : index
    %c0_0 = arith.constant 0 : index
    %0 = vector.load %arg0[%c0, %c0_0] : memref<4x128xf32, #tpu.memory_space<vmem>>, vector<4x128xf32>
    %c0_1 = arith.constant 0 : index
    %c0_2 = arith.constant 0 : index
    %1 = vector.load %arg1[%c0_1, %c0_2] : memref<128x32xf32, #tpu.memory_space<vmem>>, vector<128x32xf32>
    %c0_3 = arith.constant 0 : index
    %c0_4 = arith.constant 0 : index
    %2 = vector.load %arg2[%c0_3, %c0_4] : memref<1x32xf32, #tpu.memory_space<vmem>>, vector<1x32xf32>
    %c0_5 = arith.constant 0 : index
    %c0_6 = arith.constant 0 : index
    %3 = vector.load %arg3[%c0_5, %c0_6] : memref<1x32xf32, #tpu.memory_space<vmem>>, vector<1x32xf32>
    %c0_7 = arith.constant 0 : index
    %c0_8 = arith.constant 0 : index
    %4 = vector.load %arg4[%c0_7, %c0_8] : memref<1x32xf32, #tpu.memory_space<vmem>>, vector<1x32xf32>
    %c0_9 = arith.constant 0 : index
    %c0_10 = arith.constant 0 : index
    %5 = vector.load %arg5[%c0_9, %c0_10] : memref<32x16xf32, #tpu.memory_space<vmem>>, vector<32x16xf32>
    %c0_11 = arith.constant 0 : index
    %c0_12 = arith.constant 0 : index
    %6 = vector.load %arg6[%c0_11, %c0_12] : memref<1x16xf32, #tpu.memory_space<vmem>>, vector<1x16xf32>
    %cst = arith.constant dense<0.000000e+00> : vector<4x32xf32>
    %7 = tpu.matmul %0, %1, %cst {dimension_numbers = #tpu.dot_dimension_numbers<[1], [0], [0], [1], [0, 0, 1, 1], [], []>} : vector<4x128xf32>, vector<128x32xf32>, vector<4x32xf32> -> vector<4x32xf32>
    %8 = vector.broadcast %2 : vector<1x32xf32> to vector<4x32xf32>
    %9 = arith.addf %7, %8 : vector<4x32xf32>
    %10 = tpu.iota {dimensions = array<i32: 1>} : vector<2x4xi32>
    %11 = tpu.iota {dimensions = array<i32: 0>} : vector<2x4xi32>
    %c2_i32 = arith.constant 2 : i32
    %12 = vector.broadcast %c2_i32 : i32 to vector<2x4xi32>
    %13 = arith.muli %11, %12 : vector<2x4xi32>
    %14 = arith.cmpi sge, %10, %13 : vector<2x4xi32>
    %c2_i32_13 = arith.constant 2 : i32
    %15 = vector.broadcast %c2_i32_13 : i32 to vector<2x4xi32>
    %16 = arith.addi %13, %15 : vector<2x4xi32>
    %17 = arith.cmpi slt, %10, %16 : vector<2x4xi32>
    %18 = arith.andi %14, %17 : vector<2x4xi1>
    %19 = arith.extui %18 : vector<2x4xi1> to vector<2x4xi32>
    %20 = arith.sitofp %19 : vector<2x4xi32> to vector<2x4xf32>
    %21 = tpu.iota {dimensions = array<i32: 0>} : vector<4x2xi32>
    %22 = tpu.iota {dimensions = array<i32: 1>} : vector<4x2xi32>
    %c2_i32_14 = arith.constant 2 : i32
    %23 = vector.broadcast %c2_i32_14 : i32 to vector<4x2xi32>
    %24 = arith.muli %22, %23 : vector<4x2xi32>
    %25 = arith.cmpi sge, %21, %24 : vector<4x2xi32>
    %c2_i32_15 = arith.constant 2 : i32
    %26 = vector.broadcast %c2_i32_15 : i32 to vector<4x2xi32>
    %27 = arith.addi %24, %26 : vector<4x2xi32>
    %28 = arith.cmpi slt, %21, %27 : vector<4x2xi32>
    %29 = arith.andi %25, %28 : vector<4x2xi1>
    %30 = arith.extui %29 : vector<4x2xi1> to vector<4x2xi32>
    %31 = arith.sitofp %30 : vector<4x2xi32> to vector<4x2xf32>
    %cst_16 = arith.constant dense<0.000000e+00> : vector<2x32xf32>
    %32 = tpu.matmul %20, %9, %cst_16 {dimension_numbers = #tpu.dot_dimension_numbers<[1], [0], [0], [1], [0, 0, 1, 1], [], []>} : vector<2x4xf32>, vector<4x32xf32>, vector<2x32xf32> -> vector<2x32xf32>
    %cst_17 = arith.constant 5.000000e-01 : f32
    %33 = vector.broadcast %cst_17 : f32 to vector<2x32xf32>
    %34 = arith.mulf %32, %33 : vector<2x32xf32>
    %35 = arith.mulf %9, %9 : vector<4x32xf32>
    %cst_18 = arith.constant dense<0.000000e+00> : vector<2x32xf32>
    %36 = tpu.matmul %20, %35, %cst_18 {dimension_numbers = #tpu.dot_dimension_numbers<[1], [0], [0], [1], [0, 0, 1, 1], [], []>} : vector<2x4xf32>, vector<4x32xf32>, vector<2x32xf32> -> vector<2x32xf32>
    %cst_19 = arith.constant 5.000000e-01 : f32
    %37 = vector.broadcast %cst_19 : f32 to vector<2x32xf32>
    %38 = arith.mulf %36, %37 : vector<2x32xf32>
    %39 = arith.mulf %34, %34 : vector<2x32xf32>
    %40 = arith.subf %38, %39 : vector<2x32xf32>
    %cst_20 = arith.constant 0.000000e+00 : f32
    %41 = vector.broadcast %cst_20 : f32 to vector<2x32xf32>
    %42 = arith.maximumf %40, %41 : vector<2x32xf32>
    %cst_21 = arith.constant 9.99999974E-6 : f32
    %43 = vector.broadcast %cst_21 : f32 to vector<2x32xf32>
    %44 = arith.addf %42, %43 : vector<2x32xf32>
    %45 = math.rsqrt %44 : vector<2x32xf32>
    %46 = vector.broadcast %3 : vector<1x32xf32> to vector<2x32xf32>
    %47 = arith.mulf %46, %45 : vector<2x32xf32>
    %48 = arith.mulf %34, %47 : vector<2x32xf32>
    %49 = vector.broadcast %4 : vector<1x32xf32> to vector<2x32xf32>
    %50 = arith.subf %49, %48 : vector<2x32xf32>
    %cst_22 = arith.constant dense<0.000000e+00> : vector<4x32xf32>
    %51 = tpu.matmul %31, %47, %cst_22 {dimension_numbers = #tpu.dot_dimension_numbers<[1], [0], [0], [1], [0, 0, 1, 1], [], []>} : vector<4x2xf32>, vector<2x32xf32>, vector<4x32xf32> -> vector<4x32xf32>
    %52 = arith.mulf %9, %51 : vector<4x32xf32>
    %cst_23 = arith.constant dense<0.000000e+00> : vector<4x32xf32>
    %53 = tpu.matmul %31, %50, %cst_23 {dimension_numbers = #tpu.dot_dimension_numbers<[1], [0], [0], [1], [0, 0, 1, 1], [], []>} : vector<4x2xf32>, vector<2x32xf32>, vector<4x32xf32> -> vector<4x32xf32>
    %54 = arith.addf %52, %53 : vector<4x32xf32>
    %cst_24 = arith.constant 0.000000e+00 : f32
    %55 = vector.broadcast %cst_24 : f32 to vector<4x32xf32>
    %56 = arith.maximumf %54, %55 : vector<4x32xf32>
    %cst_25 = arith.constant dense<0.000000e+00> : vector<4x16xf32>
    %57 = tpu.matmul %56, %5, %cst_25 {dimension_numbers = #tpu.dot_dimension_numbers<[1], [0], [0], [1], [0, 0, 1, 1], [], []>} : vector<4x32xf32>, vector<32x16xf32>, vector<4x16xf32> -> vector<4x16xf32>
    %58 = vector.broadcast %6 : vector<1x16xf32> to vector<4x16xf32>
    %59 = arith.addf %57, %58 : vector<4x16xf32>
    %c0_26 = arith.constant 0 : index
    %c0_27 = arith.constant 0 : index
    %60 = vector.load %arg7[%c0_26, %c0_27] : memref<16x32xf32, #tpu.memory_space<vmem>>, vector<16x32xf32>
    %c0_28 = arith.constant 0 : index
    %c0_29 = arith.constant 0 : index
    %61 = vector.load %arg8[%c0_28, %c0_29] : memref<1x32xf32, #tpu.memory_space<vmem>>, vector<1x32xf32>
    %c0_30 = arith.constant 0 : index
    %c0_31 = arith.constant 0 : index
    %62 = vector.load %arg9[%c0_30, %c0_31] : memref<1x32xf32, #tpu.memory_space<vmem>>, vector<1x32xf32>
    %c0_32 = arith.constant 0 : index
    %c0_33 = arith.constant 0 : index
    %63 = vector.load %arg10[%c0_32, %c0_33] : memref<1x32xf32, #tpu.memory_space<vmem>>, vector<1x32xf32>
    %c0_34 = arith.constant 0 : index
    %c0_35 = arith.constant 0 : index
    %64 = vector.load %arg11[%c0_34, %c0_35] : memref<32x16xf32, #tpu.memory_space<vmem>>, vector<32x16xf32>
    %c0_36 = arith.constant 0 : index
    %c0_37 = arith.constant 0 : index
    %65 = vector.load %arg12[%c0_36, %c0_37] : memref<1x16xf32, #tpu.memory_space<vmem>>, vector<1x16xf32>
    %cst_38 = arith.constant dense<0.000000e+00> : vector<4x32xf32>
    %66 = tpu.matmul %59, %60, %cst_38 {dimension_numbers = #tpu.dot_dimension_numbers<[1], [0], [0], [1], [0, 0, 1, 1], [], []>} : vector<4x16xf32>, vector<16x32xf32>, vector<4x32xf32> -> vector<4x32xf32>
    %67 = vector.broadcast %61 : vector<1x32xf32> to vector<4x32xf32>
    %68 = arith.addf %66, %67 : vector<4x32xf32>
    %69 = tpu.iota {dimensions = array<i32: 1>} : vector<2x4xi32>
    %70 = tpu.iota {dimensions = array<i32: 0>} : vector<2x4xi32>
    %c2_i32_39 = arith.constant 2 : i32
    %71 = vector.broadcast %c2_i32_39 : i32 to vector<2x4xi32>
    %72 = arith.muli %70, %71 : vector<2x4xi32>
    %73 = arith.cmpi sge, %69, %72 : vector<2x4xi32>
    %c2_i32_40 = arith.constant 2 : i32
    %74 = vector.broadcast %c2_i32_40 : i32 to vector<2x4xi32>
    %75 = arith.addi %72, %74 : vector<2x4xi32>
    %76 = arith.cmpi slt, %69, %75 : vector<2x4xi32>
    %77 = arith.andi %73, %76 : vector<2x4xi1>
    %78 = arith.extui %77 : vector<2x4xi1> to vector<2x4xi32>
    %79 = arith.sitofp %78 : vector<2x4xi32> to vector<2x4xf32>
    %80 = tpu.iota {dimensions = array<i32: 0>} : vector<4x2xi32>
    %81 = tpu.iota {dimensions = array<i32: 1>} : vector<4x2xi32>
    %c2_i32_41 = arith.constant 2 : i32
    %82 = vector.broadcast %c2_i32_41 : i32 to vector<4x2xi32>
    %83 = arith.muli %81, %82 : vector<4x2xi32>
    %84 = arith.cmpi sge, %80, %83 : vector<4x2xi32>
    %c2_i32_42 = arith.constant 2 : i32
    %85 = vector.broadcast %c2_i32_42 : i32 to vector<4x2xi32>
    %86 = arith.addi %83, %85 : vector<4x2xi32>
    %87 = arith.cmpi slt, %80, %86 : vector<4x2xi32>
    %88 = arith.andi %84, %87 : vector<4x2xi1>
    %89 = arith.extui %88 : vector<4x2xi1> to vector<4x2xi32>
    %90 = arith.sitofp %89 : vector<4x2xi32> to vector<4x2xf32>
    %cst_43 = arith.constant dense<0.000000e+00> : vector<2x32xf32>
    %91 = tpu.matmul %79, %68, %cst_43 {dimension_numbers = #tpu.dot_dimension_numbers<[1], [0], [0], [1], [0, 0, 1, 1], [], []>} : vector<2x4xf32>, vector<4x32xf32>, vector<2x32xf32> -> vector<2x32xf32>
    %cst_44 = arith.constant 5.000000e-01 : f32
    %92 = vector.broadcast %cst_44 : f32 to vector<2x32xf32>
    %93 = arith.mulf %91, %92 : vector<2x32xf32>
    %94 = arith.mulf %68, %68 : vector<4x32xf32>
    %cst_45 = arith.constant dense<0.000000e+00> : vector<2x32xf32>
    %95 = tpu.matmul %79, %94, %cst_45 {dimension_numbers = #tpu.dot_dimension_numbers<[1], [0], [0], [1], [0, 0, 1, 1], [], []>} : vector<2x4xf32>, vector<4x32xf32>, vector<2x32xf32> -> vector<2x32xf32>
    %cst_46 = arith.constant 5.000000e-01 : f32
    %96 = vector.broadcast %cst_46 : f32 to vector<2x32xf32>
    %97 = arith.mulf %95, %96 : vector<2x32xf32>
    %98 = arith.mulf %93, %93 : vector<2x32xf32>
    %99 = arith.subf %97, %98 : vector<2x32xf32>
    %cst_47 = arith.constant 0.000000e+00 : f32
    %100 = vector.broadcast %cst_47 : f32 to vector<2x32xf32>
    %101 = arith.maximumf %99, %100 : vector<2x32xf32>
    %cst_48 = arith.constant 9.99999974E-6 : f32
    %102 = vector.broadcast %cst_48 : f32 to vector<2x32xf32>
    %103 = arith.addf %101, %102 : vector<2x32xf32>
    %104 = math.rsqrt %103 : vector<2x32xf32>
    %105 = vector.broadcast %62 : vector<1x32xf32> to vector<2x32xf32>
    %106 = arith.mulf %105, %104 : vector<2x32xf32>
    %107 = arith.mulf %93, %106 : vector<2x32xf32>
    %108 = vector.broadcast %63 : vector<1x32xf32> to vector<2x32xf32>
    %109 = arith.subf %108, %107 : vector<2x32xf32>
    %cst_49 = arith.constant dense<0.000000e+00> : vector<4x32xf32>
    %110 = tpu.matmul %90, %106, %cst_49 {dimension_numbers = #tpu.dot_dimension_numbers<[1], [0], [0], [1], [0, 0, 1, 1], [], []>} : vector<4x2xf32>, vector<2x32xf32>, vector<4x32xf32> -> vector<4x32xf32>
    %111 = arith.mulf %68, %110 : vector<4x32xf32>
    %cst_50 = arith.constant dense<0.000000e+00> : vector<4x32xf32>
    %112 = tpu.matmul %90, %109, %cst_50 {dimension_numbers = #tpu.dot_dimension_numbers<[1], [0], [0], [1], [0, 0, 1, 1], [], []>} : vector<4x2xf32>, vector<2x32xf32>, vector<4x32xf32> -> vector<4x32xf32>
    %113 = arith.addf %111, %112 : vector<4x32xf32>
    %cst_51 = arith.constant 0.000000e+00 : f32
    %114 = vector.broadcast %cst_51 : f32 to vector<4x32xf32>
    %115 = arith.maximumf %113, %114 : vector<4x32xf32>
    %cst_52 = arith.constant dense<0.000000e+00> : vector<4x16xf32>
    %116 = tpu.matmul %115, %64, %cst_52 {dimension_numbers = #tpu.dot_dimension_numbers<[1], [0], [0], [1], [0, 0, 1, 1], [], []>} : vector<4x32xf32>, vector<32x16xf32>, vector<4x16xf32> -> vector<4x16xf32>
    %117 = vector.broadcast %65 : vector<1x16xf32> to vector<4x16xf32>
    %118 = arith.addf %116, %117 : vector<4x16xf32>
    %119 = arith.mulf %118, %118 : vector<4x16xf32>
    %cst_53 = arith.constant dense<0.000000e+00> : vector<4xf32>
    %120 = vector.multi_reduction <add>, %119, %cst_53 [1] : vector<4x16xf32> to vector<4xf32>
    %121 = vector.shape_cast %120 : vector<4xf32> to vector<4x1xf32>
    %cst_54 = arith.constant 1.000000e-24 : f32
    %122 = vector.broadcast %cst_54 : f32 to vector<4x1xf32>
    %123 = arith.maximumf %121, %122 : vector<4x1xf32>
    %124 = math.rsqrt %123 : vector<4x1xf32>
    %125 = vector.broadcast %124 : vector<4x1xf32> to vector<4x16xf32>
    %126 = arith.mulf %118, %125 : vector<4x16xf32>
    %c0_55 = arith.constant 0 : index
    %c0_56 = arith.constant 0 : index
    %127 = vector.load %arg13[%c0_55, %c0_56] : memref<4x16xf32, #tpu.memory_space<vmem>>, vector<4x16xf32>
    tpu.vector_store %arg13[%c0_55, %c0_56], %126 {strides = array<i32>} : memref<4x16xf32, #tpu.memory_space<vmem>>, vector<4x16xf32>,
    return
  }
}

module attributes {stable_mosaic.version = 11 : i64} {
  func.func @pool_gap_kernel(%arg0: memref<9x64x128xf32, #tpu.memory_space<vmem>>, %arg1: memref<4x128xf32, #tpu.memory_space<vmem>>) attributes {dimension_semantics = [], scalar_prefetch = 0 : i64, scratch_operands = 0 : i64, tpu.core_type = #tpu.core_type<tc>} {
    %c0 = arith.constant 0 : index
    %c0_0 = arith.constant 0 : index
    %c0_1 = arith.constant 0 : index
    %0 = vector.load %arg0[%c0, %c0_0, %c0_1] : memref<9x64x128xf32, #tpu.memory_space<vmem>>, vector<1x64x128xf32>
    %1 = vector.shape_cast %0 : vector<1x64x128xf32> to vector<64x128xf32>
    %c1 = arith.constant 1 : index
    %c0_2 = arith.constant 0 : index
    %c0_3 = arith.constant 0 : index
    %2 = vector.load %arg0[%c1, %c0_2, %c0_3] : memref<9x64x128xf32, #tpu.memory_space<vmem>>, vector<1x64x128xf32>
    %3 = vector.shape_cast %2 : vector<1x64x128xf32> to vector<64x128xf32>
    %4 = arith.maximumf %1, %3 : vector<64x128xf32>
    %c2 = arith.constant 2 : index
    %c0_4 = arith.constant 0 : index
    %c0_5 = arith.constant 0 : index
    %5 = vector.load %arg0[%c2, %c0_4, %c0_5] : memref<9x64x128xf32, #tpu.memory_space<vmem>>, vector<1x64x128xf32>
    %6 = vector.shape_cast %5 : vector<1x64x128xf32> to vector<64x128xf32>
    %7 = arith.maximumf %4, %6 : vector<64x128xf32>
    %c3 = arith.constant 3 : index
    %c0_6 = arith.constant 0 : index
    %c0_7 = arith.constant 0 : index
    %8 = vector.load %arg0[%c3, %c0_6, %c0_7] : memref<9x64x128xf32, #tpu.memory_space<vmem>>, vector<1x64x128xf32>
    %9 = vector.shape_cast %8 : vector<1x64x128xf32> to vector<64x128xf32>
    %10 = arith.maximumf %7, %9 : vector<64x128xf32>
    %c4 = arith.constant 4 : index
    %c0_8 = arith.constant 0 : index
    %c0_9 = arith.constant 0 : index
    %11 = vector.load %arg0[%c4, %c0_8, %c0_9] : memref<9x64x128xf32, #tpu.memory_space<vmem>>, vector<1x64x128xf32>
    %12 = vector.shape_cast %11 : vector<1x64x128xf32> to vector<64x128xf32>
    %13 = arith.maximumf %10, %12 : vector<64x128xf32>
    %c5 = arith.constant 5 : index
    %c0_10 = arith.constant 0 : index
    %c0_11 = arith.constant 0 : index
    %14 = vector.load %arg0[%c5, %c0_10, %c0_11] : memref<9x64x128xf32, #tpu.memory_space<vmem>>, vector<1x64x128xf32>
    %15 = vector.shape_cast %14 : vector<1x64x128xf32> to vector<64x128xf32>
    %16 = arith.maximumf %13, %15 : vector<64x128xf32>
    %c6 = arith.constant 6 : index
    %c0_12 = arith.constant 0 : index
    %c0_13 = arith.constant 0 : index
    %17 = vector.load %arg0[%c6, %c0_12, %c0_13] : memref<9x64x128xf32, #tpu.memory_space<vmem>>, vector<1x64x128xf32>
    %18 = vector.shape_cast %17 : vector<1x64x128xf32> to vector<64x128xf32>
    %19 = arith.maximumf %16, %18 : vector<64x128xf32>
    %c7 = arith.constant 7 : index
    %c0_14 = arith.constant 0 : index
    %c0_15 = arith.constant 0 : index
    %20 = vector.load %arg0[%c7, %c0_14, %c0_15] : memref<9x64x128xf32, #tpu.memory_space<vmem>>, vector<1x64x128xf32>
    %21 = vector.shape_cast %20 : vector<1x64x128xf32> to vector<64x128xf32>
    %22 = arith.maximumf %19, %21 : vector<64x128xf32>
    %c8 = arith.constant 8 : index
    %c0_16 = arith.constant 0 : index
    %c0_17 = arith.constant 0 : index
    %23 = vector.load %arg0[%c8, %c0_16, %c0_17] : memref<9x64x128xf32, #tpu.memory_space<vmem>>, vector<1x64x128xf32>
    %24 = vector.shape_cast %23 : vector<1x64x128xf32> to vector<64x128xf32>
    %25 = arith.maximumf %22, %24 : vector<64x128xf32>
    %26 = tpu.iota {dimensions = array<i32: 1>} : vector<4x64xi32>
    %27 = tpu.iota {dimensions = array<i32: 0>} : vector<4x64xi32>
    %c16_i32 = arith.constant 16 : i32
    %28 = vector.broadcast %c16_i32 : i32 to vector<4x64xi32>
    %29 = arith.muli %27, %28 : vector<4x64xi32>
    %30 = arith.cmpi sge, %26, %29 : vector<4x64xi32>
    %c16_i32_18 = arith.constant 16 : i32
    %31 = vector.broadcast %c16_i32_18 : i32 to vector<4x64xi32>
    %32 = arith.addi %29, %31 : vector<4x64xi32>
    %33 = arith.cmpi slt, %26, %32 : vector<4x64xi32>
    %34 = arith.andi %30, %33 : vector<4x64xi1>
    %35 = arith.extui %34 : vector<4x64xi1> to vector<4x64xi32>
    %36 = arith.sitofp %35 : vector<4x64xi32> to vector<4x64xf32>
    %cst = arith.constant dense<0.000000e+00> : vector<4x128xf32>
    %37 = tpu.matmul %36, %25, %cst {dimension_numbers = #tpu.dot_dimension_numbers<[1], [0], [0], [1], [0, 0, 1, 1], [], []>} : vector<4x64xf32>, vector<64x128xf32>, vector<4x128xf32> -> vector<4x128xf32>
    %cst_19 = arith.constant 6.250000e-02 : f32
    %38 = vector.broadcast %cst_19 : f32 to vector<4x128xf32>
    %39 = arith.mulf %37, %38 : vector<4x128xf32>
    %c0_20 = arith.constant 0 : index
    %c0_21 = arith.constant 0 : index
    %40 = vector.load %arg1[%c0_20, %c0_21] : memref<4x128xf32, #tpu.memory_space<vmem>>, vector<4x128xf32>
    tpu.vector_store %arg1[%c0_20, %c0_21], %39 {strides = array<i32>} : memref<4x128xf32, #tpu.memory_space<vmem>>, vector<4x128xf32>,
    return
  }
}

module attributes {stable_mosaic.version = 11 : i64} {
  func.func @target_head_kernel(%arg0: memref<4x128xf32, #tpu.memory_space<vmem>>, %arg1: memref<128x32xf32, #tpu.memory_space<vmem>>, %arg2: memref<1x32xf32, #tpu.memory_space<vmem>>, %arg3: memref<1x32xf32, #tpu.memory_space<vmem>>, %arg4: memref<1x32xf32, #tpu.memory_space<vmem>>, %arg5: memref<32x16xf32, #tpu.memory_space<vmem>>, %arg6: memref<1x16xf32, #tpu.memory_space<vmem>>, %arg7: memref<4x16xf32, #tpu.memory_space<vmem>>) attributes {dimension_semantics = [], scalar_prefetch = 0 : i64, scratch_operands = 0 : i64, tpu.core_type = #tpu.core_type<tc>} {
    %c0 = arith.constant 0 : index
    %c0_0 = arith.constant 0 : index
    %0 = vector.load %arg0[%c0, %c0_0] : memref<4x128xf32, #tpu.memory_space<vmem>>, vector<4x128xf32>
    %c0_1 = arith.constant 0 : index
    %c0_2 = arith.constant 0 : index
    %1 = vector.load %arg1[%c0_1, %c0_2] : memref<128x32xf32, #tpu.memory_space<vmem>>, vector<128x32xf32>
    %c0_3 = arith.constant 0 : index
    %c0_4 = arith.constant 0 : index
    %2 = vector.load %arg2[%c0_3, %c0_4] : memref<1x32xf32, #tpu.memory_space<vmem>>, vector<1x32xf32>
    %c0_5 = arith.constant 0 : index
    %c0_6 = arith.constant 0 : index
    %3 = vector.load %arg3[%c0_5, %c0_6] : memref<1x32xf32, #tpu.memory_space<vmem>>, vector<1x32xf32>
    %c0_7 = arith.constant 0 : index
    %c0_8 = arith.constant 0 : index
    %4 = vector.load %arg4[%c0_7, %c0_8] : memref<1x32xf32, #tpu.memory_space<vmem>>, vector<1x32xf32>
    %c0_9 = arith.constant 0 : index
    %c0_10 = arith.constant 0 : index
    %5 = vector.load %arg5[%c0_9, %c0_10] : memref<32x16xf32, #tpu.memory_space<vmem>>, vector<32x16xf32>
    %c0_11 = arith.constant 0 : index
    %c0_12 = arith.constant 0 : index
    %6 = vector.load %arg6[%c0_11, %c0_12] : memref<1x16xf32, #tpu.memory_space<vmem>>, vector<1x16xf32>
    %cst = arith.constant dense<0.000000e+00> : vector<4x32xf32>
    %7 = tpu.matmul %0, %1, %cst {dimension_numbers = #tpu.dot_dimension_numbers<[1], [0], [0], [1], [0, 0, 1, 1], [], []>} : vector<4x128xf32>, vector<128x32xf32>, vector<4x32xf32> -> vector<4x32xf32>
    %8 = vector.broadcast %2 : vector<1x32xf32> to vector<4x32xf32>
    %9 = arith.addf %7, %8 : vector<4x32xf32>
    %10 = tpu.iota {dimensions = array<i32: 1>} : vector<2x4xi32>
    %11 = tpu.iota {dimensions = array<i32: 0>} : vector<2x4xi32>
    %c2_i32 = arith.constant 2 : i32
    %12 = vector.broadcast %c2_i32 : i32 to vector<2x4xi32>
    %13 = arith.muli %11, %12 : vector<2x4xi32>
    %14 = arith.cmpi sge, %10, %13 : vector<2x4xi32>
    %c2_i32_13 = arith.constant 2 : i32
    %15 = vector.broadcast %c2_i32_13 : i32 to vector<2x4xi32>
    %16 = arith.addi %13, %15 : vector<2x4xi32>
    %17 = arith.cmpi slt, %10, %16 : vector<2x4xi32>
    %18 = arith.andi %14, %17 : vector<2x4xi1>
    %19 = arith.extui %18 : vector<2x4xi1> to vector<2x4xi32>
    %20 = arith.sitofp %19 : vector<2x4xi32> to vector<2x4xf32>
    %21 = tpu.iota {dimensions = array<i32: 0>} : vector<4x2xi32>
    %22 = tpu.iota {dimensions = array<i32: 1>} : vector<4x2xi32>
    %c2_i32_14 = arith.constant 2 : i32
    %23 = vector.broadcast %c2_i32_14 : i32 to vector<4x2xi32>
    %24 = arith.muli %22, %23 : vector<4x2xi32>
    %25 = arith.cmpi sge, %21, %24 : vector<4x2xi32>
    %c2_i32_15 = arith.constant 2 : i32
    %26 = vector.broadcast %c2_i32_15 : i32 to vector<4x2xi32>
    %27 = arith.addi %24, %26 : vector<4x2xi32>
    %28 = arith.cmpi slt, %21, %27 : vector<4x2xi32>
    %29 = arith.andi %25, %28 : vector<4x2xi1>
    %30 = arith.extui %29 : vector<4x2xi1> to vector<4x2xi32>
    %31 = arith.sitofp %30 : vector<4x2xi32> to vector<4x2xf32>
    %cst_16 = arith.constant dense<0.000000e+00> : vector<2x32xf32>
    %32 = tpu.matmul %20, %9, %cst_16 {dimension_numbers = #tpu.dot_dimension_numbers<[1], [0], [0], [1], [0, 0, 1, 1], [], []>} : vector<2x4xf32>, vector<4x32xf32>, vector<2x32xf32> -> vector<2x32xf32>
    %cst_17 = arith.constant 5.000000e-01 : f32
    %33 = vector.broadcast %cst_17 : f32 to vector<2x32xf32>
    %34 = arith.mulf %32, %33 : vector<2x32xf32>
    %35 = arith.mulf %9, %9 : vector<4x32xf32>
    %cst_18 = arith.constant dense<0.000000e+00> : vector<2x32xf32>
    %36 = tpu.matmul %20, %35, %cst_18 {dimension_numbers = #tpu.dot_dimension_numbers<[1], [0], [0], [1], [0, 0, 1, 1], [], []>} : vector<2x4xf32>, vector<4x32xf32>, vector<2x32xf32> -> vector<2x32xf32>
    %cst_19 = arith.constant 5.000000e-01 : f32
    %37 = vector.broadcast %cst_19 : f32 to vector<2x32xf32>
    %38 = arith.mulf %36, %37 : vector<2x32xf32>
    %39 = arith.mulf %34, %34 : vector<2x32xf32>
    %40 = arith.subf %38, %39 : vector<2x32xf32>
    %cst_20 = arith.constant 0.000000e+00 : f32
    %41 = vector.broadcast %cst_20 : f32 to vector<2x32xf32>
    %42 = arith.maximumf %40, %41 : vector<2x32xf32>
    %cst_21 = arith.constant 9.99999974E-6 : f32
    %43 = vector.broadcast %cst_21 : f32 to vector<2x32xf32>
    %44 = arith.addf %42, %43 : vector<2x32xf32>
    %45 = math.rsqrt %44 : vector<2x32xf32>
    %46 = vector.broadcast %3 : vector<1x32xf32> to vector<2x32xf32>
    %47 = arith.mulf %46, %45 : vector<2x32xf32>
    %48 = arith.mulf %34, %47 : vector<2x32xf32>
    %49 = vector.broadcast %4 : vector<1x32xf32> to vector<2x32xf32>
    %50 = arith.subf %49, %48 : vector<2x32xf32>
    %cst_22 = arith.constant dense<0.000000e+00> : vector<4x32xf32>
    %51 = tpu.matmul %31, %47, %cst_22 {dimension_numbers = #tpu.dot_dimension_numbers<[1], [0], [0], [1], [0, 0, 1, 1], [], []>} : vector<4x2xf32>, vector<2x32xf32>, vector<4x32xf32> -> vector<4x32xf32>
    %52 = arith.mulf %9, %51 : vector<4x32xf32>
    %cst_23 = arith.constant dense<0.000000e+00> : vector<4x32xf32>
    %53 = tpu.matmul %31, %50, %cst_23 {dimension_numbers = #tpu.dot_dimension_numbers<[1], [0], [0], [1], [0, 0, 1, 1], [], []>} : vector<4x2xf32>, vector<2x32xf32>, vector<4x32xf32> -> vector<4x32xf32>
    %54 = arith.addf %52, %53 : vector<4x32xf32>
    %cst_24 = arith.constant 0.000000e+00 : f32
    %55 = vector.broadcast %cst_24 : f32 to vector<4x32xf32>
    %56 = arith.maximumf %54, %55 : vector<4x32xf32>
    %cst_25 = arith.constant dense<0.000000e+00> : vector<4x16xf32>
    %57 = tpu.matmul %56, %5, %cst_25 {dimension_numbers = #tpu.dot_dimension_numbers<[1], [0], [0], [1], [0, 0, 1, 1], [], []>} : vector<4x32xf32>, vector<32x16xf32>, vector<4x16xf32> -> vector<4x16xf32>
    %58 = vector.broadcast %6 : vector<1x16xf32> to vector<4x16xf32>
    %59 = arith.addf %57, %58 : vector<4x16xf32>
    %60 = arith.mulf %59, %59 : vector<4x16xf32>
    %cst_26 = arith.constant dense<0.000000e+00> : vector<4xf32>
    %61 = vector.multi_reduction <add>, %60, %cst_26 [1] : vector<4x16xf32> to vector<4xf32>
    %62 = vector.shape_cast %61 : vector<4xf32> to vector<4x1xf32>
    %cst_27 = arith.constant 1.000000e-24 : f32
    %63 = vector.broadcast %cst_27 : f32 to vector<4x1xf32>
    %64 = arith.maximumf %62, %63 : vector<4x1xf32>
    %65 = math.rsqrt %64 : vector<4x1xf32>
    %66 = vector.broadcast %65 : vector<4x1xf32> to vector<4x16xf32>
    %67 = arith.mulf %59, %66 : vector<4x16xf32>
    %c0_28 = arith.constant 0 : index
    %c0_29 = arith.constant 0 : index
    %68 = vector.load %arg7[%c0_28, %c0_29] : memref<4x16xf32, #tpu.memory_space<vmem>>, vector<4x16xf32>
    tpu.vector_store %arg7[%c0_28, %c0_29], %67 {strides = array<i32>} : memref<4x16xf32, #tpu.memory_space<vmem>>, vector<4x16xf32>,
    return
  }
}

</mosaic_0001>

<llo_original>
// kernel: byol_forward.4
$region0: #{byol_forward.4}
  #allocation0 [shape = 'u32[]', space=smem, size = 0x4, offset = 0x4, fixed_abs, tag = 'smem constant byte address 0x4 - core index']
  #allocation1 [shape = 'u32[144,128]{1,0:T(1,128)}', space=vmem, size = 0x12000, scoped, tag = 'internal scratch']
  %s0 = inlined_call_operand.vmem [shape: bf16[256,256], index: 0, kind: input, shape index: {}]
  %s1 = inlined_call_operand.vmem [shape: bf16[256,128], index: 1, kind: input, shape index: {}]
  %s2 = inlined_call_operand.vmem [shape: f32[1,128], index: 2, kind: input, shape index: {}]
  %s3 = inlined_call_operand.vmem [shape: f32[1,128], index: 3, kind: input, shape index: {}]
  %s4 = inlined_call_operand.vmem [shape: f32[256,128], index: 4, kind: output, shape index: {}]
  %s5 = sld [smem:[#allocation0]]
  $region26: #{byol_forward.4} parent=0
    _
  %s7 = ssub.s32 1, %s5
  %s8 = scalar_select 0, %s7, %s5
  // Predicated region
  $region2: #{byol_forward.4} parent=0 // pred_check
    _
  $region3: #{byol_forward.4} parent=0 // pred_check_branch
    %10 = sbr.rel (0) target = $region5
  $region4: #{byol_forward.4} parent=0 // pred_region
    _
  $region5: #{byol_forward.4} parent=0 // pred_fallthru
    _
  // Predicated region
  $region6: #{byol_forward.4} parent=0 // pred_check
    _
  $region7: #{byol_forward.4} parent=0 // pred_check_branch
    %12 = sbr.rel (0) target = $region9
  $region8: #{byol_forward.4} parent=0 // pred_region
    _
  $region9: #{byol_forward.4} parent=0 // pred_fallthru
    _
  // Predicated region
  $region10: #{byol_forward.4} parent=0 // pred_check
    _
  $region11: #{byol_forward.4} parent=0 // pred_check_branch
    %14 = sbr.rel (0) target = $region13
  $region12: #{byol_forward.4} parent=0 // pred_region
    _
  $region13: #{byol_forward.4} parent=0 // pred_fallthru
    _
  // Predicated region
  $region14: #{byol_forward.4} parent=0 // pred_check
    _
  $region15: #{byol_forward.4} parent=0 // pred_check_branch
    %16 = sbr.rel (0) target = $region17
  $region16: #{byol_forward.4} parent=0 // pred_region
    _
  $region17: #{byol_forward.4} parent=0 // pred_fallthru
    _
  %v18 = vld [vmem:[%s0] sm:$0xff]
  %v19 = vld [vmem:[%s0 + $0x8] sm:$0xff]
  %v20 = vld [vmem:[%s0 + $0x10] sm:$0xff]
  %v21 = vld [vmem:[%s0 + $0x18] sm:$0xff]
  %v22 = vld [vmem:[%s0 + $0x20] sm:$0xff]
  %v23 = vld [vmem:[%s0 + $0x28] sm:$0xff]
  %v24 = vld [vmem:[%s0 + $0x30] sm:$0xff]
  %v25 = vld [vmem:[%s0 + $0x38] sm:$0xff]
  %v26 = vld [vmem:[%s0 + $0x40] sm:$0xff]
  %v27 = vld [vmem:[%s0 + $0x48] sm:$0xff]
  %v28 = vld [vmem:[%s0 + $0x50] sm:$0xff]
  %v29 = vld [vmem:[%s0 + $0x58] sm:$0xff]
  %v30 = vld [vmem:[%s0 + $0x60] sm:$0xff]
  %v31 = vld [vmem:[%s0 + $0x68] sm:$0xff]
  %v32 = vld [vmem:[%s0 + $0x70] sm:$0xff]
  %v33 = vld [vmem:[%s0 + $0x78] sm:$0xff]
  %v34 = vld [vmem:[%s0 + $0x80] sm:$0xff]
  %v35 = vld [vmem:[%s0 + $0x88] sm:$0xff]
  %v36 = vld [vmem:[%s0 + $0x90] sm:$0xff]
  %v37 = vld [vmem:[%s0 + $0x98] sm:$0xff]
  %v38 = vld [vmem:[%s0 + $0xa0] sm:$0xff]
  %v39 = vld [vmem:[%s0 + $0xa8] sm:$0xff]
  %v40 = vld [vmem:[%s0 + $0xb0] sm:$0xff]
  %v41 = vld [vmem:[%s0 + $0xb8] sm:$0xff]
  %v42 = vld [vmem:[%s0 + $0xc0] sm:$0xff]
  %v43 = vld [vmem:[%s0 + $0xc8] sm:$0xff]
  %v44 = vld [vmem:[%s0 + $0xd0] sm:$0xff]
  %v45 = vld [vmem:[%s0 + $0xd8] sm:$0xff]
  %v46 = vld [vmem:[%s0 + $0xe0] sm:$0xff]
  %v47 = vld [vmem:[%s0 + $0xe8] sm:$0xff]
  %v48 = vld [vmem:[%s0 + $0xf0] sm:$0xff]
  %v49 = vld [vmem:[%s0 + $0xf8] sm:$0xff]
  %v50 = vld [vmem:[%s1] sm:$0xf]
  %v51 = vld [vmem:[%s1 + $0x4] sm:$0xf]
  %v52 = vld [vmem:[%s1 + $0x8] sm:$0xf]
  %v53 = vld [vmem:[%s1 + $0xc] sm:$0xf]
  %v54 = vld [vmem:[%s1 + $0x10] sm:$0xf]
  %v55 = vld [vmem:[%s1 + $0x14] sm:$0xf]
  %v56 = vld [vmem:[%s1 + $0x18] sm:$0xf]
  %v57 = vld [vmem:[%s1 + $0x1c] sm:$0xf]
  %v58 = vld [vmem:[%s1 + $0x20] sm:$0xf]
  %v59 = vld [vmem:[%s1 + $0x24] sm:$0xf]
  %v60 = vld [vmem:[%s1 + $0x28] sm:$0xf]
  %v61 = vld [vmem:[%s1 + $0x2c] sm:$0xf]
  %v62 = vld [vmem:[%s1 + $0x30] sm:$0xf]
  %v63 = vld [vmem:[%s1 + $0x34] sm:$0xf]
  %v64 = vld [vmem:[%s1 + $0x38] sm:$0xf]
  %v65 = vld [vmem:[%s1 + $0x3c] sm:$0xf]
  %v66 = vld [vmem:[%s1 + $0x40] sm:$0xf]
  %v67 = vld [vmem:[%s1 + $0x44] sm:$0xf]
  %v68 = vld [vmem:[%s1 + $0x48] sm:$0xf]
  %v69 = vld [vmem:[%s1 + $0x4c] sm:$0xf]
  %v70 = vld [vmem:[%s1 + $0x50] sm:$0xf]
  %v71 = vld [vmem:[%s1 + $0x54] sm:$0xf]
  %v72 = vld [vmem:[%s1 + $0x58] sm:$0xf]
  %v73 = vld [vmem:[%s1 + $0x5c] sm:$0xf]
  %v74 = vld [vmem:[%s1 + $0x60] sm:$0xf]
  %v75 = vld [vmem:[%s1 + $0x64] sm:$0xf]
  %v76 = vld [vmem:[%s1 + $0x68] sm:$0xf]
  %v77 = vld [vmem:[%s1 + $0x6c] sm:$0xf]
  %v78 = vld [vmem:[%s1 + $0x70] sm:$0xf]
  %v79 = vld [vmem:[%s1 + $0x74] sm:$0xf]
  %v80 = vld [vmem:[%s1 + $0x78] sm:$0xf]
  %v81 = vld [vmem:[%s1 + $0x7c] sm:$0xf]
  %v114 = vunpack.c.l.b16 %v18
  %v115 = vunpack.c.h.b16 %v18
  %v116 = vunpack.c.l.b16 %v19
  %v117 = vunpack.c.h.b16 %v19
  %v118 = vunpack.c.l.b16 %v20
  %v119 = vunpack.c.h.b16 %v20
  %v120 = vunpack.c.l.b16 %v21
  %v121 = vunpack.c.h.b16 %v21
  %v122 = vunpack.c.l.b16 %v22
  %v123 = vunpack.c.h.b16 %v22
  %v124 = vunpack.c.l.b16 %v23
  %v125 = vunpack.c.h.b16 %v23
  %v126 = vunpack.c.l.b16 %v24
  %v127 = vunpack.c.h.b16 %v24
  %v128 = vunpack.c.l.b16 %v25
  %v129 = vunpack.c.h.b16 %v25
  %v130 = vunpack.c.l.b16 %v26
  %v131 = vunpack.c.h.b16 %v26
  %v132 = vunpack.c.l.b16 %v27
  %v133 = vunpack.c.h.b16 %v27
  %v134 = vunpack.c.l.b16 %v28
  %v135 = vunpack.c.h.b16 %v28
  %v136 = vunpack.c.l.b16 %v29
  %v137 = vunpack.c.h.b16 %v29
  %v138 = vunpack.c.l.b16 %v30
  %v139 = vunpack.c.h.b16 %v30
  %v140 = vunpack.c.l.b16 %v31
  %v141 = vunpack.c.h.b16 %v31
  %v142 = vunpack.c.l.b16 %v32
  %v143 = vunpack.c.h.b16 %v32
  %v144 = vunpack.c.l.b16 %v33
  %v145 = vunpack.c.h.b16 %v33
  %v146 = vunpack.c.l.b16 %v34
  %v147 = vunpack.c.h.b16 %v34
  %v148 = vunpack.c.l.b16 %v35
  %v149 = vunpack.c.h.b16 %v35
  %v150 = vunpack.c.l.b16 %v36
  %v151 = vunpack.c.h.b16 %v36
  %v152 = vunpack.c.l.b16 %v37
  %v153 = vunpack.c.h.b16 %v37
  %v154 = vunpack.c.l.b16 %v38
  %v155 = vunpack.c.h.b16 %v38
  %v156 = vunpack.c.l.b16 %v39
  %v157 = vunpack.c.h.b16 %v39
  %v158 = vunpack.c.l.b16 %v40
  %v159 = vunpack.c.h.b16 %v40
  %v160 = vunpack.c.l.b16 %v41
  %v161 = vunpack.c.h.b16 %v41
  %v162 = vunpack.c.l.b16 %v42
  %v163 = vunpack.c.h.b16 %v42
  %v164 = vunpack.c.l.b16 %v43
  %v165 = vunpack.c.h.b16 %v43
  %v166 = vunpack.c.l.b16 %v44
  %v167 = vunpack.c.h.b16 %v44
  %v168 = vunpack.c.l.b16 %v45
  %v169 = vunpack.c.h.b16 %v45
  %v170 = vunpack.c.l.b16 %v46
  %v171 = vunpack.c.h.b16 %v46
  %v172 = vunpack.c.l.b16 %v47
  %v173 = vunpack.c.h.b16 %v47
  %v174 = vunpack.c.l.b16 %v48
  %v175 = vunpack.c.h.b16 %v48
  %v176 = vunpack.c.l.b16 %v49
  %v177 = vunpack.c.h.b16 %v49
  %v178 = vpack.c.b16 %v116, %v114
  %v179 = vpack.c.b16 %v117, %v115
  %v180 = vpack.c.b16 %v120, %v118
  %v181 = vpack.c.b16 %v121, %v119
  %v182 = vpack.c.b16 %v124, %v122
  %v183 = vpack.c.b16 %v125, %v123
  %v184 = vpack.c.b16 %v128, %v126
  %v185 = vpack.c.b16 %v129, %v127
  %v186 = vpack.c.b16 %v132, %v130
  %v187 = vpack.c.b16 %v133, %v131
  %v188 = vpack.c.b16 %v136, %v134
  %v189 = vpack.c.b16 %v137, %v135
  %v190 = vpack.c.b16 %v140, %v138
  %v191 = vpack.c.b16 %v141, %v139
  %v192 = vpack.c.b16 %v144, %v142
  %v193 = vpack.c.b16 %v145, %v143
  %v194 = vpack.c.b16 %v148, %v146
  %v195 = vpack.c.b16 %v149, %v147
  %v196 = vpack.c.b16 %v152, %v150
  %v197 = vpack.c.b16 %v153, %v151
  %v198 = vpack.c.b16 %v156, %v154
  %v199 = vpack.c.b16 %v157, %v155
  %v200 = vpack.c.b16 %v160, %v158
  %v201 = vpack.c.b16 %v161, %v159
  %v202 = vpack.c.b16 %v164, %v162
  %v203 = vpack.c.b16 %v165, %v163
  %v204 = vpack.c.b16 %v168, %v166
  %v205 = vpack.c.b16 %v169, %v167
  %v206 = vpack.c.b16 %v172, %v170
  %v207 = vpack.c.b16 %v173, %v171
  %v208 = vpack.c.b16 %v176, %v174
  %v209 = vpack.c.b16 %v177, %v175
  %v274 = vunpack.c.l.b16 %v50
  %v275 = vunpack.c.l.b16 %v51
  %v276 = vunpack.c.l.b16 %v52
  %v277 = vunpack.c.l.b16 %v53
  %v278 = vunpack.c.l.b16 %v54
  %v279 = vunpack.c.l.b16 %v55
  %v280 = vunpack.c.l.b16 %v56
  %v281 = vunpack.c.l.b16 %v57
  %v282 = vunpack.c.l.b16 %v58
  %v283 = vunpack.c.l.b16 %v59
  %v284 = vunpack.c.l.b16 %v60
  %v285 = vunpack.c.l.b16 %v61
  %v286 = vunpack.c.l.b16 %v62
  %v287 = vunpack.c.l.b16 %v63
  %v288 = vunpack.c.l.b16 %v64
  %v289 = vunpack.c.l.b16 %v65
  %v290 = vunpack.c.l.b16 %v66
  %v291 = vunpack.c.l.b16 %v67
  %v292 = vunpack.c.l.b16 %v68
  %v293 = vunpack.c.l.b16 %v69
  %v294 = vunpack.c.l.b16 %v70
  %v295 = vunpack.c.l.b16 %v71
  %v296 = vunpack.c.l.b16 %v72
  %v297 = vunpack.c.l.b16 %v73
  %v298 = vunpack.c.l.b16 %v74
  %v299 = vunpack.c.l.b16 %v75
  %v300 = vunpack.c.l.b16 %v76
  %v301 = vunpack.c.l.b16 %v77
  %v302 = vunpack.c.l.b16 %v78
  %v303 = vunpack.c.l.b16 %v79
  %v304 = vunpack.c.l.b16 %v80
  %v305 = vunpack.c.l.b16 %v81
  %v306 = vpack.c.b16 %v275, %v274
  %v307 = vpack.c.b16 %v277, %v276
  %v308 = vpack.c.b16 %v279, %v278
  %v309 = vpack.c.b16 %v281, %v280
  %v310 = vpack.c.b16 %v283, %v282
  %v311 = vpack.c.b16 %v285, %v284
  %v312 = vpack.c.b16 %v287, %v286
  %v313 = vpack.c.b16 %v289, %v288
  %v314 = vpack.c.b16 %v291, %v290
  %v315 = vpack.c.b16 %v293, %v292
  %v316 = vpack.c.b16 %v295, %v294
  %v317 = vpack.c.b16 %v297, %v296
  %v318 = vpack.c.b16 %v299, %v298
  %v319 = vpack.c.b16 %v301, %v300
  %v320 = vpack.c.b16 %v303, %v302
  %v321 = vpack.c.b16 %v305, %v304
  %338 = vmatprep.subr.bf16.mxu0 0
  %339 = vmatpush1.bf16.msra.mxu0 %v306
  %340 = vmatprep.subr.bf16.mxu0 0
  %341 = vmatpush1.bf16.msra.mxu0 %v307
  %342 = vmatprep.subr.bf16.mxu0 0
  %343 = vmatpush1.bf16.msra.mxu0 %v308
  %344 = vmatprep.subr.bf16.mxu0 0
  %345 = vmatpush1.bf16.msra.mxu0 %v309
  %346 = vmatprep.subr.bf16.mxu0 0
  %347 = vmatpush1.bf16.msra.mxu0 %v310
  %348 = vmatprep.subr.bf16.mxu0 0
  %349 = vmatpush1.bf16.msra.mxu0 %v311
  %350 = vmatprep.subr.bf16.mxu0 0
  %351 = vmatpush1.bf16.msra.mxu0 %v312
  %352 = vmatprep.subr.bf16.mxu0 0
  %353 = vmatpush1.bf16.msra.mxu0 %v313
  %354 = vmatprep.subr.bf16.mxu0 0
  %355 = vmatpush1.bf16.msra.mxu0 %v314
  %356 = vmatprep.subr.bf16.mxu0 0
  %357 = vmatpush1.bf16.msra.mxu0 %v315
  %358 = vmatprep.subr.bf16.mxu0 0
  %359 = vmatpush1.bf16.msra.mxu0 %v316
  %360 = vmatprep.subr.bf16.mxu0 0
  %361 = vmatpush1.bf16.msra.mxu0 %v317
  %362 = vmatprep.subr.bf16.mxu0 0
  %363 = vmatpush1.bf16.msra.mxu0 %v318
  %364 = vmatprep.subr.bf16.mxu0 0
  %365 = vmatpush1.bf16.msra.mxu0 %v319
  %366 = vmatprep.subr.bf16.mxu0 0
  %367 = vmatpush1.bf16.msra.mxu0 %v320
  %368 = vmatprep.subr.bf16.mxu0 0
  %369 = vmatpush1.bf16.msra.mxu0 %v321
  %370 = vmatprep.mubr.bf16.mxu0 %v179
  %371 = vmatmul.mubr.bf16.gmra.mrb[0].mxu0 %v178
  %v372 = vpop.f32.mrb[0].mxu0
  %v373 = vadd.f32 0.0, %v372
  %v374 = vpop.f32.mrb[0].mxu0
  %v375 = vpop.f32.mrb[0].mxu0
  %v376 = vadd.f32 0.0, %v375
  %v377 = vpop.f32.mrb[0].mxu0
  %378 = vmatprep.mubr.bf16.mxu0 %v181
  %379 = vmatmul.mubr.bf16.gmra.mrb[0].mxu0 %v180
  %v380 = vpop.f32.mrb[0].mxu0
  %v381 = vadd.f32 0.0, %v380
  %v382 = vpop.f32.mrb[0].mxu0
  %v383 = vpop.f32.mrb[0].mxu0
  %v384 = vadd.f32 0.0, %v383
  %v385 = vpop.f32.mrb[0].mxu0
  %386 = vmatprep.mubr.bf16.mxu0 %v183
  %387 = vmatmul.mubr.bf16.gmra.mrb[0].mxu0 %v182
  %v388 = vpop.f32.mrb[0].mxu0
  %v389 = vadd.f32 0.0, %v388
  %v390 = vpop.f32.mrb[0].mxu0
  %v391 = vpop.f32.mrb[0].mxu0
  %v392 = vadd.f32 0.0, %v391
  %v393 = vpop.f32.mrb[0].mxu0
  %394 = vmatprep.mubr.bf16.mxu0 %v185
  %395 = vmatmul.mubr.bf16.gmra.mrb[0].mxu0 %v184
  %v396 = vpop.f32.mrb[0].mxu0
  %v397 = vadd.f32 0.0, %v396
  %v398 = vpop.f32.mrb[0].mxu0
  %v399 = vpop.f32.mrb[0].mxu0
  %v400 = vadd.f32 0.0, %v399
  %v401 = vpop.f32.mrb[0].mxu0
  %402 = vmatprep.mubr.bf16.mxu0 %v187
  %403 = vmatmul.mubr.bf16.gmra.mrb[0].mxu0 %v186
  %v404 = vpop.f32.mrb[0].mxu0
  %v405 = vadd.f32 0.0, %v404
  %v406 = vpop.f32.mrb[0].mxu0
  %v407 = vpop.f32.mrb[0].mxu0
  %v408 = vadd.f32 0.0, %v407
  %v409 = vpop.f32.mrb[0].mxu0
  %410 = vmatprep.mubr.bf16.mxu0 %v189
  %411 = vmatmul.mubr.bf16.gmra.mrb[0].mxu0 %v188
  %v412 = vpop.f32.mrb[0].mxu0
  %v413 = vadd.f32 0.0, %v412
  %v414 = vpop.f32.mrb[0].mxu0
  %v415 = vpop.f32.mrb[0].mxu0
  %v416 = vadd.f32 0.0, %v415
  %v417 = vpop.f32.mrb[0].mxu0
  %418 = vmatprep.mubr.bf16.mxu0 %v191
  %419 = vmatmul.mubr.bf16.gmra.mrb[0].mxu0 %v190
  %v420 = vpop.f32.mrb[0].mxu0
  %v421 = vadd.f32 0.0, %v420
  %v422 = vpop.f32.mrb[0].mxu0
  %v423 = vpop.f32.mrb[0].mxu0
  %v424 = vadd.f32 0.0, %v423
  %v425 = vpop.f32.mrb[0].mxu0
  %426 = vmatprep.mubr.bf16.mxu0 %v193
  %427 = vmatmul.mubr.bf16.gmra.mrb[0].mxu0 %v192
  %v428 = vpop.f32.mrb[0].mxu0
  %v429 = vadd.f32 0.0, %v428
  %v430 = vpop.f32.mrb[0].mxu0
  %v431 = vpop.f32.mrb[0].mxu0
  %v432 = vadd.f32 0.0, %v431
  %v433 = vpop.f32.mrb[0].mxu0
  %434 = vmatprep.mubr.bf16.mxu0 %v195
  %435 = vmatmul.mubr.bf16.gmra.mrb[0].mxu0 %v194
  %v436 = vpop.f32.mrb[0].mxu0
  %v437 = vadd.f32 0.0, %v436
  %v438 = vpop.f32.mrb[0].mxu0
  %v439 = vpop.f32.mrb[0].mxu0
  %v440 = vadd.f32 0.0, %v439
  %v441 = vpop.f32.mrb[0].mxu0
  %442 = vmatprep.mubr.bf16.mxu0 %v197
  %443 = vmatmul.mubr.bf16.gmra.mrb[0].mxu0 %v196
  %v444 = vpop.f32.mrb[0].mxu0
  %v445 = vadd.f32 0.0, %v444
  %v446 = vpop.f32.mrb[0].mxu0
  %v447 = vpop.f32.mrb[0].mxu0
  %v448 = vadd.f32 0.0, %v447
  %v449 = vpop.f32.mrb[0].mxu0
  %450 = vmatprep.mubr.bf16.mxu0 %v199
  %451 = vmatmul.mubr.bf16.gmra.mrb[0].mxu0 %v198
  %v452 = vpop.f32.mrb[0].mxu0
  %v453 = vadd.f32 0.0, %v452
  %v454 = vpop.f32.mrb[0].mxu0
  %v455 = vpop.f32.mrb[0].mxu0
  %v456 = vadd.f32 0.0, %v455
  %v457 = vpop.f32.mrb[0].mxu0
  %458 = vmatprep.mubr.bf16.mxu0 %v201
  %459 = vmatmul.mubr.bf16.gmra.mrb[0].mxu0 %v200
  %v460 = vpop.f32.mrb[0].mxu0
  %v461 = vadd.f32 0.0, %v460
  %v462 = vpop.f32.mrb[0].mxu0
  %v463 = vpop.f32.mrb[0].mxu0
  %v464 = vadd.f32 0.0, %v463
  %v465 = vpop.f32.mrb[0].mxu0
  %466 = vmatprep.mubr.bf16.mxu0 %v203
  %467 = vmatmul.mubr.bf16.gmra.mrb[0].mxu0 %v202
  %v468 = vpop.f32.mrb[0].mxu0
  %v469 = vadd.f32 0.0, %v468
  %v470 = vpop.f32.mrb[0].mxu0
  %v471 = vpop.f32.mrb[0].mxu0
  %v472 = vadd.f32 0.0, %v471
  %v473 = vpop.f32.mrb[0].mxu0
  %474 = vmatprep.mubr.bf16.mxu0 %v205
  %475 = vmatmul.mubr.bf16.gmra.mrb[0].mxu0 %v204
  %v476 = vpop.f32.mrb[0].mxu0
  %v477 = vadd.f32 0.0, %v476
  %v478 = vpop.f32.mrb[0].mxu0
  %v479 = vpop.f32.mrb[0].mxu0
  %v480 = vadd.f32 0.0, %v479
  %v481 = vpop.f32.mrb[0].mxu0
  %482 = vmatprep.mubr.bf16.mxu0 %v207
  %483 = vmatmul.mubr.bf16.gmra.mrb[0].mxu0 %v206
  %v484 = vpop.f32.mrb[0].mxu0
  %v485 = vadd.f32 0.0, %v484
  %v486 = vpop.f32.mrb[0].mxu0
  %v487 = vpop.f32.mrb[0].mxu0
  %v488 = vadd.f32 0.0, %v487
  %v489 = vpop.f32.mrb[0].mxu0
  %490 = vmatprep.mubr.bf16.mxu0 %v209
  %491 = vmatmul.mubr.bf16.gmra.mrb[0].mxu0 %v208
  %v492 = vpop.f32.mrb[0].mxu0
  %v493 = vadd.f32 0.0, %v492
  %v494 = vpop.f32.mrb[0].mxu0
  %v495 = vpop.f32.mrb[0].mxu0
  %v496 = vadd.f32 0.0, %v495
  %v497 = vpop.f32.mrb[0].mxu0
  %498 = vdwg.mxu0
  %v499 = vld [vmem:[%s2] sm:$0x1]
  %v500 = vld [vmem:[%s3] sm:$0x1]
  %v501 = vlaneseq
  %v502 = vand.u32 %v501, 127
  %v503 = vadd.s32 %v502, 128
  %v504 = vlaneseq
  %v505 = vshrl.u32 %v504, 7
  %v506 = vmul.u32 %v505, 128
  %vm507 = vcmp.ge.s32.totalorder %v502, %v506
  %vm508 = vcmp.ge.s32.totalorder %v503, %v506
  %v509 = vadd.s32 %v506, 128
  %vm510 = vcmp.lt.s32.totalorder %v502, %v509
  %vm511 = vcmp.lt.s32.totalorder %v503, %v509
  %vm512 = vmand %vm507, %vm510
  %vm513 = vmand %vm508, %vm511
  %v514 = vsel %vm512, 1, 0
  %v515 = vsel %vm513, 1, 0
  %v516 = vcvt.s32.f32 %v514
  %v517 = vcvt.s32.f32 %v515
  %v518 = vadd.s32 %v505, 8
  %v519 = vadd.s32 %v505, 16
  %v520 = vadd.s32 %v505, 24
  %v521 = vadd.s32 %v505, 32
  %v522 = vadd.s32 %v505, 40
  %v523 = vadd.s32 %v505, 48
  %v524 = vadd.s32 %v505, 56
  %v525 = vadd.s32 %v505, 64
  %v526 = vadd.s32 %v505, 72
  %v527 = vadd.s32 %v505, 80
  %v528 = vadd.s32 %v505, 88
  %v529 = vadd.s32 %v505, 96
  %v530 = vadd.s32 %v505, 104
  %v531 = vadd.s32 %v505, 112
  %v532 = vadd.s32 %v505, 120
  %v533 = vadd.s32 %v505, 128
  %v534 = vadd.s32 %v505, 136
  %v535 = vadd.s32 %v505, 144
  %v536 = vadd.s32 %v505, 152
  %v537 = vadd.s32 %v505, 160
  %v538 = vadd.s32 %v505, 168
  %v539 = vadd.s32 %v505, 176
  %v540 = vadd.s32 %v505, 184
  %v541 = vadd.s32 %v505, 192
  %v542 = vadd.s32 %v505, 200
  %v543 = vadd.s32 %v505, 208
  %v544 = vadd.s32 %v505, 216
  %v545 = vadd.s32 %v505, 224
  %v546 = vadd.s32 %v505, 232
  %v547 = vadd.s32 %v505, 240
  %v548 = vadd.s32 %v505, 248
  %v549 = vmul.u32 %v502, 128
  %vm550 = vcmp.ge.s32.totalorder %v505, %v549
  %vm551 = vcmp.ge.s32.totalorder %v518, %v549
  %vm552 = vcmp.ge.s32.totalorder %v519, %v549
  %vm553 = vcmp.ge.s32.totalorder %v520, %v549
  %vm554 = vcmp.ge.s32.totalorder %v521, %v549
  %vm555 = vcmp.ge.s32.totalorder %v522, %v549
  %vm556 = vcmp.ge.s32.totalorder %v523, %v549
  %vm557 = vcmp.ge.s32.totalorder %v524, %v549
  %vm558 = vcmp.ge.s32.totalorder %v525, %v549
  %vm559 = vcmp.ge.s32.totalorder %v526, %v549
  %vm560 = vcmp.ge.s32.totalorder %v527, %v549
  %vm561 = vcmp.ge.s32.totalorder %v528, %v549
  %vm562 = vcmp.ge.s32.totalorder %v529, %v549
  %vm563 = vcmp.ge.s32.totalorder %v530, %v549
  %vm564 = vcmp.ge.s32.totalorder %v531, %v549
  %vm565 = vcmp.ge.s32.totalorder %v532, %v549
  %vm566 = vcmp.ge.s32.totalorder %v533, %v549
  %vm567 = vcmp.ge.s32.totalorder %v534, %v549
  %vm568 = vcmp.ge.s32.totalorder %v535, %v549
  %vm569 = vcmp.ge.s32.totalorder %v536, %v549
  %vm570 = vcmp.ge.s32.totalorder %v537, %v549
  %vm571 = vcmp.ge.s32.totalorder %v538, %v549
  %vm572 = vcmp.ge.s32.totalorder %v539, %v549
  %vm573 = vcmp.ge.s32.totalorder %v540, %v549
  %vm574 = vcmp.ge.s32.totalorder %v541, %v549
  %vm575 = vcmp.ge.s32.totalorder %v542, %v549
  %vm576 = vcmp.ge.s32.totalorder %v543, %v549
  %vm577 = vcmp.ge.s32.totalorder %v544, %v549
  %vm578 = vcmp.ge.s32.totalorder %v545, %v549
  %vm579 = vcmp.ge.s32.totalorder %v546, %v549
  %vm580 = vcmp.ge.s32.totalorder %v547, %v549
  %vm581 = vcmp.ge.s32.totalorder %v548, %v549
  %v582 = vadd.s32 %v549, 128
  %vm583 = vcmp.lt.s32.totalorder %v505, %v582
  %vm584 = vcmp.lt.s32.totalorder %v518, %v582
  %vm585 = vcmp.lt.s32.totalorder %v519, %v582
  %vm586 = vcmp.lt.s32.totalorder %v520, %v582
  %vm587 = vcmp.lt.s32.totalorder %v521, %v582
  %vm588 = vcmp.lt.s32.totalorder %v522, %v582
  %vm589 = vcmp.lt.s32.totalorder %v523, %v582
  %vm590 = vcmp.lt.s32.totalorder %v524, %v582
  %vm591 = vcmp.lt.s32.totalorder %v525, %v582
  %vm592 = vcmp.lt.s32.totalorder %v526, %v582
  %vm593 = vcmp.lt.s32.totalorder %v527, %v582
  %vm594 = vcmp.lt.s32.totalorder %v528, %v582
  %vm595 = vcmp.lt.s32.totalorder %v529, %v582
  %vm596 = vcmp.lt.s32.totalorder %v530, %v582
  %vm597 = vcmp.lt.s32.totalorder %v531, %v582
  %vm598 = vcmp.lt.s32.totalorder %v532, %v582
  %vm599 = vcmp.lt.s32.totalorder %v533, %v582
  %vm600 = vcmp.lt.s32.totalorder %v534, %v582
  %vm601 = vcmp.lt.s32.totalorder %v535, %v582
  %vm602 = vcmp.lt.s32.totalorder %v536, %v582
  %vm603 = vcmp.lt.s32.totalorder %v537, %v582
  %vm604 = vcmp.lt.s32.totalorder %v538, %v582
  %vm605 = vcmp.lt.s32.totalorder %v539, %v582
  %vm606 = vcmp.lt.s32.totalorder %v540, %v582
  %vm607 = vcmp.lt.s32.totalorder %v541, %v582
  %vm608 = vcmp.lt.s32.totalorder %v542, %v582
  %vm609 = vcmp.lt.s32.totalorder %v543, %v582
  %vm610 = vcmp.lt.s32.totalorder %v544, %v582
  %vm611 = vcmp.lt.s32.totalorder %v545, %v582
  %vm612 = vcmp.lt.s32.totalorder %v546, %v582
  %vm613 = vcmp.lt.s32.totalorder %v547, %v582
  %vm614 = vcmp.lt.s32.totalorder %v548, %v582
  %vm615 = vmand %vm550, %vm583
  %vm616 = vmand %vm551, %vm584
  %vm617 = vmand %vm552, %vm585
  %vm618 = vmand %vm553, %vm586
  %vm619 = vmand %vm554, %vm587
  %vm620 = vmand %vm555, %vm588
  %vm621 = vmand %vm556, %vm589
  %vm622 = vmand %vm557, %vm590
  %vm623 = vmand %vm558, %vm591
  %vm624 = vmand %vm559, %vm592
  %vm625 = vmand %vm560, %vm593
  %vm626 = vmand %vm561, %vm594
  %vm627 = vmand %vm562, %vm595
  %vm628 = vmand %vm563, %vm596
  %vm629 = vmand %vm564, %vm597
  %vm630 = vmand %vm565, %vm598
  %vm631 = vmand %vm566, %vm599
  %vm632 = vmand %vm567, %vm600
  %vm633 = vmand %vm568, %vm601
  %vm634 = vmand %vm569, %vm602
  %vm635 = vmand %vm570, %vm603
  %vm636 = vmand %vm571, %vm604
  %vm637 = vmand %vm572, %vm605
  %vm638 = vmand %vm573, %vm606
  %vm639 = vmand %vm574, %vm607
  %vm640 = vmand %vm575, %vm608
  %vm641 = vmand %vm576, %vm609
  %vm642 = vmand %vm577, %vm610
  %vm643 = vmand %vm578, %vm611
  %vm644 = vmand %vm579, %vm612
  %vm645 = vmand %vm580, %vm613
  %vm646 = vmand %vm581, %vm614
  %v647 = vsel %vm615, 1, 0
  %v648 = vsel %vm616, 1, 0
  %v649 = vsel %vm617, 1, 0
  %v650 = vsel %vm618, 1, 0
  %v651 = vsel %vm619, 1, 0
  %v652 = vsel %vm620, 1, 0
  %v653 = vsel %vm621, 1, 0
  %v654 = vsel %vm622, 1, 0
  %v655 = vsel %vm623, 1, 0
  %v656 = vsel %vm624, 1, 0
  %v657 = vsel %vm625, 1, 0
  %v658 = vsel %vm626, 1, 0
  %v659 = vsel %vm627, 1, 0
  %v660 = vsel %vm628, 1, 0
  %v661 = vsel %vm629, 1, 0
  %v662 = vsel %vm630, 1, 0
  %v663 = vsel %vm631, 1, 0
  %v664 = vsel %vm632, 1, 0
  %v665 = vsel %vm633, 1, 0
  %v666 = vsel %vm634, 1, 0
  %v667 = vsel %vm635, 1, 0
  %v668 = vsel %vm636, 1, 0
  %v669 = vsel %vm637, 1, 0
  %v670 = vsel %vm638, 1, 0
  %v671 = vsel %vm639, 1, 0
  %v672 = vsel %vm640, 1, 0
  %v673 = vsel %vm641, 1, 0
  %v674 = vsel %vm642, 1, 0
  %v675 = vsel %vm643, 1, 0
  %v676 = vsel %vm644, 1, 0
  %v677 = vsel %vm645, 1, 0
  %v678 = vsel %vm646, 1, 0
  %v679 = vcvt.s32.f32 %v647
  %v680 = vcvt.s32.f32 %v648
  %v681 = vcvt.s32.f32 %v649
  %v682 = vcvt.s32.f32 %v650
  %v683 = vcvt.s32.f32 %v651
  %v684 = vcvt.s32.f32 %v652
  %v685 = vcvt.s32.f32 %v653
  %v686 = vcvt.s32.f32 %v654
  %v687 = vcvt.s32.f32 %v655
  %v688 = vcvt.s32.f32 %v656
  %v689 = vcvt.s32.f32 %v657
  %v690 = vcvt.s32.f32 %v658
  %v691 = vcvt.s32.f32 %v659
  %v692 = vcvt.s32.f32 %v660
  %v693 = vcvt.s32.f32 %v661
  %v694 = vcvt.s32.f32 %v662
  %v695 = vcvt.s32.f32 %v663
  %v696 = vcvt.s32.f32 %v664
  %v697 = vcvt.s32.f32 %v665
  %v698 = vcvt.s32.f32 %v666
  %v699 = vcvt.s32.f32 %v667
  %v700 = vcvt.s32.f32 %v668
  %v701 = vcvt.s32.f32 %v669
  %v702 = vcvt.s32.f32 %v670
  %v703 = vcvt.s32.f32 %v671
  %v704 = vcvt.s32.f32 %v672
  %v705 = vcvt.s32.f32 %v673
  %v706 = vcvt.s32.f32 %v674
  %v707 = vcvt.s32.f32 %v675
  %v708 = vcvt.s32.f32 %v676
  %v709 = vcvt.s32.f32 %v677
  %v710 = vcvt.s32.f32 %v678
  %711 = vmatprep.subr.mxu0 0.0
  %712 = vmatpush1.msra.mxu0 %v373
  %713 = vmatprep.subr.mxu0 0.0
  %714 = vmatpush1.msra.mxu0 %v376
  %715 = vmatprep.subr.mxu0 0.0
  %716 = vmatpush1.msra.mxu0 %v381
  %717 = vmatprep.subr.mxu0 0.0
  %718 = vmatpush1.msra.mxu0 %v384
  %719 = vmatprep.subr.mxu0 0.0
  %720 = vmatpush1.msra.mxu0 %v389
  %721 = vmatprep.subr.mxu0 0.0
  %722 = vmatpush1.msra.mxu0 %v392
  %723 = vmatprep.subr.mxu0 0.0
  %724 = vmatpush1.msra.mxu0 %v397
  %725 = vmatprep.subr.mxu0 0.0
  %726 = vmatpush1.msra.mxu0 %v400
  %727 = vmatprep.subr.mxu0 0.0
  %728 = vmatpush1.msra.mxu0 %v405
  %729 = vmatprep.subr.mxu0 0.0
  %730 = vmatpush1.msra.mxu0 %v408
  %731 = vmatprep.subr.mxu0 0.0
  %732 = vmatpush1.msra.mxu0 %v413
  %733 = vmatprep.subr.mxu0 0.0
  %734 = vmatpush1.msra.mxu0 %v416
  %735 = vmatprep.subr.mxu0 0.0
  %736 = vmatpush1.msra.mxu0 %v421
  %737 = vmatprep.subr.mxu0 0.0
  %738 = vmatpush1.msra.mxu0 %v424
  %739 = vmatprep.subr.mxu0 0.0
  %740 = vmatpush1.msra.mxu0 %v429
  %741 = vmatprep.subr.mxu0 0.0
  %742 = vmatpush1.msra.mxu0 %v432
  %743 = vmatprep.subr.mxu0 0.0
  %744 = vmatpush1.msra.mxu0 %v437
  %745 = vmatprep.subr.mxu0 0.0
  %746 = vmatpush1.msra.mxu0 %v440
  %747 = vmatprep.subr.mxu0 0.0
  %748 = vmatpush1.msra.mxu0 %v445
  %749 = vmatprep.subr.mxu0 0.0
  %750 = vmatpush1.msra.mxu0 %v448
  %751 = vmatprep.subr.mxu0 0.0
  %752 = vmatpush1.msra.mxu0 %v453
  %753 = vmatprep.subr.mxu0 0.0
  %754 = vmatpush1.msra.mxu0 %v456
  %755 = vmatprep.subr.mxu0 0.0
  %756 = vmatpush1.msra.mxu0 %v461
  %757 = vmatprep.subr.mxu0 0.0
  %758 = vmatpush1.msra.mxu0 %v464
  %759 = vmatprep.subr.mxu0 0.0
  %760 = vmatpush1.msra.mxu0 %v469
  %761 = vmatprep.subr.mxu0 0.0
  %762 = vmatpush1.msra.mxu0 %v472
  %763 = vmatprep.subr.mxu0 0.0
  %764 = vmatpush1.msra.mxu0 %v477
  %765 = vmatprep.subr.mxu0 0.0
  %766 = vmatpush1.msra.mxu0 %v480
  %767 = vmatprep.subr.mxu0 0.0
  %768 = vmatpush1.msra.mxu0 %v485
  %769 = vmatprep.subr.mxu0 0.0
  %770 = vmatpush1.msra.mxu0 %v488
  %771 = vmatprep.subr.mxu0 0.0
  %772 = vmatpush1.msra.mxu0 %v493
  %773 = vmatprep.subr.mxu0 0.0
  %774 = vmatpush1.msra.mxu0 %v496
  %775 = vmatprep.mubr.f32.mxu0 %v517
  %776 = vmatmul.mubr.f32.gmra.mrb[0].mxu0 %v516
  %v777 = vpop.f32.mrb[0].mxu0
  %v778 = vadd.f32 0.0, %v777
  %v779 = vpop.f32.mrb[0].mxu0
  %780 = vdwg.mxu0
  %v781 = vmul.f32 %v778, 0.0078125
  %v782 = vmul.f32 %v373, %v373
  %v783 = vmul.f32 %v376, %v376
  %v784 = vmul.f32 %v381, %v381
  %v785 = vmul.f32 %v384, %v384
  %v786 = vmul.f32 %v389, %v389
  %v787 = vmul.f32 %v392, %v392
  %v788 = vmul.f32 %v397, %v397
  %v789 = vmul.f32 %v400, %v400
  %v790 = vmul.f32 %v405, %v405
  %v791 = vmul.f32 %v408, %v408
  %v792 = vmul.f32 %v413, %v413
  %v793 = vmul.f32 %v416, %v416
  %v794 = vmul.f32 %v421, %v421
  %v795 = vmul.f32 %v424, %v424
  %v796 = vmul.f32 %v429, %v429
  %v797 = vmul.f32 %v432, %v432
  %v798 = vmul.f32 %v437, %v437
  %v799 = vmul.f32 %v440, %v440
  %v800 = vmul.f32 %v445, %v445
  %v801 = vmul.f32 %v448, %v448
  %v802 = vmul.f32 %v453, %v453
  %v803 = vmul.f32 %v456, %v456
  %v804 = vmul.f32 %v461, %v461
  %v805 = vmul.f32 %v464, %v464
  %v806 = vmul.f32 %v469, %v469
  %v807 = vmul.f32 %v472, %v472
  %v808 = vmul.f32 %v477, %v477
  %v809 = vmul.f32 %v480, %v480
  %v810 = vmul.f32 %v485, %v485
  %v811 = vmul.f32 %v488, %v488
  %v812 = vmul.f32 %v493, %v493
  %v813 = vmul.f32 %v496, %v496
  %814 = vmatprep.subr.mxu0 0.0
  %815 = vmatpush1.msra.mxu0 %v782
  %816 = vmatprep.subr.mxu0 0.0
  %817 = vmatpush1.msra.mxu0 %v783
  %818 = vmatprep.subr.mxu0 0.0
  %819 = vmatpush1.msra.mxu0 %v784
  %820 = vmatprep.subr.mxu0 0.0
  %821 = vmatpush1.msra.mxu0 %v785
  %822 = vmatprep.subr.mxu0 0.0
  %823 = vmatpush1.msra.mxu0 %v786
  %824 = vmatprep.subr.mxu0 0.0
  %825 = vmatpush1.msra.mxu0 %v787
  %826 = vmatprep.subr.mxu0 0.0
  %827 = vmatpush1.msra.mxu0 %v788
  %828 = vmatprep.subr.mxu0 0.0
  %829 = vmatpush1.msra.mxu0 %v789
  %830 = vmatprep.subr.mxu0 0.0
  %831 = vmatpush1.msra.mxu0 %v790
  %832 = vmatprep.subr.mxu0 0.0
  %833 = vmatpush1.msra.mxu0 %v791
  %834 = vmatprep.subr.mxu0 0.0
  %835 = vmatpush1.msra.mxu0 %v792
  %836 = vmatprep.subr.mxu0 0.0
  %837 = vmatpush1.msra.mxu0 %v793
  %838 = vmatprep.subr.mxu0 0.0
  %839 = vmatpush1.msra.mxu0 %v794
  %840 = vmatprep.subr.mxu0 0.0
  %841 = vmatpush1.msra.mxu0 %v795
  %842 = vmatprep.subr.mxu0 0.0
  %843 = vmatpush1.msra.mxu0 %v796
  %844 = vmatprep.subr.mxu0 0.0
  %845 = vmatpush1.msra.mxu0 %v797
  %846 = vmatprep.subr.mxu0 0.0
  %847 = vmatpush1.msra.mxu0 %v798
  %848 = vmatprep.subr.mxu0 0.0
  %849 = vmatpush1.msra.mxu0 %v799
  %850 = vmatprep.subr.mxu0 0.0
  %851 = vmatpush1.msra.mxu0 %v800
  %852 = vmatprep.subr.mxu0 0.0
  %853 = vmatpush1.msra.mxu0 %v801
  %854 = vmatprep.subr.mxu0 0.0
  %855 = vmatpush1.msra.mxu0 %v802
  %856 = vmatprep.subr.mxu0 0.0
  %857 = vmatpush1.msra.mxu0 %v803
  %858 = vmatprep.subr.mxu0 0.0
  %859 = vmatpush1.msra.mxu0 %v804
  %860 = vmatprep.subr.mxu0 0.0
  %861 = vmatpush1.msra.mxu0 %v805
  %862 = vmatprep.subr.mxu0 0.0
  %863 = vmatpush1.msra.mxu0 %v806
  %864 = vmatprep.subr.mxu0 0.0
  %865 = vmatpush1.msra.mxu0 %v807
  %866 = vmatprep.subr.mxu0 0.0
  %867 = vmatpush1.msra.mxu0 %v808
  %868 = vmatprep.subr.mxu0 0.0
  %869 = vmatpush1.msra.mxu0 %v809
  %870 = vmatprep.subr.mxu0 0.0
  %871 = vmatpush1.msra.mxu0 %v810
  %872 = vmatprep.subr.mxu0 0.0
  %873 = vmatpush1.msra.mxu0 %v811
  %874 = vmatprep.subr.mxu0 0.0
  %875 = vmatpush1.msra.mxu0 %v812
  %876 = vmatprep.subr.mxu0 0.0
  %877 = vmatpush1.msra.mxu0 %v813
  %878 = vmatprep.mubr.f32.mxu0 %v517
  %879 = vmatmul.mubr.f32.gmra.mrb[0].mxu0 %v516
  %v880 = vpop.f32.mrb[0].mxu0
  %v881 = vadd.f32 0.0, %v880
  %v882 = vpop.f32.mrb[0].mxu0
  %883 = vdwg.mxu0
  %v884 = vmul.f32 %v881, 0.0078125
  %v885 = vmul.f32 %v781, %v781
  %v886 = vsub.f32 %v884, %v885
  %v887 = vmax.f32 %v886, 0.0
  %v888 = vadd.f32 %v887, 1e-05
  %v889 = vrsqrt.pop %v888
  %v891 = vlaneseq
  %v892 = vshrl.u32 %v891, 7
  %v893 = vsub.s32 0, %v892
  %v894 = vrot.slane %v499, %v893
  %v896 = vmul.f32 %v894, %v889
  %v897 = vmul.f32 %v781, %v896
  %v899 = vlaneseq
  %v900 = vshrl.u32 %v899, 7
  %v901 = vsub.s32 0, %v900
  %v902 = vrot.slane %v500, %v901
  %v904 = vsub.f32 %v902, %v897
  %vm905 = vcmask 15360
  %v907 = vsel %vm905, %v679, 0
  %v910 = vsel %vm905, %v680, 0
  %v913 = vsel %vm905, %v681, 0
  %v916 = vsel %vm905, %v682, 0
  %v919 = vsel %vm905, %v683, 0
  %v922 = vsel %vm905, %v684, 0
  %v925 = vsel %vm905, %v685, 0
  %v928 = vsel %vm905, %v686, 0
  %v931 = vsel %vm905, %v687, 0
  %v934 = vsel %vm905, %v688, 0
  %v937 = vsel %vm905, %v689, 0
  %v940 = vsel %vm905, %v690, 0
  %v943 = vsel %vm905, %v691, 0
  %v946 = vsel %vm905, %v692, 0
  %v949 = vsel %vm905, %v693, 0
  %v952 = vsel %vm905, %v694, 0
  %v955 = vsel %vm905, %v695, 0
  %v958 = vsel %vm905, %v696, 0
  %v961 = vsel %vm905, %v697, 0
  %v964 = vsel %vm905, %v698, 0
  %v967 = vsel %vm905, %v699, 0
  %v970 = vsel %vm905, %v700, 0
  %v973 = vsel %vm905, %v701, 0
  %v976 = vsel %vm905, %v702, 0
  %v979 = vsel %vm905, %v703, 0
  %v982 = vsel %vm905, %v704, 0
  %v985 = vsel %vm905, %v705, 0
  %v988 = vsel %vm905, %v706, 0
  %v991 = vsel %vm905, %v707, 0
  %v994 = vsel %vm905, %v708, 0
  %v997 = vsel %vm905, %v709, 0
  %v1000 = vsel %vm905, %v710, 0
  %vm1002 = vcmask 1041408
  %v1004 = vsel %vm1002, %v896, 0
  %1006 = vmatprep.subr.mxu0 0.0
  %1007 = vmatpush1.msra.mxu0 %v1004
  %1008 = vmatprep.subr.mxu0 0.0
  %1009 = vmatpush1.msra.mxu0 0.0
  %1010 = vmatprep.subr.mxu0 0.0
  %1011 = vmatpush1.msra.mxu0 0.0
  %1012 = vmatprep.subr.mxu0 0.0
  %1013 = vmatpush1.msra.mxu0 0.0
  %1014 = vmatprep.subr.mxu0 0.0
  %1015 = vmatpush1.msra.mxu0 0.0
  %1016 = vmatprep.subr.mxu0 0.0
  %1017 = vmatpush1.msra.mxu0 0.0
  %1018 = vmatprep.subr.mxu0 0.0
  %1019 = vmatpush1.msra.mxu0 0.0
  %1020 = vmatprep.subr.mxu0 0.0
  %1021 = vmatpush1.msra.mxu0 0.0
  %1022 = vmatprep.subr.mxu0 0.0
  %1023 = vmatpush1.msra.mxu0 0.0
  %1024 = vmatprep.subr.mxu0 0.0
  %1025 = vmatpush1.msra.mxu0 0.0
  %1026 = vmatprep.subr.mxu0 0.0
  %1027 = vmatpush1.msra.mxu0 0.0
  %1028 = vmatprep.subr.mxu0 0.0
  %1029 = vmatpush1.msra.mxu0 0.0
  %1030 = vmatprep.subr.mxu0 0.0
  %1031 = vmatpush1.msra.mxu0 0.0
  %1032 = vmatprep.subr.mxu0 0.0
  %1033 = vmatpush1.msra.mxu0 0.0
  %1034 = vmatprep.subr.mxu0 0.0
  %1035 = vmatpush1.msra.mxu0 0.0
  %1036 = vmatprep.subr.mxu0 0.0
  %1037 = vmatpush1.msra.mxu0 0.0
  %1038 = vmatprep.subr.mxu0 0.0
  %1039 = vmatpush1.msra.mxu0 0.0
  %1040 = vmatprep.subr.mxu0 0.0
  %1041 = vmatpush1.msra.mxu0 0.0
  %1042 = vmatprep.subr.mxu0 0.0
  %1043 = vmatpush1.msra.mxu0 0.0
  %1044 = vmatprep.subr.mxu0 0.0
  %1045 = vmatpush1.msra.mxu0 0.0
  %1046 = vmatprep.subr.mxu0 0.0
  %1047 = vmatpush1.msra.mxu0 0.0
  %1048 = vmatprep.subr.mxu0 0.0
  %1049 = vmatpush1.msra.mxu0 0.0
  %1050 = vmatprep.subr.mxu0 0.0
  %1051 = vmatpush1.msra.mxu0 0.0
  %1052 = vmatprep.subr.mxu0 0.0
  %1053 = vmatpush1.msra.mxu0 0.0
  %1054 = vmatprep.subr.mxu0 0.0
  %1055 = vmatpush1.msra.mxu0 0.0
  %1056 = vmatprep.subr.mxu0 0.0
  %1057 = vmatpush1.msra.mxu0 0.0
  %1058 = vmatprep.subr.mxu0 0.0
  %1059 = vmatpush1.msra.mxu0 0.0
  %1060 = vmatprep.subr.mxu0 0.0
  %1061 = vmatpush1.msra.mxu0 0.0
  %1062 = vmatprep.subr.mxu0 0.0
  %1063 = vmatpush1.msra.mxu0 0.0
  %1064 = vmatprep.subr.mxu0 0.0
  %1065 = vmatpush1.msra.mxu0 0.0
  %1066 = vmatprep.subr.mxu0 0.0
  %1067 = vmatpush1.msra.mxu0 0.0
  %1068 = vmatprep.subr.mxu0 0.0
  %1069 = vmatpush1.msra.mxu0 0.0
  %1070 = vmatprep.mubr.f32.mxu0 0.0
  %1071 = vmatmul.mubr.f32.gmra.mrb[0].mxu0 %v907
  %v1072 = vpop.f32.mrb[0].mxu0
  %v1073 = vadd.f32 0.0, %v1072
  %v1074 = vpop.f32.mrb[0].mxu0
  %1075 = vmatprep.mubr.f32.mxu0 0.0
  %1076 = vmatmul.mubr.f32.gmra.mrb[0].mxu0 %v910
  %v1077 = vpop.f32.mrb[0].mxu0
  %v1078 = vadd.f32 0.0, %v1077
  %v1079 = vpop.f32.mrb[0].mxu0
  %1080 = vmatprep.mubr.f32.mxu0 0.0
  %1081 = vmatmul.mubr.f32.gmra.mrb[0].mxu0 %v913
  %v1082 = vpop.f32.mrb[0].mxu0
  %v1083 = vadd.f32 0.0, %v1082
  %v1084 = vpop.f32.mrb[0].mxu0
  %1085 = vmatprep.mubr.f32.mxu0 0.0
  %1086 = vmatmul.mubr.f32.gmra.mrb[0].mxu0 %v916
  %v1087 = vpop.f32.mrb[0].mxu0
  %v1088 = vadd.f32 0.0, %v1087
  %v1089 = vpop.f32.mrb[0].mxu0
  %1090 = vmatprep.mubr.f32.mxu0 0.0
  %1091 = vmatmul.mubr.f32.gmra.mrb[0].mxu0 %v919
  %v1092 = vpop.f32.mrb[0].mxu0
  %v1093 = vadd.f32 0.0, %v1092
  %v1094 = vpop.f32.mrb[0].mxu0
  %1095 = vmatprep.mubr.f32.mxu0 0.0
  %1096 = vmatmul.mubr.f32.gmra.mrb[0].mxu0 %v922
  %v1097 = vpop.f32.mrb[0].mxu0
  %v1098 = vadd.f32 0.0, %v1097
  %v1099 = vpop.f32.mrb[0].mxu0
  %1100 = vmatprep.mubr.f32.mxu0 0.0
  %1101 = vmatmul.mubr.f32.gmra.mrb[0].mxu0 %v925
  %v1102 = vpop.f32.mrb[0].mxu0
  %v1103 = vadd.f32 0.0, %v1102
  %v1104 = vpop.f32.mrb[0].mxu0
  %1105 = vmatprep.mubr.f32.mxu0 0.0
  %1106 = vmatmul.mubr.f32.gmra.mrb[0].mxu0 %v928
  %v1107 = vpop.f32.mrb[0].mxu0
  %v1108 = vadd.f32 0.0, %v1107
  %v1109 = vpop.f32.mrb[0].mxu0
  %1110 = vmatprep.mubr.f32.mxu0 0.0
  %1111 = vmatmul.mubr.f32.gmra.mrb[0].mxu0 %v931
  %v1112 = vpop.f32.mrb[0].mxu0
  %v1113 = vadd.f32 0.0, %v1112
  %v1114 = vpop.f32.mrb[0].mxu0
  %1115 = vmatprep.mubr.f32.mxu0 0.0
  %1116 = vmatmul.mubr.f32.gmra.mrb[0].mxu0 %v934
  %v1117 = vpop.f32.mrb[0].mxu0
  %v1118 = vadd.f32 0.0, %v1117
  %v1119 = vpop.f32.mrb[0].mxu0
  %1120 = vmatprep.mubr.f32.mxu0 0.0
  %1121 = vmatmul.mubr.f32.gmra.mrb[0].mxu0 %v937
  %v1122 = vpop.f32.mrb[0].mxu0
  %v1123 = vadd.f32 0.0, %v1122
  %v1124 = vpop.f32.mrb[0].mxu0
  %1125 = vmatprep.mubr.f32.mxu0 0.0
  %1126 = vmatmul.mubr.f32.gmra.mrb[0].mxu0 %v940
  %v1127 = vpop.f32.mrb[0].mxu0
  %v1128 = vadd.f32 0.0, %v1127
  %v1129 = vpop.f32.mrb[0].mxu0
  %1130 = vmatprep.mubr.f32.mxu0 0.0
  %1131 = vmatmul.mubr.f32.gmra.mrb[0].mxu0 %v943
  %v1132 = vpop.f32.mrb[0].mxu0
  %v1133 = vadd.f32 0.0, %v1132
  %v1134 = vpop.f32.mrb[0].mxu0
  %1135 = vmatprep.mubr.f32.mxu0 0.0
  %1136 = vmatmul.mubr.f32.gmra.mrb[0].mxu0 %v946
  %v1137 = vpop.f32.mrb[0].mxu0
  %v1138 = vadd.f32 0.0, %v1137
  %v1139 = vpop.f32.mrb[0].mxu0
  %1140 = vmatprep.mubr.f32.mxu0 0.0
  %1141 = vmatmul.mubr.f32.gmra.mrb[0].mxu0 %v949
  %v1142 = vpop.f32.mrb[0].mxu0
  %v1143 = vadd.f32 0.0, %v1142
  %v1144 = vpop.f32.mrb[0].mxu0
  %1145 = vmatprep.mubr.f32.mxu0 0.0
  %1146 = vmatmul.mubr.f32.gmra.mrb[0].mxu0 %v952
  %v1147 = vpop.f32.mrb[0].mxu0
  %v1148 = vadd.f32 0.0, %v1147
  %v1149 = vpop.f32.mrb[0].mxu0
  %1150 = vmatprep.mubr.f32.mxu0 0.0
  %1151 = vmatmul.mubr.f32.gmra.mrb[0].mxu0 %v955
  %v1152 = vpop.f32.mrb[0].mxu0
  %v1153 = vadd.f32 0.0, %v1152
  %v1154 = vpop.f32.mrb[0].mxu0
  %1155 = vmatprep.mubr.f32.mxu0 0.0
  %1156 = vmatmul.mubr.f32.gmra.mrb[0].mxu0 %v958
  %v1157 = vpop.f32.mrb[0].mxu0
  %v1158 = vadd.f32 0.0, %v1157
  %v1159 = vpop.f32.mrb[0].mxu0
  %1160 = vmatprep.mubr.f32.mxu0 0.0
  %1161 = vmatmul.mubr.f32.gmra.mrb[0].mxu0 %v961
  %v1162 = vpop.f32.mrb[0].mxu0
  %v1163 = vadd.f32 0.0, %v1162
  %v1164 = vpop.f32.mrb[0].mxu0
  %1165 = vmatprep.mubr.f32.mxu0 0.0
  %1166 = vmatmul.mubr.f32.gmra.mrb[0].mxu0 %v964
  %v1167 = vpop.f32.mrb[0].mxu0
  %v1168 = vadd.f32 0.0, %v1167
  %v1169 = vpop.f32.mrb[0].mxu0
  %1170 = vmatprep.mubr.f32.mxu0 0.0
  %1171 = vmatmul.mubr.f32.gmra.mrb[0].mxu0 %v967
  %v1172 = vpop.f32.mrb[0].mxu0
  %v1173 = vadd.f32 0.0, %v1172
  %v1174 = vpop.f32.mrb[0].mxu0
  %1175 = vmatprep.mubr.f32.mxu0 0.0
  %1176 = vmatmul.mubr.f32.gmra.mrb[0].mxu0 %v970
  %v1177 = vpop.f32.mrb[0].mxu0
  %v1178 = vadd.f32 0.0, %v1177
  %v1179 = vpop.f32.mrb[0].mxu0
  %1180 = vmatprep.mubr.f32.mxu0 0.0
  %1181 = vmatmul.mubr.f32.gmra.mrb[0].mxu0 %v973
  %v1182 = vpop.f32.mrb[0].mxu0
  %v1183 = vadd.f32 0.0, %v1182
  %v1184 = vpop.f32.mrb[0].mxu0
  %1185 = vmatprep.mubr.f32.mxu0 0.0
  %1186 = vmatmul.mubr.f32.gmra.mrb[0].mxu0 %v976
  %v1187 = vpop.f32.mrb[0].mxu0
  %v1188 = vadd.f32 0.0, %v1187
  %v1189 = vpop.f32.mrb[0].mxu0
  %1190 = vmatprep.mubr.f32.mxu0 0.0
  %1191 = vmatmul.mubr.f32.gmra.mrb[0].mxu0 %v979
  %v1192 = vpop.f32.mrb[0].mxu0
  %v1193 = vadd.f32 0.0, %v1192
  %v1194 = vpop.f32.mrb[0].mxu0
  %1195 = vmatprep.mubr.f32.mxu0 0.0
  %1196 = vmatmul.mubr.f32.gmra.mrb[0].mxu0 %v982
  %v1197 = vpop.f32.mrb[0].mxu0
  %v1198 = vadd.f32 0.0, %v1197
  %v1199 = vpop.f32.mrb[0].mxu0
  %1200 = vmatprep.mubr.f32.mxu0 0.0
  %1201 = vmatmul.mubr.f32.gmra.mrb[0].mxu0 %v985
  %v1202 = vpop.f32.mrb[0].mxu0
  %v1203 = vadd.f32 0.0, %v1202
  %v1204 = vpop.f32.mrb[0].mxu0
  %1205 = vmatprep.mubr.f32.mxu0 0.0
  %1206 = vmatmul.mubr.f32.gmra.mrb[0].mxu0 %v988
  %v1207 = vpop.f32.mrb[0].mxu0
  %v1208 = vadd.f32 0.0, %v1207
  %v1209 = vpop.f32.mrb[0].mxu0
  %1210 = vmatprep.mubr.f32.mxu0 0.0
  %1211 = vmatmul.mubr.f32.gmra.mrb[0].mxu0 %v991
  %v1212 = vpop.f32.mrb[0].mxu0
  %v1213 = vadd.f32 0.0, %v1212
  %v1214 = vpop.f32.mrb[0].mxu0
  %1215 = vmatprep.mubr.f32.mxu0 0.0
  %1216 = vmatmul.mubr.f32.gmra.mrb[0].mxu0 %v994
  %v1217 = vpop.f32.mrb[0].mxu0
  %v1218 = vadd.f32 0.0, %v1217
  %v1219 = vpop.f32.mrb[0].mxu0
  %1220 = vmatprep.mubr.f32.mxu0 0.0
  %1221 = vmatmul.mubr.f32.gmra.mrb[0].mxu0 %v997
  %v1222 = vpop.f32.mrb[0].mxu0
  %v1223 = vadd.f32 0.0, %v1222
  %v1224 = vpop.f32.mrb[0].mxu0
  %1225 = vmatprep.mubr.f32.mxu0 0.0
  %1226 = vmatmul.mubr.f32.gmra.mrb[0].mxu0 %v1000
  %v1227 = vpop.f32.mrb[0].mxu0
  %v1228 = vadd.f32 0.0, %v1227
  %v1229 = vpop.f32.mrb[0].mxu0
  %1230 = vdwg.mxu0
  %v1231 = vmul.f32 %v373, %v1073
  %v1232 = vmul.f32 %v376, %v1078
  %v1233 = vmul.f32 %v381, %v1083
  %v1234 = vmul.f32 %v384, %v1088
  %v1235 = vmul.f32 %v389, %v1093
  %v1236 = vmul.f32 %v392, %v1098
  %v1237 = vmul.f32 %v397, %v1103
  %v1238 = vmul.f32 %v400, %v1108
  %v1239 = vmul.f32 %v405, %v1113
  %v1240 = vmul.f32 %v408, %v1118
  %v1241 = vmul.f32 %v413, %v1123
  %v1242 = vmul.f32 %v416, %v1128
  %v1243 = vmul.f32 %v421, %v1133
  %v1244 = vmul.f32 %v424, %v1138
  %v1245 = vmul.f32 %v429, %v1143
  %v1246 = vmul.f32 %v432, %v1148
  %v1247 = vmul.f32 %v437, %v1153
  %v1248 = vmul.f32 %v440, %v1158
  %v1249 = vmul.f32 %v445, %v1163
  %v1250 = vmul.f32 %v448, %v1168
  %v1251 = vmul.f32 %v453, %v1173
  %v1252 = vmul.f32 %v456, %v1178
  %v1253 = vmul.f32 %v461, %v1183
  %v1254 = vmul.f32 %v464, %v1188
  %v1255 = vmul.f32 %v469, %v1193
  %v1256 = vmul.f32 %v472, %v1198
  %v1257 = vmul.f32 %v477, %v1203
  %v1258 = vmul.f32 %v480, %v1208
  %v1259 = vmul.f32 %v485, %v1213
  %v1260 = vmul.f32 %v488, %v1218
  %v1261 = vmul.f32 %v493, %v1223
  %v1262 = vmul.f32 %v496, %v1228
  %v1264 = vsel %vm1002, %v904, 0
  %1266 = vmatprep.subr.mxu0 0.0
  %1267 = vmatpush1.msra.mxu0 %v1264
  %1268 = vmatprep.subr.mxu0 0.0
  %1269 = vmatpush1.msra.mxu0 0.0
  %1270 = vmatprep.subr.mxu0 0.0
  %1271 = vmatpush1.msra.mxu0 0.0
  %1272 = vmatprep.subr.mxu0 0.0
  %1273 = vmatpush1.msra.mxu0 0.0
  %1274 = vmatprep.subr.mxu0 0.0
  %1275 = vmatpush1.msra.mxu0 0.0
  %1276 = vmatprep.subr.mxu0 0.0
  %1277 = vmatpush1.msra.mxu0 0.0
  %1278 = vmatprep.subr.mxu0 0.0
  %1279 = vmatpush1.msra.mxu0 0.0
  %1280 = vmatprep.subr.mxu0 0.0
  %1281 = vmatpush1.msra.mxu0 0.0
  %1282 = vmatprep.subr.mxu0 0.0
  %1283 = vmatpush1.msra.mxu0 0.0
  %1284 = vmatprep.subr.mxu0 0.0
  %1285 = vmatpush1.msra.mxu0 0.0
  %1286 = vmatprep.subr.mxu0 0.0
  %1287 = vmatpush1.msra.mxu0 0.0
  %1288 = vmatprep.subr.mxu0 0.0
  %1289 = vmatpush1.msra.mxu0 0.0
  %1290 = vmatprep.subr.mxu0 0.0
  %1291 = vmatpush1.msra.mxu0 0.0
  %1292 = vmatprep.subr.mxu0 0.0
  %1293 = vmatpush1.msra.mxu0 0.0
  %1294 = vmatprep.subr.mxu0 0.0
  %1295 = vmatpush1.msra.mxu0 0.0
  %1296 = vmatprep.subr.mxu0 0.0
  %1297 = vmatpush1.msra.mxu0 0.0
  %1298 = vmatprep.subr.mxu0 0.0
  %1299 = vmatpush1.msra.mxu0 0.0
  %1300 = vmatprep.subr.mxu0 0.0
  %1301 = vmatpush1.msra.mxu0 0.0
  %1302 = vmatprep.subr.mxu0 0.0
  %1303 = vmatpush1.msra.mxu0 0.0
  %1304 = vmatprep.subr.mxu0 0.0
  %1305 = vmatpush1.msra.mxu0 0.0
  %1306 = vmatprep.subr.mxu0 0.0
  %1307 = vmatpush1.msra.mxu0 0.0
  %1308 = vmatprep.subr.mxu0 0.0
  %1309 = vmatpush1.msra.mxu0 0.0
  %1310 = vmatprep.subr.mxu0 0.0
  %1311 = vmatpush1.msra.mxu0 0.0
  %1312 = vmatprep.subr.mxu0 0.0
  %1313 = vmatpush1.msra.mxu0 0.0
  %1314 = vmatprep.subr.mxu0 0.0
  %1315 = vmatpush1.msra.mxu0 0.0
  %1316 = vmatprep.subr.mxu0 0.0
  %1317 = vmatpush1.msra.mxu0 0.0
  %1318 = vmatprep.subr.mxu0 0.0
  %1319 = vmatpush1.msra.mxu0 0.0
  %1320 = vmatprep.subr.mxu0 0.0
  %1321 = vmatpush1.msra.mxu0 0.0
  %1322 = vmatprep.subr.mxu0 0.0
  %1323 = vmatpush1.msra.mxu0 0.0
  %1324 = vmatprep.subr.mxu0 0.0
  %1325 = vmatpush1.msra.mxu0 0.0
  %1326 = vmatprep.subr.mxu0 0.0
  %1327 = vmatpush1.msra.mxu0 0.0
  %1328 = vmatprep.subr.mxu0 0.0
  %1329 = vmatpush1.msra.mxu0 0.0
  %1330 = vmatprep.mubr.f32.mxu0 0.0
  %1331 = vmatmul.mubr.f32.gmra.mrb[0].mxu0 %v907
  %v1332 = vpop.f32.mrb[0].mxu0
  %v1333 = vadd.f32 0.0, %v1332
  %v1334 = vpop.f32.mrb[0].mxu0
  %1335 = vmatprep.mubr.f32.mxu0 0.0
  %1336 = vmatmul.mubr.f32.gmra.mrb[0].mxu0 %v910
  %v1337 = vpop.f32.mrb[0].mxu0
  %v1338 = vadd.f32 0.0, %v1337
  %v1339 = vpop.f32.mrb[0].mxu0
  %1340 = vmatprep.mubr.f32.mxu0 0.0
  %1341 = vmatmul.mubr.f32.gmra.mrb[0].mxu0 %v913
  %v1342 = vpop.f32.mrb[0].mxu0
  %v1343 = vadd.f32 0.0, %v1342
  %v1344 = vpop.f32.mrb[0].mxu0
  %1345 = vmatprep.mubr.f32.mxu0 0.0
  %1346 = vmatmul.mubr.f32.gmra.mrb[0].mxu0 %v916
  %v1347 = vpop.f32.mrb[0].mxu0
  %v1348 = vadd.f32 0.0, %v1347
  %v1349 = vpop.f32.mrb[0].mxu0
  %1350 = vmatprep.mubr.f32.mxu0 0.0
  %1351 = vmatmul.mubr.f32.gmra.mrb[0].mxu0 %v919
  %v1352 = vpop.f32.mrb[0].mxu0
  %v1353 = vadd.f32 0.0, %v1352
  %v1354 = vpop.f32.mrb[0].mxu0
  %1355 = vmatprep.mubr.f32.mxu0 0.0
  %1356 = vmatmul.mubr.f32.gmra.mrb[0].mxu0 %v922
  %v1357 = vpop.f32.mrb[0].mxu0
  %v1358 = vadd.f32 0.0, %v1357
  %v1359 = vpop.f32.mrb[0].mxu0
  %1360 = vmatprep.mubr.f32.mxu0 0.0
  %1361 = vmatmul.mubr.f32.gmra.mrb[0].mxu0 %v925
  %v1362 = vpop.f32.mrb[0].mxu0
  %v1363 = vadd.f32 0.0, %v1362
  %v1364 = vpop.f32.mrb[0].mxu0
  %1365 = vmatprep.mubr.f32.mxu0 0.0
  %1366 = vmatmul.mubr.f32.gmra.mrb[0].mxu0 %v928
  %v1367 = vpop.f32.mrb[0].mxu0
  %v1368 = vadd.f32 0.0, %v1367
  %v1369 = vpop.f32.mrb[0].mxu0
  %1370 = vmatprep.mubr.f32.mxu0 0.0
  %1371 = vmatmul.mubr.f32.gmra.mrb[0].mxu0 %v931
  %v1372 = vpop.f32.mrb[0].mxu0
  %v1373 = vadd.f32 0.0, %v1372
  %v1374 = vpop.f32.mrb[0].mxu0
  %1375 = vmatprep.mubr.f32.mxu0 0.0
  %1376 = vmatmul.mubr.f32.gmra.mrb[0].mxu0 %v934
  %v1377 = vpop.f32.mrb[0].mxu0
  %v1378 = vadd.f32 0.0, %v1377
  %v1379 = vpop.f32.mrb[0].mxu0
  %1380 = vmatprep.mubr.f32.mxu0 0.0
  %1381 = vmatmul.mubr.f32.gmra.mrb[0].mxu0 %v937
  %v1382 = vpop.f32.mrb[0].mxu0
  %v1383 = vadd.f32 0.0, %v1382
  %v1384 = vpop.f32.mrb[0].mxu0
  %1385 = vmatprep.mubr.f32.mxu0 0.0
  %1386 = vmatmul.mubr.f32.gmra.mrb[0].mxu0 %v940
  %v1387 = vpop.f32.mrb[0].mxu0
  %v1388 = vadd.f32 0.0, %v1387
  %v1389 = vpop.f32.mrb[0].mxu0
  %1390 = vmatprep.mubr.f32.mxu0 0.0
  %1391 = vmatmul.mubr.f32.gmra.mrb[0].mxu0 %v943
  %v1392 = vpop.f32.mrb[0].mxu0
  %v1393 = vadd.f32 0.0, %v1392
  %v1394 = vpop.f32.mrb[0].mxu0
  %1395 = vmatprep.mubr.f32.mxu0 0.0
  %1396 = vmatmul.mubr.f32.gmra.mrb[0].mxu0 %v946
  %v1397 = vpop.f32.mrb[0].mxu0
  %v1398 = vadd.f32 0.0, %v1397
  %v1399 = vpop.f32.mrb[0].mxu0
  %1400 = vmatprep.mubr.f32.mxu0 0.0
  %1401 = vmatmul.mubr.f32.gmra.mrb[0].mxu0 %v949
  %v1402 = vpop.f32.mrb[0].mxu0
  %v1403 = vadd.f32 0.0, %v1402
  %v1404 = vpop.f32.mrb[0].mxu0
  %1405 = vmatprep.mubr.f32.mxu0 0.0
  %1406 = vmatmul.mubr.f32.gmra.mrb[0].mxu0 %v952
  %v1407 = vpop.f32.mrb[0].mxu0
  %v1408 = vadd.f32 0.0, %v1407
  %v1409 = vpop.f32.mrb[0].mxu0
  %1410 = vmatprep.mubr.f32.mxu0 0.0
  %1411 = vmatmul.mubr.f32.gmra.mrb[0].mxu0 %v955
  %v1412 = vpop.f32.mrb[0].mxu0
  %v1413 = vadd.f32 0.0, %v1412
  %v1414 = vpop.f32.mrb[0].mxu0
  %1415 = vmatprep.mubr.f32.mxu0 0.0
  %1416 = vmatmul.mubr.f32.gmra.mrb[0].mxu0 %v958
  %v1417 = vpop.f32.mrb[0].mxu0
  %v1418 = vadd.f32 0.0, %v1417
  %v1419 = vpop.f32.mrb[0].mxu0
  %1420 = vmatprep.mubr.f32.mxu0 0.0
  %1421 = vmatmul.mubr.f32.gmra.mrb[0].mxu0 %v961
  %v1422 = vpop.f32.mrb[0].mxu0
  %v1423 = vadd.f32 0.0, %v1422
  %v1424 = vpop.f32.mrb[0].mxu0
  %1425 = vmatprep.mubr.f32.mxu0 0.0
  %1426 = vmatmul.mubr.f32.gmra.mrb[0].mxu0 %v964
  %v1427 = vpop.f32.mrb[0].mxu0
  %v1428 = vadd.f32 0.0, %v1427
  %v1429 = vpop.f32.mrb[0].mxu0
  %1430 = vmatprep.mubr.f32.mxu0 0.0
  %1431 = vmatmul.mubr.f32.gmra.mrb[0].mxu0 %v967
  %v1432 = vpop.f32.mrb[0].mxu0
  %v1433 = vadd.f32 0.0, %v1432
  %v1434 = vpop.f32.mrb[0].mxu0
  %1435 = vmatprep.mubr.f32.mxu0 0.0
  %1436 = vmatmul.mubr.f32.gmra.mrb[0].mxu0 %v970
  %v1437 = vpop.f32.mrb[0].mxu0
  %v1438 = vadd.f32 0.0, %v1437
  %v1439 = vpop.f32.mrb[0].mxu0
  %1440 = vmatprep.mubr.f32.mxu0 0.0
  %1441 = vmatmul.mubr.f32.gmra.mrb[0].mxu0 %v973
  %v1442 = vpop.f32.mrb[0].mxu0
  %v1443 = vadd.f32 0.0, %v1442
  %v1444 = vpop.f32.mrb[0].mxu0
  %1445 = vmatprep.mubr.f32.mxu0 0.0
  %1446 = vmatmul.mubr.f32.gmra.mrb[0].mxu0 %v976
  %v1447 = vpop.f32.mrb[0].mxu0
  %v1448 = vadd.f32 0.0, %v1447
  %v1449 = vpop.f32.mrb[0].mxu0
  %1450 = vmatprep.mubr.f32.mxu0 0.0
  %1451 = vmatmul.mubr.f32.gmra.mrb[0].mxu0 %v979
  %v1452 = vpop.f32.mrb[0].mxu0
  %v1453 = vadd.f32 0.0, %v1452
  %v1454 = vpop.f32.mrb[0].mxu0
  %1455 = vmatprep.mubr.f32.mxu0 0.0
  %1456 = vmatmul.mubr.f32.gmra.mrb[0].mxu0 %v982
  %v1457 = vpop.f32.mrb[0].mxu0
  %v1458 = vadd.f32 0.0, %v1457
  %v1459 = vpop.f32.mrb[0].mxu0
  %1460 = vmatprep.mubr.f32.mxu0 0.0
  %1461 = vmatmul.mubr.f32.gmra.mrb[0].mxu0 %v985
  %v1462 = vpop.f32.mrb[0].mxu0
  %v1463 = vadd.f32 0.0, %v1462
  %v1464 = vpop.f32.mrb[0].mxu0
  %1465 = vmatprep.mubr.f32.mxu0 0.0
  %1466 = vmatmul.mubr.f32.gmra.mrb[0].mxu0 %v988
  %v1467 = vpop.f32.mrb[0].mxu0
  %v1468 = vadd.f32 0.0, %v1467
  %v1469 = vpop.f32.mrb[0].mxu0
  %1470 = vmatprep.mubr.f32.mxu0 0.0
  %1471 = vmatmul.mubr.f32.gmra.mrb[0].mxu0 %v991
  %v1472 = vpop.f32.mrb[0].mxu0
  %v1473 = vadd.f32 0.0, %v1472
  %v1474 = vpop.f32.mrb[0].mxu0
  %1475 = vmatprep.mubr.f32.mxu0 0.0
  %1476 = vmatmul.mubr.f32.gmra.mrb[0].mxu0 %v994
  %v1477 = vpop.f32.mrb[0].mxu0
  %v1478 = vadd.f32 0.0, %v1477
  %v1479 = vpop.f32.mrb[0].mxu0
  %1480 = vmatprep.mubr.f32.mxu0 0.0
  %1481 = vmatmul.mubr.f32.gmra.mrb[0].mxu0 %v997
  %v1482 = vpop.f32.mrb[0].mxu0
  %v1483 = vadd.f32 0.0, %v1482
  %v1484 = vpop.f32.mrb[0].mxu0
  %1485 = vmatprep.mubr.f32.mxu0 0.0
  %1486 = vmatmul.mubr.f32.gmra.mrb[0].mxu0 %v1000
  %v1487 = vpop.f32.mrb[0].mxu0
  %v1488 = vadd.f32 0.0, %v1487
  %v1489 = vpop.f32.mrb[0].mxu0
  %1490 = vdwg.mxu0
  %v1491 = vadd.f32 %v1231, %v1333
  %v1492 = vadd.f32 %v1232, %v1338
  %v1493 = vadd.f32 %v1233, %v1343
  %v1494 = vadd.f32 %v1234, %v1348
  %v1495 = vadd.f32 %v1235, %v1353
  %v1496 = vadd.f32 %v1236, %v1358
  %v1497 = vadd.f32 %v1237, %v1363
  %v1498 = vadd.f32 %v1238, %v1368
  %v1499 = vadd.f32 %v1239, %v1373
  %v1500 = vadd.f32 %v1240, %v1378
  %v1501 = vadd.f32 %v1241, %v1383
  %v1502 = vadd.f32 %v1242, %v1388
  %v1503 = vadd.f32 %v1243, %v1393
  %v1504 = vadd.f32 %v1244, %v1398
  %v1505 = vadd.f32 %v1245, %v1403
  %v1506 = vadd.f32 %v1246, %v1408
  %v1507 = vadd.f32 %v1247, %v1413
  %v1508 = vadd.f32 %v1248, %v1418
  %v1509 = vadd.f32 %v1249, %v1423
  %v1510 = vadd.f32 %v1250, %v1428
  %v1511 = vadd.f32 %v1251, %v1433
  %v1512 = vadd.f32 %v1252, %v1438
  %v1513 = vadd.f32 %v1253, %v1443
  %v1514 = vadd.f32 %v1254, %v1448
  %v1515 = vadd.f32 %v1255, %v1453
  %v1516 = vadd.f32 %v1256, %v1458
  %v1517 = vadd.f32 %v1257, %v1463
  %v1518 = vadd.f32 %v1258, %v1468
  %v1519 = vadd.f32 %v1259, %v1473
  %v1520 = vadd.f32 %v1260, %v1478
  %v1521 = vadd.f32 %v1261, %v1483
  %v1522 = vadd.f32 %v1262, %v1488
  %v1523 = vmax.f32 %v1491, 0.0
  %v1524 = vmax.f32 %v1492, 0.0
  %v1525 = vmax.f32 %v1493, 0.0
  %v1526 = vmax.f32 %v1494, 0.0
  %v1527 = vmax.f32 %v1495, 0.0
  %v1528 = vmax.f32 %v1496, 0.0
  %v1529 = vmax.f32 %v1497, 0.0
  %v1530 = vmax.f32 %v1498, 0.0
  %v1531 = vmax.f32 %v1499, 0.0
  %v1532 = vmax.f32 %v1500, 0.0
  %v1533 = vmax.f32 %v1501, 0.0
  %v1534 = vmax.f32 %v1502, 0.0
  %v1535 = vmax.f32 %v1503, 0.0
  %v1536 = vmax.f32 %v1504, 0.0
  %v1537 = vmax.f32 %v1505, 0.0
  %v1538 = vmax.f32 %v1506, 0.0
  %v1539 = vmax.f32 %v1507, 0.0
  %v1540 = vmax.f32 %v1508, 0.0
  %v1541 = vmax.f32 %v1509, 0.0
  %v1542 = vmax.f32 %v1510, 0.0
  %v1543 = vmax.f32 %v1511, 0.0
  %v1544 = vmax.f32 %v1512, 0.0
  %v1545 = vmax.f32 %v1513, 0.0
  %v1546 = vmax.f32 %v1514, 0.0
  %v1547 = vmax.f32 %v1515, 0.0
  %v1548 = vmax.f32 %v1516, 0.0
  %v1549 = vmax.f32 %v1517, 0.0
  %v1550 = vmax.f32 %v1518, 0.0
  %v1551 = vmax.f32 %v1519, 0.0
  %v1552 = vmax.f32 %v1520, 0.0
  %v1553 = vmax.f32 %v1521, 0.0
  %v1554 = vmax.f32 %v1522, 0.0
  %1555 = vst [vmem:[%s4] sm:$0xff] %v1523
  %1556 = vst [vmem:[%s4 + $0x8] sm:$0xff] %v1524
  %1557 = vst [vmem:[%s4 + $0x10] sm:$0xff] %v1525
  %1558 = vst [vmem:[%s4 + $0x18] sm:$0xff] %v1526
  %1559 = vst [vmem:[%s4 + $0x20] sm:$0xff] %v1527
  %1560 = vst [vmem:[%s4 + $0x28] sm:$0xff] %v1528
  %1561 = vst [vmem:[%s4 + $0x30] sm:$0xff] %v1529
  %1562 = vst [vmem:[%s4 + $0x38] sm:$0xff] %v1530
  %1563 = vst [vmem:[%s4 + $0x40] sm:$0xff] %v1531
  %1564 = vst [vmem:[%s4 + $0x48] sm:$0xff] %v1532
  %1565 = vst [vmem:[%s4 + $0x50] sm:$0xff] %v1533
  %1566 = vst [vmem:[%s4 + $0x58] sm:$0xff] %v1534
  %1567 = vst [vmem:[%s4 + $0x60] sm:$0xff] %v1535
  %1568 = vst [vmem:[%s4 + $0x68] sm:$0xff] %v1536
  %1569 = vst [vmem:[%s4 + $0x70] sm:$0xff] %v1537
  %1570 = vst [vmem:[%s4 + $0x78] sm:$0xff] %v1538
  %1571 = vst [vmem:[%s4 + $0x80] sm:$0xff] %v1539
  %1572 = vst [vmem:[%s4 + $0x88] sm:$0xff] %v1540
  %1573 = vst [vmem:[%s4 + $0x90] sm:$0xff] %v1541
  %1574 = vst [vmem:[%s4 + $0x98] sm:$0xff] %v1542
  %1575 = vst [vmem:[%s4 + $0xa0] sm:$0xff] %v1543
  %1576 = vst [vmem:[%s4 + $0xa8] sm:$0xff] %v1544
  %1577 = vst [vmem:[%s4 + $0xb0] sm:$0xff] %v1545
  %1578 = vst [vmem:[%s4 + $0xb8] sm:$0xff] %v1546
  %1579 = vst [vmem:[%s4 + $0xc0] sm:$0xff] %v1547
  %1580 = vst [vmem:[%s4 + $0xc8] sm:$0xff] %v1548
  %1581 = vst [vmem:[%s4 + $0xd0] sm:$0xff] %v1549
  %1582 = vst [vmem:[%s4 + $0xd8] sm:$0xff] %v1550
  %1583 = vst [vmem:[%s4 + $0xe0] sm:$0xff] %v1551
  %1584 = vst [vmem:[%s4 + $0xe8] sm:$0xff] %v1552
  %1585 = vst [vmem:[%s4 + $0xf0] sm:$0xff] %v1553
  %1586 = vst [vmem:[%s4 + $0xf8] sm:$0xff] %v1554
  // Predicated region
  $region18: #{byol_forward.4} parent=0 // pred_check
    _
  $region19: #{byol_forward.4} parent=0 // pred_check_branch
    %1588 = sbr.rel (0) target = $region21
  $region20: #{byol_forward.4} parent=0 // pred_region
    _
  $region21: #{byol_forward.4} parent=0 // pred_fallthru
    _
  // Predicated region
  $region22: #{byol_forward.4} parent=0 // pred_check
    _
  $region23: #{byol_forward.4} parent=0 // pred_check_branch
    %1590 = sbr.rel (0) target = $region25
  $region24: #{byol_forward.4} parent=0 // pred_region
    _
  $region25: #{byol_forward.4} parent=0 // pred_fallthru
    _

// kernel: byol_forward.5
$region0: #{byol_forward.5}
  #allocation0 [shape = 'u32[]', space=smem, size = 0x4, offset = 0x4, fixed_abs, tag = 'smem constant byte address 0x4 - core index']
  #allocation1 [shape = 'u32[144,128]{1,0:T(1,128)}', space=vmem, size = 0x12000, scoped, tag = 'internal scratch']
  %s0 = inlined_call_operand.vmem [shape: f32[9,64,128], index: 0, kind: input, shape index: {}]
  %s1 = inlined_call_operand.vmem [shape: f32[4,128], index: 1, kind: output, shape index: {}]
  %s2 = sld [smem:[#allocation0]]
  $region14: #{byol_forward.5} parent=0
    _
  %s4 = ssub.s32 1, %s2
  %s5 = scalar_select 0, %s4, %s2
  // Predicated region
  $region2: #{byol_forward.5} parent=0 // pred_check
    _
  $region3: #{byol_forward.5} parent=0 // pred_check_branch
    %7 = sbr.rel (0) target = $region5
  $region4: #{byol_forward.5} parent=0 // pred_region
    _
  $region5: #{byol_forward.5} parent=0 // pred_fallthru
    _
  %v8 = vld [vmem:[%s0] sm:$0xff]
  %v9 = vld [vmem:[%s0 + $0x8] sm:$0xff]
  %v10 = vld [vmem:[%s0 + $0x10] sm:$0xff]
  %v11 = vld [vmem:[%s0 + $0x18] sm:$0xff]
  %v12 = vld [vmem:[%s0 + $0x20] sm:$0xff]
  %v13 = vld [vmem:[%s0 + $0x28] sm:$0xff]
  %v14 = vld [vmem:[%s0 + $0x30] sm:$0xff]
  %v15 = vld [vmem:[%s0 + $0x38] sm:$0xff]
  %s16 = scalar_lea.vmem %s0, 64
  %v17 = vld [vmem:[%s16] sm:$0xff]
  %v18 = vld [vmem:[%s16 + $0x8] sm:$0xff]
  %v19 = vld [vmem:[%s16 + $0x10] sm:$0xff]
  %v20 = vld [vmem:[%s16 + $0x18] sm:$0xff]
  %v21 = vld [vmem:[%s16 + $0x20] sm:$0xff]
  %v22 = vld [vmem:[%s16 + $0x28] sm:$0xff]
  %v23 = vld [vmem:[%s16 + $0x30] sm:$0xff]
  %v24 = vld [vmem:[%s16 + $0x38] sm:$0xff]
  %v25 = vmax.f32 %v8, %v17
  %v26 = vmax.f32 %v9, %v18
  %v27 = vmax.f32 %v10, %v19
  %v28 = vmax.f32 %v11, %v20
  %v29 = vmax.f32 %v12, %v21
  %v30 = vmax.f32 %v13, %v22
  %v31 = vmax.f32 %v14, %v23
  %v32 = vmax.f32 %v15, %v24
  %s33 = scalar_lea.vmem %s0, 128
  %v34 = vld [vmem:[%s33] sm:$0xff]
  %v35 = vld [vmem:[%s33 + $0x8] sm:$0xff]
  %v36 = vld [vmem:[%s33 + $0x10] sm:$0xff]
  %v37 = vld [vmem:[%s33 + $0x18] sm:$0xff]
  %v38 = vld [vmem:[%s33 + $0x20] sm:$0xff]
  %v39 = vld [vmem:[%s33 + $0x28] sm:$0xff]
  %v40 = vld [vmem:[%s33 + $0x30] sm:$0xff]
  %v41 = vld [vmem:[%s33 + $0x38] sm:$0xff]
  %v42 = vmax.f32 %v25, %v34
  %v43 = vmax.f32 %v26, %v35
  %v44 = vmax.f32 %v27, %v36
  %v45 = vmax.f32 %v28, %v37
  %v46 = vmax.f32 %v29, %v38
  %v47 = vmax.f32 %v30, %v39
  %v48 = vmax.f32 %v31, %v40
  %v49 = vmax.f32 %v32, %v41
  %s50 = scalar_lea.vmem %s0, 192
  %v51 = vld [vmem:[%s50] sm:$0xff]
  %v52 = vld [vmem:[%s50 + $0x8] sm:$0xff]
  %v53 = vld [vmem:[%s50 + $0x10] sm:$0xff]
  %v54 = vld [vmem:[%s50 + $0x18] sm:$0xff]
  %v55 = vld [vmem:[%s50 + $0x20] sm:$0xff]
  %v56 = vld [vmem:[%s50 + $0x28] sm:$0xff]
  %v57 = vld [vmem:[%s50 + $0x30] sm:$0xff]
  %v58 = vld [vmem:[%s50 + $0x38] sm:$0xff]
  %v59 = vmax.f32 %v42, %v51
  %v60 = vmax.f32 %v43, %v52
  %v61 = vmax.f32 %v44, %v53
  %v62 = vmax.f32 %v45, %v54
  %v63 = vmax.f32 %v46, %v55
  %v64 = vmax.f32 %v47, %v56
  %v65 = vmax.f32 %v48, %v57
  %v66 = vmax.f32 %v49, %v58
  %s67 = scalar_lea.vmem %s0, 256
  %v68 = vld [vmem:[%s67] sm:$0xff]
  %v69 = vld [vmem:[%s67 + $0x8] sm:$0xff]
  %v70 = vld [vmem:[%s67 + $0x10] sm:$0xff]
  %v71 = vld [vmem:[%s67 + $0x18] sm:$0xff]
  %v72 = vld [vmem:[%s67 + $0x20] sm:$0xff]
  %v73 = vld [vmem:[%s67 + $0x28] sm:$0xff]
  %v74 = vld [vmem:[%s67 + $0x30] sm:$0xff]
  %v75 = vld [vmem:[%s67 + $0x38] sm:$0xff]
  %v76 = vmax.f32 %v59, %v68
  %v77 = vmax.f32 %v60, %v69
  %v78 = vmax.f32 %v61, %v70
  %v79 = vmax.f32 %v62, %v71
  %v80 = vmax.f32 %v63, %v72
  %v81 = vmax.f32 %v64, %v73
  %v82 = vmax.f32 %v65, %v74
  %v83 = vmax.f32 %v66, %v75
  %s84 = scalar_lea.vmem %s0, 320
  %v85 = vld [vmem:[%s84] sm:$0xff]
  %v86 = vld [vmem:[%s84 + $0x8] sm:$0xff]
  %v87 = vld [vmem:[%s84 + $0x10] sm:$0xff]
  %v88 = vld [vmem:[%s84 + $0x18] sm:$0xff]
  %v89 = vld [vmem:[%s84 + $0x20] sm:$0xff]
  %v90 = vld [vmem:[%s84 + $0x28] sm:$0xff]
  %v91 = vld [vmem:[%s84 + $0x30] sm:$0xff]
  %v92 = vld [vmem:[%s84 + $0x38] sm:$0xff]
  %v93 = vmax.f32 %v76, %v85
  %v94 = vmax.f32 %v77, %v86
  %v95 = vmax.f32 %v78, %v87
  %v96 = vmax.f32 %v79, %v88
  %v97 = vmax.f32 %v80, %v89
  %v98 = vmax.f32 %v81, %v90
  %v99 = vmax.f32 %v82, %v91
  %v100 = vmax.f32 %v83, %v92
  %s101 = scalar_lea.vmem %s0, 384
  %v102 = vld [vmem:[%s101] sm:$0xff]
  %v103 = vld [vmem:[%s101 + $0x8] sm:$0xff]
  %v104 = vld [vmem:[%s101 + $0x10] sm:$0xff]
  %v105 = vld [vmem:[%s101 + $0x18] sm:$0xff]
  %v106 = vld [vmem:[%s101 + $0x20] sm:$0xff]
  %v107 = vld [vmem:[%s101 + $0x28] sm:$0xff]
  %v108 = vld [vmem:[%s101 + $0x30] sm:$0xff]
  %v109 = vld [vmem:[%s101 + $0x38] sm:$0xff]
  %v110 = vmax.f32 %v93, %v102
  %v111 = vmax.f32 %v94, %v103
  %v112 = vmax.f32 %v95, %v104
  %v113 = vmax.f32 %v96, %v105
  %v114 = vmax.f32 %v97, %v106
  %v115 = vmax.f32 %v98, %v107
  %v116 = vmax.f32 %v99, %v108
  %v117 = vmax.f32 %v100, %v109
  %s118 = scalar_lea.vmem %s0, 448
  %v119 = vld [vmem:[%s118] sm:$0xff]
  %v120 = vld [vmem:[%s118 + $0x8] sm:$0xff]
  %v121 = vld [vmem:[%s118 + $0x10] sm:$0xff]
  %v122 = vld [vmem:[%s118 + $0x18] sm:$0xff]
  %v123 = vld [vmem:[%s118 + $0x20] sm:$0xff]
  %v124 = vld [vmem:[%s118 + $0x28] sm:$0xff]
  %v125 = vld [vmem:[%s118 + $0x30] sm:$0xff]
  %v126 = vld [vmem:[%s118 + $0x38] sm:$0xff]
  %v127 = vmax.f32 %v110, %v119
  %v128 = vmax.f32 %v111, %v120
  %v129 = vmax.f32 %v112, %v121
  %v130 = vmax.f32 %v113, %v122
  %v131 = vmax.f32 %v114, %v123
  %v132 = vmax.f32 %v115, %v124
  %v133 = vmax.f32 %v116, %v125
  %v134 = vmax.f32 %v117, %v126
  %s135 = scalar_lea.vmem %s0, 512
  %v136 = vld [vmem:[%s135] sm:$0xff]
  %v137 = vld [vmem:[%s135 + $0x8] sm:$0xff]
  %v138 = vld [vmem:[%s135 + $0x10] sm:$0xff]
  %v139 = vld [vmem:[%s135 + $0x18] sm:$0xff]
  %v140 = vld [vmem:[%s135 + $0x20] sm:$0xff]
  %v141 = vld [vmem:[%s135 + $0x28] sm:$0xff]
  %v142 = vld [vmem:[%s135 + $0x30] sm:$0xff]
  %v143 = vld [vmem:[%s135 + $0x38] sm:$0xff]
  %v144 = vmax.f32 %v127, %v136
  %v145 = vmax.f32 %v128, %v137
  %v146 = vmax.f32 %v129, %v138
  %v147 = vmax.f32 %v130, %v139
  %v148 = vmax.f32 %v131, %v140
  %v149 = vmax.f32 %v132, %v141
  %v150 = vmax.f32 %v133, %v142
  %v151 = vmax.f32 %v134, %v143
  %v152 = vlaneseq
  %v153 = vand.u32 %v152, 127
  %v154 = vlaneseq
  %v155 = vshrl.u32 %v154, 7
  %v156 = vmul.u32 %v155, 16
  %vm157 = vcmp.ge.s32.totalorder %v153, %v156
  %v158 = vadd.s32 %v156, 16
  %vm159 = vcmp.lt.s32.totalorder %v153, %v158
  %vm160 = vmand %vm157, %vm159
  %v161 = vsel %vm160, 1, 0
  %v162 = vcvt.s32.f32 %v161
  %vm163 = vcmask 523264
  %v165 = vsel %vm163, %v162, 0
  %167 = vmatprep.subr.mxu0 0.0
  %168 = vmatpush1.msra.mxu0 %v144
  %169 = vmatprep.subr.mxu0 0.0
  %170 = vmatpush1.msra.mxu0 %v145
  %171 = vmatprep.subr.mxu0 0.0
  %172 = vmatpush1.msra.mxu0 %v146
  %173 = vmatprep.subr.mxu0 0.0
  %174 = vmatpush1.msra.mxu0 %v147
  %175 = vmatprep.subr.mxu0 0.0
  %176 = vmatpush1.msra.mxu0 %v148
  %177 = vmatprep.subr.mxu0 0.0
  %178 = vmatpush1.msra.mxu0 %v149
  %179 = vmatprep.subr.mxu0 0.0
  %180 = vmatpush1.msra.mxu0 %v150
  %181 = vmatprep.subr.mxu0 0.0
  %182 = vmatpush1.msra.mxu0 %v151
  %183 = vmatprep.subr.mxu0 0.0
  %184 = vmatpush1.msra.mxu0 0.0
  %185 = vmatprep.subr.mxu0 0.0
  %186 = vmatpush1.msra.mxu0 0.0
  %187 = vmatprep.subr.mxu0 0.0
  %188 = vmatpush1.msra.mxu0 0.0
  %189 = vmatprep.subr.mxu0 0.0
  %190 = vmatpush1.msra.mxu0 0.0
  %191 = vmatprep.subr.mxu0 0.0
  %192 = vmatpush1.msra.mxu0 0.0
  %193 = vmatprep.subr.mxu0 0.0
  %194 = vmatpush1.msra.mxu0 0.0
  %195 = vmatprep.subr.mxu0 0.0
  %196 = vmatpush1.msra.mxu0 0.0
  %197 = vmatprep.subr.mxu0 0.0
  %198 = vmatpush1.msra.mxu0 0.0
  %199 = vmatprep.subr.mxu0 0.0
  %200 = vmatpush1.msra.mxu0 0.0
  %201 = vmatprep.subr.mxu0 0.0
  %202 = vmatpush1.msra.mxu0 0.0
  %203 = vmatprep.subr.mxu0 0.0
  %204 = vmatpush1.msra.mxu0 0.0
  %205 = vmatprep.subr.mxu0 0.0
  %206 = vmatpush1.msra.mxu0 0.0
  %207 = vmatprep.subr.mxu0 0.0
  %208 = vmatpush1.msra.mxu0 0.0
  %209 = vmatprep.subr.mxu0 0.0
  %210 = vmatpush1.msra.mxu0 0.0
  %211 = vmatprep.subr.mxu0 0.0
  %212 = vmatpush1.msra.mxu0 0.0
  %213 = vmatprep.subr.mxu0 0.0
  %214 = vmatpush1.msra.mxu0 0.0
  %215 = vmatprep.subr.mxu0 0.0
  %216 = vmatpush1.msra.mxu0 0.0
  %217 = vmatprep.subr.mxu0 0.0
  %218 = vmatpush1.msra.mxu0 0.0
  %219 = vmatprep.subr.mxu0 0.0
  %220 = vmatpush1.msra.mxu0 0.0
  %221 = vmatprep.subr.mxu0 0.0
  %222 = vmatpush1.msra.mxu0 0.0
  %223 = vmatprep.subr.mxu0 0.0
  %224 = vmatpush1.msra.mxu0 0.0
  %225 = vmatprep.subr.mxu0 0.0
  %226 = vmatpush1.msra.mxu0 0.0
  %227 = vmatprep.subr.mxu0 0.0
  %228 = vmatpush1.msra.mxu0 0.0
  %229 = vmatprep.subr.mxu0 0.0
  %230 = vmatpush1.msra.mxu0 0.0
  %231 = vmatprep.mubr.f32.mxu0 0.0
  %232 = vmatmul.mubr.f32.gmra.mrb[0].mxu0 %v165
  %v233 = vpop.f32.mrb[0].mxu0
  %v234 = vadd.f32 0.0, %v233
  %v235 = vpop.f32.mrb[0].mxu0
  %236 = vdwg.mxu0
  %v237 = vmul.f32 %v234, 0.0625
  %238 = vst [vmem:[%s1] sm:$0xf] %v237
  // Predicated region
  $region6: #{byol_forward.5} parent=0 // pred_check
    _
  $region7: #{byol_forward.5} parent=0 // pred_check_branch
    %240 = sbr.rel (0) target = $region9
  $region8: #{byol_forward.5} parent=0 // pred_region
    _
  $region9: #{byol_forward.5} parent=0 // pred_fallthru
    _
  // Predicated region
  $region10: #{byol_forward.5} parent=0 // pred_check
    _
  $region11: #{byol_forward.5} parent=0 // pred_check_branch
    %242 = sbr.rel (0) target = $region13
  $region12: #{byol_forward.5} parent=0 // pred_region
    _
  $region13: #{byol_forward.5} parent=0 // pred_fallthru
    _

// kernel: byol_forward.6
$region0: #{byol_forward.6}
  #allocation0 [shape = 'u32[]', space=smem, size = 0x4, offset = 0x4, fixed_abs, tag = 'smem constant byte address 0x4 - core index']
  #allocation1 [shape = 'u32[144,128]{1,0:T(1,128)}', space=vmem, size = 0x12000, scoped, tag = 'internal scratch']
  %s0 = inlined_call_operand.vmem [shape: f32[4,128], index: 0, kind: input, shape index: {}]
  %s1 = inlined_call_operand.vmem [shape: f32[128,32], index: 1, kind: input, shape index: {}]
  %s2 = inlined_call_operand.vmem [shape: f32[1,32], index: 2, kind: input, shape index: {}, may-alias: {2,4,8,10}]
  %s3 = inlined_call_operand.vmem [shape: f32[1,32], index: 3, kind: input, shape index: {}, may-alias: {3,9}]
  %s4 = inlined_call_operand.vmem [shape: f32[1,32], index: 4, kind: input, shape index: {}, may-alias: {2,4,8,10}]
  %s5 = inlined_call_operand.vmem [shape: f32[32,16], index: 5, kind: input, shape index: {}]
  %s6 = inlined_call_operand.vmem [shape: f32[1,16], index: 6, kind: input, shape index: {}, may-alias: {6,12}]
  %s7 = inlined_call_operand.vmem [shape: f32[16,32], index: 7, kind: input, shape index: {}]
  %s8 = inlined_call_operand.vmem [shape: f32[1,32], index: 8, kind: input, shape index: {}, may-alias: {2,4,8,10}]
  %s9 = inlined_call_operand.vmem [shape: f32[1,32], index: 9, kind: input, shape index: {}, may-alias: {3,9}]
  %s10 = inlined_call_operand.vmem [shape: f32[1,32], index: 10, kind: input, shape index: {}, may-alias: {2,4,8,10}]
  %s11 = inlined_call_operand.vmem [shape: f32[32,16], index: 11, kind: input, shape index: {}]
  %s12 = inlined_call_operand.vmem [shape: f32[1,16], index: 12, kind: input, shape index: {}, may-alias: {6,12}]
  %s13 = inlined_call_operand.vmem [shape: f32[4,16], index: 13, kind: output, shape index: {}]
  %s14 = sld [smem:[#allocation0]]
  $region62: #{byol_forward.6} parent=0
    _
  %s16 = ssub.s32 1, %s14
  %s17 = scalar_select 0, %s16, %s14
  // Predicated region
  $region2: #{byol_forward.6} parent=0 // pred_check
    _
  $region3: #{byol_forward.6} parent=0 // pred_check_branch
    %19 = sbr.rel (0) target = $region5
  $region4: #{byol_forward.6} parent=0 // pred_region
    _
  $region5: #{byol_forward.6} parent=0 // pred_fallthru
    _
  // Predicated region
  $region6: #{byol_forward.6} parent=0 // pred_check
    _
  $region7: #{byol_forward.6} parent=0 // pred_check_branch
    %21 = sbr.rel (0) target = $region9
  $region8: #{byol_forward.6} parent=0 // pred_region
    _
  $region9: #{byol_forward.6} parent=0 // pred_fallthru
    _
  // Predicated region
  $region10: #{byol_forward.6} parent=0 // pred_check
    _
  $region11: #{byol_forward.6} parent=0 // pred_check_branch
    %23 = sbr.rel (0) target = $region13
  $region12: #{byol_forward.6} parent=0 // pred_region
    _
  $region13: #{byol_forward.6} parent=0 // pred_fallthru
    _
  // Predicated region
  $region14: #{byol_forward.6} parent=0 // pred_check
    _
  $region15: #{byol_forward.6} parent=0 // pred_check_branch
    %25 = sbr.rel (0) target = $region17
  $region16: #{byol_forward.6} parent=0 // pred_region
    _
  $region17: #{byol_forward.6} parent=0 // pred_fallthru
    _
  // Predicated region
  $region18: #{byol_forward.6} parent=0 // pred_check
    _
  $region19: #{byol_forward.6} parent=0 // pred_check_branch
    %27 = sbr.rel (0) target = $region21
  $region20: #{byol_forward.6} parent=0 // pred_region
    _
  $region21: #{byol_forward.6} parent=0 // pred_fallthru
    _
  // Predicated region
  $region22: #{byol_forward.6} parent=0 // pred_check
    _
  $region23: #{byol_forward.6} parent=0 // pred_check_branch
    %29 = sbr.rel (0) target = $region25
  $region24: #{byol_forward.6} parent=0 // pred_region
    _
  $region25: #{byol_forward.6} parent=0 // pred_fallthru
    _
  // Predicated region
  $region26: #{byol_forward.6} parent=0 // pred_check
    _
  $region27: #{byol_forward.6} parent=0 // pred_check_branch
    %31 = sbr.rel (0) target = $region29
  $region28: #{byol_forward.6} parent=0 // pred_region
    _
  $region29: #{byol_forward.6} parent=0 // pred_fallthru
    _
  // Predicated region
  $region30: #{byol_forward.6} parent=0 // pred_check
    _
  $region31: #{byol_forward.6} parent=0 // pred_check_branch
    %33 = sbr.rel (0) target = $region33
  $region32: #{byol_forward.6} parent=0 // pred_region
    _
  $region33: #{byol_forward.6} parent=0 // pred_fallthru
    _
  // Predicated region
  $region34: #{byol_forward.6} parent=0 // pred_check
    _
  $region35: #{byol_forward.6} parent=0 // pred_check_branch
    %35 = sbr.rel (0) target = $region37
  $region36: #{byol_forward.6} parent=0 // pred_region
    _
  $region37: #{byol_forward.6} parent=0 // pred_fallthru
    _
  // Predicated region
  $region38: #{byol_forward.6} parent=0 // pred_check
    _
  $region39: #{byol_forward.6} parent=0 // pred_check_branch
    %37 = sbr.rel (0) target = $region41
  $region40: #{byol_forward.6} parent=0 // pred_region
    _
  $region41: #{byol_forward.6} parent=0 // pred_fallthru
    _
  // Predicated region
  $region42: #{byol_forward.6} parent=0 // pred_check
    _
  $region43: #{byol_forward.6} parent=0 // pred_check_branch
    %39 = sbr.rel (0) target = $region45
  $region44: #{byol_forward.6} parent=0 // pred_region
    _
  $region45: #{byol_forward.6} parent=0 // pred_fallthru
    _
  // Predicated region
  $region46: #{byol_forward.6} parent=0 // pred_check
    _
  $region47: #{byol_forward.6} parent=0 // pred_check_branch
    %41 = sbr.rel (0) target = $region49
  $region48: #{byol_forward.6} parent=0 // pred_region
    _
  $region49: #{byol_forward.6} parent=0 // pred_fallthru
    _
  // Predicated region
  $region50: #{byol_forward.6} parent=0 // pred_check
    _
  $region51: #{byol_forward.6} parent=0 // pred_check_branch
    %43 = sbr.rel (0) target = $region53
  $region52: #{byol_forward.6} parent=0 // pred_region
    _
  $region53: #{byol_forward.6} parent=0 // pred_fallthru
    _
  %v44 = vld [vmem:[%s0] sm:$0xf]
  %v45 = vld [vmem:[%s1] sm:$0xff]
  %v46 = vld [vmem:[%s1 + $0x8] sm:$0xff]
  %v47 = vld [vmem:[%s1 + $0x10] sm:$0xff]
  %v48 = vld [vmem:[%s1 + $0x18] sm:$0xff]
  %v49 = vld [vmem:[%s1 + $0x20] sm:$0xff]
  %v50 = vld [vmem:[%s1 + $0x28] sm:$0xff]
  %v51 = vld [vmem:[%s1 + $0x30] sm:$0xff]
  %v52 = vld [vmem:[%s1 + $0x38] sm:$0xff]
  %v53 = vld [vmem:[%s1 + $0x40] sm:$0xff]
  %v54 = vld [vmem:[%s1 + $0x48] sm:$0xff]
  %v55 = vld [vmem:[%s1 + $0x50] sm:$0xff]
  %v56 = vld [vmem:[%s1 + $0x58] sm:$0xff]
  %v57 = vld [vmem:[%s1 + $0x60] sm:$0xff]
  %v58 = vld [vmem:[%s1 + $0x68] sm:$0xff]
  %v59 = vld [vmem:[%s1 + $0x70] sm:$0xff]
  %v60 = vld [vmem:[%s1 + $0x78] sm:$0xff]
  %v61 = vld [vmem:[%s2] sm:$0x1]
  %v62 = vld [vmem:[%s3] sm:$0x1]
  %v63 = vld [vmem:[%s4] sm:$0x1]
  %v64 = vld [vmem:[%s5] sm:$0xff]
  %v65 = vld [vmem:[%s5 + $0x8] sm:$0xff]
  %v66 = vld [vmem:[%s5 + $0x10] sm:$0xff]
  %v67 = vld [vmem:[%s5 + $0x18] sm:$0xff]
  %v68 = vld [vmem:[%s6] sm:$0x1]
  %v70 = vlaneseq
  %v71 = vshrl.u32 %v70, 7
  %v72 = vsub.s32 0, %v71
  %v73 = vrot.slane %v61, %v72
  %75 = vmatprep.subr.mxu0 0.0
  %76 = vmatpush1.msra.mxu0 %v45
  %77 = vmatprep.subr.mxu0 0.0
  %78 = vmatpush1.msra.mxu0 %v46
  %79 = vmatprep.subr.mxu0 0.0
  %80 = vmatpush1.msra.mxu0 %v47
  %81 = vmatprep.subr.mxu0 0.0
  %82 = vmatpush1.msra.mxu0 %v48
  %83 = vmatprep.subr.mxu0 0.0
  %84 = vmatpush1.msra.mxu0 %v49
  %85 = vmatprep.subr.mxu0 0.0
  %86 = vmatpush1.msra.mxu0 %v50
  %87 = vmatprep.subr.mxu0 0.0
  %88 = vmatpush1.msra.mxu0 %v51
  %89 = vmatprep.subr.mxu0 0.0
  %90 = vmatpush1.msra.mxu0 %v52
  %91 = vmatprep.subr.mxu0 0.0
  %92 = vmatpush1.msra.mxu0 %v53
  %93 = vmatprep.subr.mxu0 0.0
  %94 = vmatpush1.msra.mxu0 %v54
  %95 = vmatprep.subr.mxu0 0.0
  %96 = vmatpush1.msra.mxu0 %v55
  %97 = vmatprep.subr.mxu0 0.0
  %98 = vmatpush1.msra.mxu0 %v56
  %99 = vmatprep.subr.mxu0 0.0
  %100 = vmatpush1.msra.mxu0 %v57
  %101 = vmatprep.subr.mxu0 0.0
  %102 = vmatpush1.msra.mxu0 %v58
  %103 = vmatprep.subr.mxu0 0.0
  %104 = vmatpush1.msra.mxu0 %v59
  %105 = vmatprep.subr.mxu0 0.0
  %106 = vmatpush1.msra.mxu0 %v60
  %107 = vmatprep.subr.mxu0 0.0
  %108 = vmatpush1.msra.mxu0 0.0
  %109 = vmatprep.subr.mxu0 0.0
  %110 = vmatpush1.msra.mxu0 0.0
  %111 = vmatprep.subr.mxu0 0.0
  %112 = vmatpush1.msra.mxu0 0.0
  %113 = vmatprep.subr.mxu0 0.0
  %114 = vmatpush1.msra.mxu0 0.0
  %115 = vmatprep.subr.mxu0 0.0
  %116 = vmatpush1.msra.mxu0 0.0
  %117 = vmatprep.subr.mxu0 0.0
  %118 = vmatpush1.msra.mxu0 0.0
  %119 = vmatprep.subr.mxu0 0.0
  %120 = vmatpush1.msra.mxu0 0.0
  %121 = vmatprep.subr.mxu0 0.0
  %122 = vmatpush1.msra.mxu0 0.0
  %123 = vmatprep.subr.mxu0 0.0
  %124 = vmatpush1.msra.mxu0 0.0
  %125 = vmatprep.subr.mxu0 0.0
  %126 = vmatpush1.msra.mxu0 0.0
  %127 = vmatprep.subr.mxu0 0.0
  %128 = vmatpush1.msra.mxu0 0.0
  %129 = vmatprep.subr.mxu0 0.0
  %130 = vmatpush1.msra.mxu0 0.0
  %131 = vmatprep.subr.mxu0 0.0
  %132 = vmatpush1.msra.mxu0 0.0
  %133 = vmatprep.subr.mxu0 0.0
  %134 = vmatpush1.msra.mxu0 0.0
  %135 = vmatprep.subr.mxu0 0.0
  %136 = vmatpush1.msra.mxu0 0.0
  %137 = vmatprep.subr.mxu0 0.0
  %138 = vmatpush1.msra.mxu0 0.0
  %139 = vmatprep.mubr.f32.mxu0 0.0
  %140 = vmatmul.mubr.f32.gmra.mrb[0].mxu0 %v44
  %v141 = vpop.f32.mrb[0].mxu0
  %v142 = vadd.f32 %v73, %v141
  %v143 = vpop.f32.mrb[0].mxu0
  %144 = vdwg.mxu0
  %v145 = vlaneseq
  %v146 = vand.u32 %v145, 127
  %v147 = vlaneseq
  %v148 = vshrl.u32 %v147, 7
  %v149 = vmul.u32 %v148, 2
  %vm150 = vcmp.ge.s32.totalorder %v146, %v149
  %v151 = vadd.s32 %v149, 2
  %vm152 = vcmp.lt.s32.totalorder %v146, %v151
  %vm153 = vmand %vm150, %vm152
  %v154 = vsel %vm153, 1, 0
  %v155 = vcvt.s32.f32 %v154
  %v156 = vmul.u32 %v146, 2
  %vm157 = vcmp.ge.s32.totalorder %v148, %v156
  %v158 = vadd.s32 %v156, 2
  %vm159 = vcmp.lt.s32.totalorder %v148, %v158
  %vm160 = vmand %vm157, %vm159
  %v161 = vsel %vm160, 1, 0
  %v162 = vcvt.s32.f32 %v161
  %vm163 = vcmask 31744
  %v165 = vsel %vm163, %v155, 0
  %vm167 = vcmask 1043456
  %v169 = vsel %vm167, %v142, 0
  %171 = vmatprep.subr.mxu0 0.0
  %172 = vmatpush1.msra.mxu0 %v169
  %173 = vmatprep.subr.mxu0 0.0
  %174 = vmatpush1.msra.mxu0 0.0
  %175 = vmatprep.subr.mxu0 0.0
  %176 = vmatpush1.msra.mxu0 0.0
  %177 = vmatprep.subr.mxu0 0.0
  %178 = vmatpush1.msra.mxu0 0.0
  %179 = vmatprep.subr.mxu0 0.0
  %180 = vmatpush1.msra.mxu0 0.0
  %181 = vmatprep.subr.mxu0 0.0
  %182 = vmatpush1.msra.mxu0 0.0
  %183 = vmatprep.subr.mxu0 0.0
  %184 = vmatpush1.msra.mxu0 0.0
  %185 = vmatprep.subr.mxu0 0.0
  %186 = vmatpush1.msra.mxu0 0.0
  %187 = vmatprep.subr.mxu0 0.0
  %188 = vmatpush1.msra.mxu0 0.0
  %189 = vmatprep.subr.mxu0 0.0
  %190 = vmatpush1.msra.mxu0 0.0
  %191 = vmatprep.subr.mxu0 0.0
  %192 = vmatpush1.msra.mxu0 0.0
  %193 = vmatprep.subr.mxu0 0.0
  %194 = vmatpush1.msra.mxu0 0.0
  %195 = vmatprep.subr.mxu0 0.0
  %196 = vmatpush1.msra.mxu0 0.0
  %197 = vmatprep.subr.mxu0 0.0
  %198 = vmatpush1.msra.mxu0 0.0
  %199 = vmatprep.subr.mxu0 0.0
  %200 = vmatpush1.msra.mxu0 0.0
  %201 = vmatprep.subr.mxu0 0.0
  %202 = vmatpush1.msra.mxu0 0.0
  %203 = vmatprep.subr.mxu0 0.0
  %204 = vmatpush1.msra.mxu0 0.0
  %205 = vmatprep.subr.mxu0 0.0
  %206 = vmatpush1.msra.mxu0 0.0
  %207 = vmatprep.subr.mxu0 0.0
  %208 = vmatpush1.msra.mxu0 0.0
  %209 = vmatprep.subr.mxu0 0.0
  %210 = vmatpush1.msra.mxu0 0.0
  %211 = vmatprep.subr.mxu0 0.0
  %212 = vmatpush1.msra.mxu0 0.0
  %213 = vmatprep.subr.mxu0 0.0
  %214 = vmatpush1.msra.mxu0 0.0
  %215 = vmatprep.subr.mxu0 0.0
  %216 = vmatpush1.msra.mxu0 0.0
  %217 = vmatprep.subr.mxu0 0.0
  %218 = vmatpush1.msra.mxu0 0.0
  %219 = vmatprep.subr.mxu0 0.0
  %220 = vmatpush1.msra.mxu0 0.0
  %221 = vmatprep.subr.mxu0 0.0
  %222 = vmatpush1.msra.mxu0 0.0
  %223 = vmatprep.subr.mxu0 0.0
  %224 = vmatpush1.msra.mxu0 0.0
  %225 = vmatprep.subr.mxu0 0.0
  %226 = vmatpush1.msra.mxu0 0.0
  %227 = vmatprep.subr.mxu0 0.0
  %228 = vmatpush1.msra.mxu0 0.0
  %229 = vmatprep.subr.mxu0 0.0
  %230 = vmatpush1.msra.mxu0 0.0
  %231 = vmatprep.subr.mxu0 0.0
  %232 = vmatpush1.msra.mxu0 0.0
  %233 = vmatprep.subr.mxu0 0.0
  %234 = vmatpush1.msra.mxu0 0.0
  %235 = vmatprep.mubr.f32.mxu0 0.0
  %236 = vmatmul.mubr.f32.gmra.mrb[0].mxu0 %v165
  %v237 = vpop.f32.mrb[0].mxu0
  %v238 = vadd.f32 0.0, %v237
  %v239 = vpop.f32.mrb[0].mxu0
  %240 = vdwg.mxu0
  %v241 = vmul.f32 %v238, 0.5
  %v242 = vmul.f32 %v142, %v142
  %v244 = vsel %vm167, %v242, 0
  %246 = vmatprep.subr.mxu0 0.0
  %247 = vmatpush1.msra.mxu0 %v244
  %248 = vmatprep.subr.mxu0 0.0
  %249 = vmatpush1.msra.mxu0 0.0
  %250 = vmatprep.subr.mxu0 0.0
  %251 = vmatpush1.msra.mxu0 0.0
  %252 = vmatprep.subr.mxu0 0.0
  %253 = vmatpush1.msra.mxu0 0.0
  %254 = vmatprep.subr.mxu0 0.0
  %255 = vmatpush1.msra.mxu0 0.0
  %256 = vmatprep.subr.mxu0 0.0
  %257 = vmatpush1.msra.mxu0 0.0
  %258 = vmatprep.subr.mxu0 0.0
  %259 = vmatpush1.msra.mxu0 0.0
  %260 = vmatprep.subr.mxu0 0.0
  %261 = vmatpush1.msra.mxu0 0.0
  %262 = vmatprep.subr.mxu0 0.0
  %263 = vmatpush1.msra.mxu0 0.0
  %264 = vmatprep.subr.mxu0 0.0
  %265 = vmatpush1.msra.mxu0 0.0
  %266 = vmatprep.subr.mxu0 0.0
  %267 = vmatpush1.msra.mxu0 0.0
  %268 = vmatprep.subr.mxu0 0.0
  %269 = vmatpush1.msra.mxu0 0.0
  %270 = vmatprep.subr.mxu0 0.0
  %271 = vmatpush1.msra.mxu0 0.0
  %272 = vmatprep.subr.mxu0 0.0
  %273 = vmatpush1.msra.mxu0 0.0
  %274 = vmatprep.subr.mxu0 0.0
  %275 = vmatpush1.msra.mxu0 0.0
  %276 = vmatprep.subr.mxu0 0.0
  %277 = vmatpush1.msra.mxu0 0.0
  %278 = vmatprep.subr.mxu0 0.0
  %279 = vmatpush1.msra.mxu0 0.0
  %280 = vmatprep.subr.mxu0 0.0
  %281 = vmatpush1.msra.mxu0 0.0
  %282 = vmatprep.subr.mxu0 0.0
  %283 = vmatpush1.msra.mxu0 0.0
  %284 = vmatprep.subr.mxu0 0.0
  %285 = vmatpush1.msra.mxu0 0.0
  %286 = vmatprep.subr.mxu0 0.0
  %287 = vmatpush1.msra.mxu0 0.0
  %288 = vmatprep.subr.mxu0 0.0
  %289 = vmatpush1.msra.mxu0 0.0
  %290 = vmatprep.subr.mxu0 0.0
  %291 = vmatpush1.msra.mxu0 0.0
  %292 = vmatprep.subr.mxu0 0.0
  %293 = vmatpush1.msra.mxu0 0.0
  %294 = vmatprep.subr.mxu0 0.0
  %295 = vmatpush1.msra.mxu0 0.0
  %296 = vmatprep.subr.mxu0 0.0
  %297 = vmatpush1.msra.mxu0 0.0
  %298 = vmatprep.subr.mxu0 0.0
  %299 = vmatpush1.msra.mxu0 0.0
  %300 = vmatprep.subr.mxu0 0.0
  %301 = vmatpush1.msra.mxu0 0.0
  %302 = vmatprep.subr.mxu0 0.0
  %303 = vmatpush1.msra.mxu0 0.0
  %304 = vmatprep.subr.mxu0 0.0
  %305 = vmatpush1.msra.mxu0 0.0
  %306 = vmatprep.subr.mxu0 0.0
  %307 = vmatpush1.msra.mxu0 0.0
  %308 = vmatprep.subr.mxu0 0.0
  %309 = vmatpush1.msra.mxu0 0.0
  %310 = vmatprep.mubr.f32.mxu0 0.0
  %311 = vmatmul.mubr.f32.gmra.mrb[0].mxu0 %v165
  %v312 = vpop.f32.mrb[0].mxu0
  %v313 = vadd.f32 0.0, %v312
  %v314 = vpop.f32.mrb[0].mxu0
  %315 = vdwg.mxu0
  %v316 = vmul.f32 %v313, 0.5
  %v317 = vmul.f32 %v241, %v241
  %v318 = vsub.f32 %v316, %v317
  %v319 = vmax.f32 %v318, 0.0
  %v320 = vadd.f32 %v319, 1e-05
  %v321 = vrsqrt.pop %v320
  %v323 = vlaneseq
  %v324 = vshrl.u32 %v323, 7
  %v325 = vsub.s32 0, %v324
  %v326 = vrot.slane %v62, %v325
  %v328 = vmul.f32 %v326, %v321
  %v329 = vmul.f32 %v241, %v328
  %v331 = vlaneseq
  %v332 = vshrl.u32 %v331, 7
  %v333 = vsub.s32 0, %v332
  %v334 = vrot.slane %v63, %v333
  %v336 = vsub.f32 %v334, %v329
  %vm337 = vcmask 15360
  %v339 = vsel %vm337, %v162, 0
  %vm341 = vcmask 1041408
  %v343 = vsel %vm341, %v328, 0
  %345 = vmatprep.subr.mxu0 0.0
  %346 = vmatpush1.msra.mxu0 %v343
  %347 = vmatprep.subr.mxu0 0.0
  %348 = vmatpush1.msra.mxu0 0.0
  %349 = vmatprep.subr.mxu0 0.0
  %350 = vmatpush1.msra.mxu0 0.0
  %351 = vmatprep.subr.mxu0 0.0
  %352 = vmatpush1.msra.mxu0 0.0
  %353 = vmatprep.subr.mxu0 0.0
  %354 = vmatpush1.msra.mxu0 0.0
  %355 = vmatprep.subr.mxu0 0.0
  %356 = vmatpush1.msra.mxu0 0.0
  %357 = vmatprep.subr.mxu0 0.0
  %358 = vmatpush1.msra.mxu0 0.0
  %359 = vmatprep.subr.mxu0 0.0
  %360 = vmatpush1.msra.mxu0 0.0
  %361 = vmatprep.subr.mxu0 0.0
  %362 = vmatpush1.msra.mxu0 0.0
  %363 = vmatprep.subr.mxu0 0.0
  %364 = vmatpush1.msra.mxu0 0.0
  %365 = vmatprep.subr.mxu0 0.0
  %366 = vmatpush1.msra.mxu0 0.0
  %367 = vmatprep.subr.mxu0 0.0
  %368 = vmatpush1.msra.mxu0 0.0
  %369 = vmatprep.subr.mxu0 0.0
  %370 = vmatpush1.msra.mxu0 0.0
  %371 = vmatprep.subr.mxu0 0.0
  %372 = vmatpush1.msra.mxu0 0.0
  %373 = vmatprep.subr.mxu0 0.0
  %374 = vmatpush1.msra.mxu0 0.0
  %375 = vmatprep.subr.mxu0 0.0
  %376 = vmatpush1.msra.mxu0 0.0
  %377 = vmatprep.subr.mxu0 0.0
  %378 = vmatpush1.msra.mxu0 0.0
  %379 = vmatprep.subr.mxu0 0.0
  %380 = vmatpush1.msra.mxu0 0.0
  %381 = vmatprep.subr.mxu0 0.0
  %382 = vmatpush1.msra.mxu0 0.0
  %383 = vmatprep.subr.mxu0 0.0
  %384 = vmatpush1.msra.mxu0 0.0
  %385 = vmatprep.subr.mxu0 0.0
  %386 = vmatpush1.msra.mxu0 0.0
  %387 = vmatprep.subr.mxu0 0.0
  %388 = vmatpush1.msra.mxu0 0.0
  %389 = vmatprep.subr.mxu0 0.0
  %390 = vmatpush1.msra.mxu0 0.0
  %391 = vmatprep.subr.mxu0 0.0
  %392 = vmatpush1.msra.mxu0 0.0
  %393 = vmatprep.subr.mxu0 0.0
  %394 = vmatpush1.msra.mxu0 0.0
  %395 = vmatprep.subr.mxu0 0.0
  %396 = vmatpush1.msra.mxu0 0.0
  %397 = vmatprep.subr.mxu0 0.0
  %398 = vmatpush1.msra.mxu0 0.0
  %399 = vmatprep.subr.mxu0 0.0
  %400 = vmatpush1.msra.mxu0 0.0
  %401 = vmatprep.subr.mxu0 0.0
  %402 = vmatpush1.msra.mxu0 0.0
  %403 = vmatprep.subr.mxu0 0.0
  %404 = vmatpush1.msra.mxu0 0.0
  %405 = vmatprep.subr.mxu0 0.0
  %406 = vmatpush1.msra.mxu0 0.0
  %407 = vmatprep.subr.mxu0 0.0
  %408 = vmatpush1.msra.mxu0 0.0
  %409 = vmatprep.mubr.f32.mxu0 0.0
  %410 = vmatmul.mubr.f32.gmra.mrb[0].mxu0 %v339
  %v411 = vpop.f32.mrb[0].mxu0
  %v412 = vadd.f32 0.0, %v411
  %v413 = vpop.f32.mrb[0].mxu0
  %414 = vdwg.mxu0
  %v415 = vmul.f32 %v142, %v412
  %v417 = vsel %vm341, %v336, 0
  %419 = vmatprep.subr.mxu0 0.0
  %420 = vmatpush1.msra.mxu0 %v417
  %421 = vmatprep.subr.mxu0 0.0
  %422 = vmatpush1.msra.mxu0 0.0
  %423 = vmatprep.subr.mxu0 0.0
  %424 = vmatpush1.msra.mxu0 0.0
  %425 = vmatprep.subr.mxu0 0.0
  %426 = vmatpush1.msra.mxu0 0.0
  %427 = vmatprep.subr.mxu0 0.0
  %428 = vmatpush1.msra.mxu0 0.0
  %429 = vmatprep.subr.mxu0 0.0
  %430 = vmatpush1.msra.mxu0 0.0
  %431 = vmatprep.subr.mxu0 0.0
  %432 = vmatpush1.msra.mxu0 0.0
  %433 = vmatprep.subr.mxu0 0.0
  %434 = vmatpush1.msra.mxu0 0.0
  %435 = vmatprep.subr.mxu0 0.0
  %436 = vmatpush1.msra.mxu0 0.0
  %437 = vmatprep.subr.mxu0 0.0
  %438 = vmatpush1.msra.mxu0 0.0
  %439 = vmatprep.subr.mxu0 0.0
  %440 = vmatpush1.msra.mxu0 0.0
  %441 = vmatprep.subr.mxu0 0.0
  %442 = vmatpush1.msra.mxu0 0.0
  %443 = vmatprep.subr.mxu0 0.0
  %444 = vmatpush1.msra.mxu0 0.0
  %445 = vmatprep.subr.mxu0 0.0
  %446 = vmatpush1.msra.mxu0 0.0
  %447 = vmatprep.subr.mxu0 0.0
  %448 = vmatpush1.msra.mxu0 0.0
  %449 = vmatprep.subr.mxu0 0.0
  %450 = vmatpush1.msra.mxu0 0.0
  %451 = vmatprep.subr.mxu0 0.0
  %452 = vmatpush1.msra.mxu0 0.0
  %453 = vmatprep.subr.mxu0 0.0
  %454 = vmatpush1.msra.mxu0 0.0
  %455 = vmatprep.subr.mxu0 0.0
  %456 = vmatpush1.msra.mxu0 0.0
  %457 = vmatprep.subr.mxu0 0.0
  %458 = vmatpush1.msra.mxu0 0.0
  %459 = vmatprep.subr.mxu0 0.0
  %460 = vmatpush1.msra.mxu0 0.0
  %461 = vmatprep.subr.mxu0 0.0
  %462 = vmatpush1.msra.mxu0 0.0
  %463 = vmatprep.subr.mxu0 0.0
  %464 = vmatpush1.msra.mxu0 0.0
  %465 = vmatprep.subr.mxu0 0.0
  %466 = vmatpush1.msra.mxu0 0.0
  %467 = vmatprep.subr.mxu0 0.0
  %468 = vmatpush1.msra.mxu0 0.0
  %469 = vmatprep.subr.mxu0 0.0
  %470 = vmatpush1.msra.mxu0 0.0
  %471 = vmatprep.subr.mxu0 0.0
  %472 = vmatpush1.msra.mxu0 0.0
  %473 = vmatprep.subr.mxu0 0.0
  %474 = vmatpush1.msra.mxu0 0.0
  %475 = vmatprep.subr.mxu0 0.0
  %476 = vmatpush1.msra.mxu0 0.0
  %477 = vmatprep.subr.mxu0 0.0
  %478 = vmatpush1.msra.mxu0 0.0
  %479 = vmatprep.subr.mxu0 0.0
  %480 = vmatpush1.msra.mxu0 0.0
  %481 = vmatprep.subr.mxu0 0.0
  %482 = vmatpush1.msra.mxu0 0.0
  %483 = vmatprep.mubr.f32.mxu0 0.0
  %484 = vmatmul.mubr.f32.gmra.mrb[0].mxu0 %v339
  %v485 = vpop.f32.mrb[0].mxu0
  %v486 = vadd.f32 0.0, %v485
  %v487 = vpop.f32.mrb[0].mxu0
  %488 = vdwg.mxu0
  %v489 = vadd.f32 %v415, %v486
  %v490 = vmax.f32 %v489, 0.0
  %v492 = vlaneseq
  %v493 = vshrl.u32 %v492, 7
  %v494 = vsub.s32 0, %v493
  %v495 = vrot.slane %v68, %v494
  %vm497 = vcmask 261120
  %v499 = vsel %vm497, %v490, 0
  %501 = vmatprep.subr.mxu0 0.0
  %502 = vmatpush1.msra.mxu0 %v64
  %503 = vmatprep.subr.mxu0 0.0
  %504 = vmatpush1.msra.mxu0 %v65
  %505 = vmatprep.subr.mxu0 0.0
  %506 = vmatpush1.msra.mxu0 %v66
  %507 = vmatprep.subr.mxu0 0.0
  %508 = vmatpush1.msra.mxu0 %v67
  %509 = vmatprep.subr.mxu0 0.0
  %510 = vmatpush1.msra.mxu0 0.0
  %511 = vmatprep.subr.mxu0 0.0
  %512 = vmatpush1.msra.mxu0 0.0
  %513 = vmatprep.subr.mxu0 0.0
  %514 = vmatpush1.msra.mxu0 0.0
  %515 = vmatprep.subr.mxu0 0.0
  %516 = vmatpush1.msra.mxu0 0.0
  %517 = vmatprep.subr.mxu0 0.0
  %518 = vmatpush1.msra.mxu0 0.0
  %519 = vmatprep.subr.mxu0 0.0
  %520 = vmatpush1.msra.mxu0 0.0
  %521 = vmatprep.subr.mxu0 0.0
  %522 = vmatpush1.msra.mxu0 0.0
  %523 = vmatprep.subr.mxu0 0.0
  %524 = vmatpush1.msra.mxu0 0.0
  %525 = vmatprep.subr.mxu0 0.0
  %526 = vmatpush1.msra.mxu0 0.0
  %527 = vmatprep.subr.mxu0 0.0
  %528 = vmatpush1.msra.mxu0 0.0
  %529 = vmatprep.subr.mxu0 0.0
  %530 = vmatpush1.msra.mxu0 0.0
  %531 = vmatprep.subr.mxu0 0.0
  %532 = vmatpush1.msra.mxu0 0.0
  %533 = vmatprep.subr.mxu0 0.0
  %534 = vmatpush1.msra.mxu0 0.0
  %535 = vmatprep.subr.mxu0 0.0
  %536 = vmatpush1.msra.mxu0 0.0
  %537 = vmatprep.subr.mxu0 0.0
  %538 = vmatpush1.msra.mxu0 0.0
  %539 = vmatprep.subr.mxu0 0.0
  %540 = vmatpush1.msra.mxu0 0.0
  %541 = vmatprep.subr.mxu0 0.0
  %542 = vmatpush1.msra.mxu0 0.0
  %543 = vmatprep.subr.mxu0 0.0
  %544 = vmatpush1.msra.mxu0 0.0
  %545 = vmatprep.subr.mxu0 0.0
  %546 = vmatpush1.msra.mxu0 0.0
  %547 = vmatprep.subr.mxu0 0.0
  %548 = vmatpush1.msra.mxu0 0.0
  %549 = vmatprep.subr.mxu0 0.0
  %550 = vmatpush1.msra.mxu0 0.0
  %551 = vmatprep.subr.mxu0 0.0
  %552 = vmatpush1.msra.mxu0 0.0
  %553 = vmatprep.subr.mxu0 0.0
  %554 = vmatpush1.msra.mxu0 0.0
  %555 = vmatprep.subr.mxu0 0.0
  %556 = vmatpush1.msra.mxu0 0.0
  %557 = vmatprep.subr.mxu0 0.0
  %558 = vmatpush1.msra.mxu0 0.0
  %559 = vmatprep.subr.mxu0 0.0
  %560 = vmatpush1.msra.mxu0 0.0
  %561 = vmatprep.subr.mxu0 0.0
  %562 = vmatpush1.msra.mxu0 0.0
  %563 = vmatprep.subr.mxu0 0.0
  %564 = vmatpush1.msra.mxu0 0.0
  %565 = vmatprep.mubr.f32.mxu0 0.0
  %566 = vmatmul.mubr.f32.gmra.mrb[0].mxu0 %v499
  %v567 = vpop.f32.mrb[0].mxu0
  %v568 = vadd.f32 %v495, %v567
  %v569 = vpop.f32.mrb[0].mxu0
  %570 = vdwg.mxu0
  %v571 = vld [vmem:[%s7] sm:$0xff]
  %v572 = vld [vmem:[%s7 + $0x8] sm:$0xff]
  %v573 = vld [vmem:[%s8] sm:$0x1]
  %v574 = vld [vmem:[%s9] sm:$0x1]
  %v575 = vld [vmem:[%s10] sm:$0x1]
  %v576 = vld [vmem:[%s11] sm:$0xff]
  %v577 = vld [vmem:[%s11 + $0x8] sm:$0xff]
  %v578 = vld [vmem:[%s11 + $0x10] sm:$0xff]
  %v579 = vld [vmem:[%s11 + $0x18] sm:$0xff]
  %v580 = vld [vmem:[%s12] sm:$0x1]
  %v582 = vlaneseq
  %v583 = vshrl.u32 %v582, 7
  %v584 = vsub.s32 0, %v583
  %v585 = vrot.slane %v573, %v584
  %vm587 = vcmask 130048
  %v589 = vsel %vm587, %v568, 0
  %591 = vmatprep.subr.mxu0 0.0
  %592 = vmatpush1.msra.mxu0 %v571
  %593 = vmatprep.subr.mxu0 0.0
  %594 = vmatpush1.msra.mxu0 %v572
  %595 = vmatprep.subr.mxu0 0.0
  %596 = vmatpush1.msra.mxu0 0.0
  %597 = vmatprep.subr.mxu0 0.0
  %598 = vmatpush1.msra.mxu0 0.0
  %599 = vmatprep.subr.mxu0 0.0
  %600 = vmatpush1.msra.mxu0 0.0
  %601 = vmatprep.subr.mxu0 0.0
  %602 = vmatpush1.msra.mxu0 0.0
  %603 = vmatprep.subr.mxu0 0.0
  %604 = vmatpush1.msra.mxu0 0.0
  %605 = vmatprep.subr.mxu0 0.0
  %606 = vmatpush1.msra.mxu0 0.0
  %607 = vmatprep.subr.mxu0 0.0
  %608 = vmatpush1.msra.mxu0 0.0
  %609 = vmatprep.subr.mxu0 0.0
  %610 = vmatpush1.msra.mxu0 0.0
  %611 = vmatprep.subr.mxu0 0.0
  %612 = vmatpush1.msra.mxu0 0.0
  %613 = vmatprep.subr.mxu0 0.0
  %614 = vmatpush1.msra.mxu0 0.0
  %615 = vmatprep.subr.mxu0 0.0
  %616 = vmatpush1.msra.mxu0 0.0
  %617 = vmatprep.subr.mxu0 0.0
  %618 = vmatpush1.msra.mxu0 0.0
  %619 = vmatprep.subr.mxu0 0.0
  %620 = vmatpush1.msra.mxu0 0.0
  %621 = vmatprep.subr.mxu0 0.0
  %622 = vmatpush1.msra.mxu0 0.0
  %623 = vmatprep.subr.mxu0 0.0
  %624 = vmatpush1.msra.mxu0 0.0
  %625 = vmatprep.subr.mxu0 0.0
  %626 = vmatpush1.msra.mxu0 0.0
  %627 = vmatprep.subr.mxu0 0.0
  %628 = vmatpush1.msra.mxu0 0.0
  %629 = vmatprep.subr.mxu0 0.0
  %630 = vmatpush1.msra.mxu0 0.0
  %631 = vmatprep.subr.mxu0 0.0
  %632 = vmatpush1.msra.mxu0 0.0
  %633 = vmatprep.subr.mxu0 0.0
  %634 = vmatpush1.msra.mxu0 0.0
  %635 = vmatprep.subr.mxu0 0.0
  %636 = vmatpush1.msra.mxu0 0.0
  %637 = vmatprep.subr.mxu0 0.0
  %638 = vmatpush1.msra.mxu0 0.0
  %639 = vmatprep.subr.mxu0 0.0
  %640 = vmatpush1.msra.mxu0 0.0
  %641 = vmatprep.subr.mxu0 0.0
  %642 = vmatpush1.msra.mxu0 0.0
  %643 = vmatprep.subr.mxu0 0.0
  %644 = vmatpush1.msra.mxu0 0.0
  %645 = vmatprep.subr.mxu0 0.0
  %646 = vmatpush1.msra.mxu0 0.0
  %647 = vmatprep.subr.mxu0 0.0
  %648 = vmatpush1.msra.mxu0 0.0
  %649 = vmatprep.subr.mxu0 0.0
  %650 = vmatpush1.msra.mxu0 0.0
  %651 = vmatprep.subr.mxu0 0.0
  %652 = vmatpush1.msra.mxu0 0.0
  %653 = vmatprep.subr.mxu0 0.0
  %654 = vmatpush1.msra.mxu0 0.0
  %655 = vmatprep.mubr.f32.mxu0 0.0
  %656 = vmatmul.mubr.f32.gmra.mrb[0].mxu0 %v589
  %v657 = vpop.f32.mrb[0].mxu0
  %v658 = vadd.f32 %v585, %v657
  %v659 = vpop.f32.mrb[0].mxu0
  %660 = vdwg.mxu0
  %v662 = vsel %vm167, %v658, 0
  %664 = vmatprep.subr.mxu0 0.0
  %665 = vmatpush1.msra.mxu0 %v662
  %666 = vmatprep.subr.mxu0 0.0
  %667 = vmatpush1.msra.mxu0 0.0
  %668 = vmatprep.subr.mxu0 0.0
  %669 = vmatpush1.msra.mxu0 0.0
  %670 = vmatprep.subr.mxu0 0.0
  %671 = vmatpush1.msra.mxu0 0.0
  %672 = vmatprep.subr.mxu0 0.0
  %673 = vmatpush1.msra.mxu0 0.0
  %674 = vmatprep.subr.mxu0 0.0
  %675 = vmatpush1.msra.mxu0 0.0
  %676 = vmatprep.subr.mxu0 0.0
  %677 = vmatpush1.msra.mxu0 0.0
  %678 = vmatprep.subr.mxu0 0.0
  %679 = vmatpush1.msra.mxu0 0.0
  %680 = vmatprep.subr.mxu0 0.0
  %681 = vmatpush1.msra.mxu0 0.0
  %682 = vmatprep.subr.mxu0 0.0
  %683 = vmatpush1.msra.mxu0 0.0
  %684 = vmatprep.subr.mxu0 0.0
  %685 = vmatpush1.msra.mxu0 0.0
  %686 = vmatprep.subr.mxu0 0.0
  %687 = vmatpush1.msra.mxu0 0.0
  %688 = vmatprep.subr.mxu0 0.0
  %689 = vmatpush1.msra.mxu0 0.0
  %690 = vmatprep.subr.mxu0 0.0
  %691 = vmatpush1.msra.mxu0 0.0
  %692 = vmatprep.subr.mxu0 0.0
  %693 = vmatpush1.msra.mxu0 0.0
  %694 = vmatprep.subr.mxu0 0.0
  %695 = vmatpush1.msra.mxu0 0.0
  %696 = vmatprep.subr.mxu0 0.0
  %697 = vmatpush1.msra.mxu0 0.0
  %698 = vmatprep.subr.mxu0 0.0
  %699 = vmatpush1.msra.mxu0 0.0
  %700 = vmatprep.subr.mxu0 0.0
  %701 = vmatpush1.msra.mxu0 0.0
  %702 = vmatprep.subr.mxu0 0.0
  %703 = vmatpush1.msra.mxu0 0.0
  %704 = vmatprep.subr.mxu0 0.0
  %705 = vmatpush1.msra.mxu0 0.0
  %706 = vmatprep.subr.mxu0 0.0
  %707 = vmatpush1.msra.mxu0 0.0
  %708 = vmatprep.subr.mxu0 0.0
  %709 = vmatpush1.msra.mxu0 0.0
  %710 = vmatprep.subr.mxu0 0.0
  %711 = vmatpush1.msra.mxu0 0.0
  %712 = vmatprep.subr.mxu0 0.0
  %713 = vmatpush1.msra.mxu0 0.0
  %714 = vmatprep.subr.mxu0 0.0
  %715 = vmatpush1.msra.mxu0 0.0
  %716 = vmatprep.subr.mxu0 0.0
  %717 = vmatpush1.msra.mxu0 0.0
  %718 = vmatprep.subr.mxu0 0.0
  %719 = vmatpush1.msra.mxu0 0.0
  %720 = vmatprep.subr.mxu0 0.0
  %721 = vmatpush1.msra.mxu0 0.0
  %722 = vmatprep.subr.mxu0 0.0
  %723 = vmatpush1.msra.mxu0 0.0
  %724 = vmatprep.subr.mxu0 0.0
  %725 = vmatpush1.msra.mxu0 0.0
  %726 = vmatprep.subr.mxu0 0.0
  %727 = vmatpush1.msra.mxu0 0.0
  %728 = vmatprep.mubr.f32.mxu0 0.0
  %729 = vmatmul.mubr.f32.gmra.mrb[0].mxu0 %v165
  %v730 = vpop.f32.mrb[0].mxu0
  %v731 = vadd.f32 0.0, %v730
  %v732 = vpop.f32.mrb[0].mxu0
  %733 = vdwg.mxu0
  %v734 = vmul.f32 %v731, 0.5
  %v735 = vmul.f32 %v658, %v658
  %v737 = vsel %vm167, %v735, 0
  %739 = vmatprep.subr.mxu0 0.0
  %740 = vmatpush1.msra.mxu0 %v737
  %741 = vmatprep.subr.mxu0 0.0
  %742 = vmatpush1.msra.mxu0 0.0
  %743 = vmatprep.subr.mxu0 0.0
  %744 = vmatpush1.msra.mxu0 0.0
  %745 = vmatprep.subr.mxu0 0.0
  %746 = vmatpush1.msra.mxu0 0.0
  %747 = vmatprep.subr.mxu0 0.0
  %748 = vmatpush1.msra.mxu0 0.0
  %749 = vmatprep.subr.mxu0 0.0
  %750 = vmatpush1.msra.mxu0 0.0
  %751 = vmatprep.subr.mxu0 0.0
  %752 = vmatpush1.msra.mxu0 0.0
  %753 = vmatprep.subr.mxu0 0.0
  %754 = vmatpush1.msra.mxu0 0.0
  %755 = vmatprep.subr.mxu0 0.0
  %756 = vmatpush1.msra.mxu0 0.0
  %757 = vmatprep.subr.mxu0 0.0
  %758 = vmatpush1.msra.mxu0 0.0
  %759 = vmatprep.subr.mxu0 0.0
  %760 = vmatpush1.msra.mxu0 0.0
  %761 = vmatprep.subr.mxu0 0.0
  %762 = vmatpush1.msra.mxu0 0.0
  %763 = vmatprep.subr.mxu0 0.0
  %764 = vmatpush1.msra.mxu0 0.0
  %765 = vmatprep.subr.mxu0 0.0
  %766 = vmatpush1.msra.mxu0 0.0
  %767 = vmatprep.subr.mxu0 0.0
  %768 = vmatpush1.msra.mxu0 0.0
  %769 = vmatprep.subr.mxu0 0.0
  %770 = vmatpush1.msra.mxu0 0.0
  %771 = vmatprep.subr.mxu0 0.0
  %772 = vmatpush1.msra.mxu0 0.0
  %773 = vmatprep.subr.mxu0 0.0
  %774 = vmatpush1.msra.mxu0 0.0
  %775 = vmatprep.subr.mxu0 0.0
  %776 = vmatpush1.msra.mxu0 0.0
  %777 = vmatprep.subr.mxu0 0.0
  %778 = vmatpush1.msra.mxu0 0.0
  %779 = vmatprep.subr.mxu0 0.0
  %780 = vmatpush1.msra.mxu0 0.0
  %781 = vmatprep.subr.mxu0 0.0
  %782 = vmatpush1.msra.mxu0 0.0
  %783 = vmatprep.subr.mxu0 0.0
  %784 = vmatpush1.msra.mxu0 0.0
  %785 = vmatprep.subr.mxu0 0.0
  %786 = vmatpush1.msra.mxu0 0.0
  %787 = vmatprep.subr.mxu0 0.0
  %788 = vmatpush1.msra.mxu0 0.0
  %789 = vmatprep.subr.mxu0 0.0
  %790 = vmatpush1.msra.mxu0 0.0
  %791 = vmatprep.subr.mxu0 0.0
  %792 = vmatpush1.msra.mxu0 0.0
  %793 = vmatprep.subr.mxu0 0.0
  %794 = vmatpush1.msra.mxu0 0.0
  %795 = vmatprep.subr.mxu0 0.0
  %796 = vmatpush1.msra.mxu0 0.0
  %797 = vmatprep.subr.mxu0 0.0
  %798 = vmatpush1.msra.mxu0 0.0
  %799 = vmatprep.subr.mxu0 0.0
  %800 = vmatpush1.msra.mxu0 0.0
  %801 = vmatprep.subr.mxu0 0.0
  %802 = vmatpush1.msra.mxu0 0.0
  %803 = vmatprep.mubr.f32.mxu0 0.0
  %804 = vmatmul.mubr.f32.gmra.mrb[0].mxu0 %v165
  %v805 = vpop.f32.mrb[0].mxu0
  %v806 = vadd.f32 0.0, %v805
  %v807 = vpop.f32.mrb[0].mxu0
  %808 = vdwg.mxu0
  %v809 = vmul.f32 %v806, 0.5
  %v810 = vmul.f32 %v734, %v734
  %v811 = vsub.f32 %v809, %v810
  %v812 = vmax.f32 %v811, 0.0
  %v813 = vadd.f32 %v812, 1e-05
  %v814 = vrsqrt.pop %v813
  %v816 = vlaneseq
  %v817 = vshrl.u32 %v816, 7
  %v818 = vsub.s32 0, %v817
  %v819 = vrot.slane %v574, %v818
  %v821 = vmul.f32 %v819, %v814
  %v822 = vmul.f32 %v734, %v821
  %v824 = vlaneseq
  %v825 = vshrl.u32 %v824, 7
  %v826 = vsub.s32 0, %v825
  %v827 = vrot.slane %v575, %v826
  %v829 = vsub.f32 %v827, %v822
  %v831 = vsel %vm341, %v821, 0
  %833 = vmatprep.subr.mxu0 0.0
  %834 = vmatpush1.msra.mxu0 %v831
  %835 = vmatprep.subr.mxu0 0.0
  %836 = vmatpush1.msra.mxu0 0.0
  %837 = vmatprep.subr.mxu0 0.0
  %838 = vmatpush1.msra.mxu0 0.0
  %839 = vmatprep.subr.mxu0 0.0
  %840 = vmatpush1.msra.mxu0 0.0
  %841 = vmatprep.subr.mxu0 0.0
  %842 = vmatpush1.msra.mxu0 0.0
  %843 = vmatprep.subr.mxu0 0.0
  %844 = vmatpush1.msra.mxu0 0.0
  %845 = vmatprep.subr.mxu0 0.0
  %846 = vmatpush1.msra.mxu0 0.0
  %847 = vmatprep.subr.mxu0 0.0
  %848 = vmatpush1.msra.mxu0 0.0
  %849 = vmatprep.subr.mxu0 0.0
  %850 = vmatpush1.msra.mxu0 0.0
  %851 = vmatprep.subr.mxu0 0.0
  %852 = vmatpush1.msra.mxu0 0.0
  %853 = vmatprep.subr.mxu0 0.0
  %854 = vmatpush1.msra.mxu0 0.0
  %855 = vmatprep.subr.mxu0 0.0
  %856 = vmatpush1.msra.mxu0 0.0
  %857 = vmatprep.subr.mxu0 0.0
  %858 = vmatpush1.msra.mxu0 0.0
  %859 = vmatprep.subr.mxu0 0.0
  %860 = vmatpush1.msra.mxu0 0.0
  %861 = vmatprep.subr.mxu0 0.0
  %862 = vmatpush1.msra.mxu0 0.0
  %863 = vmatprep.subr.mxu0 0.0
  %864 = vmatpush1.msra.mxu0 0.0
  %865 = vmatprep.subr.mxu0 0.0
  %866 = vmatpush1.msra.mxu0 0.0
  %867 = vmatprep.subr.mxu0 0.0
  %868 = vmatpush1.msra.mxu0 0.0
  %869 = vmatprep.subr.mxu0 0.0
  %870 = vmatpush1.msra.mxu0 0.0
  %871 = vmatprep.subr.mxu0 0.0
  %872 = vmatpush1.msra.mxu0 0.0
  %873 = vmatprep.subr.mxu0 0.0
  %874 = vmatpush1.msra.mxu0 0.0
  %875 = vmatprep.subr.mxu0 0.0
  %876 = vmatpush1.msra.mxu0 0.0
  %877 = vmatprep.subr.mxu0 0.0
  %878 = vmatpush1.msra.mxu0 0.0
  %879 = vmatprep.subr.mxu0 0.0
  %880 = vmatpush1.msra.mxu0 0.0
  %881 = vmatprep.subr.mxu0 0.0
  %882 = vmatpush1.msra.mxu0 0.0
  %883 = vmatprep.subr.mxu0 0.0
  %884 = vmatpush1.msra.mxu0 0.0
  %885 = vmatprep.subr.mxu0 0.0
  %886 = vmatpush1.msra.mxu0 0.0
  %887 = vmatprep.subr.mxu0 0.0
  %888 = vmatpush1.msra.mxu0 0.0
  %889 = vmatprep.subr.mxu0 0.0
  %890 = vmatpush1.msra.mxu0 0.0
  %891 = vmatprep.subr.mxu0 0.0
  %892 = vmatpush1.msra.mxu0 0.0
  %893 = vmatprep.subr.mxu0 0.0
  %894 = vmatpush1.msra.mxu0 0.0
  %895 = vmatprep.subr.mxu0 0.0
  %896 = vmatpush1.msra.mxu0 0.0
  %897 = vmatprep.mubr.f32.mxu0 0.0
  %898 = vmatmul.mubr.f32.gmra.mrb[0].mxu0 %v339
  %v899 = vpop.f32.mrb[0].mxu0
  %v900 = vadd.f32 0.0, %v899
  %v901 = vpop.f32.mrb[0].mxu0
  %902 = vdwg.mxu0
  %v903 = vmul.f32 %v658, %v900
  %v905 = vsel %vm341, %v829, 0
  %907 = vmatprep.subr.mxu0 0.0
  %908 = vmatpush1.msra.mxu0 %v905
  %909 = vmatprep.subr.mxu0 0.0
  %910 = vmatpush1.msra.mxu0 0.0
  %911 = vmatprep.subr.mxu0 0.0
  %912 = vmatpush1.msra.mxu0 0.0
  %913 = vmatprep.subr.mxu0 0.0
  %914 = vmatpush1.msra.mxu0 0.0
  %915 = vmatprep.subr.mxu0 0.0
  %916 = vmatpush1.msra.mxu0 0.0
  %917 = vmatprep.subr.mxu0 0.0
  %918 = vmatpush1.msra.mxu0 0.0
  %919 = vmatprep.subr.mxu0 0.0
  %920 = vmatpush1.msra.mxu0 0.0
  %921 = vmatprep.subr.mxu0 0.0
  %922 = vmatpush1.msra.mxu0 0.0
  %923 = vmatprep.subr.mxu0 0.0
  %924 = vmatpush1.msra.mxu0 0.0
  %925 = vmatprep.subr.mxu0 0.0
  %926 = vmatpush1.msra.mxu0 0.0
  %927 = vmatprep.subr.mxu0 0.0
  %928 = vmatpush1.msra.mxu0 0.0
  %929 = vmatprep.subr.mxu0 0.0
  %930 = vmatpush1.msra.mxu0 0.0
  %931 = vmatprep.subr.mxu0 0.0
  %932 = vmatpush1.msra.mxu0 0.0
  %933 = vmatprep.subr.mxu0 0.0
  %934 = vmatpush1.msra.mxu0 0.0
  %935 = vmatprep.subr.mxu0 0.0
  %936 = vmatpush1.msra.mxu0 0.0
  %937 = vmatprep.subr.mxu0 0.0
  %938 = vmatpush1.msra.mxu0 0.0
  %939 = vmatprep.subr.mxu0 0.0
  %940 = vmatpush1.msra.mxu0 0.0
  %941 = vmatprep.subr.mxu0 0.0
  %942 = vmatpush1.msra.mxu0 0.0
  %943 = vmatprep.subr.mxu0 0.0
  %944 = vmatpush1.msra.mxu0 0.0
  %945 = vmatprep.subr.mxu0 0.0
  %946 = vmatpush1.msra.mxu0 0.0
  %947 = vmatprep.subr.mxu0 0.0
  %948 = vmatpush1.msra.mxu0 0.0
  %949 = vmatprep.subr.mxu0 0.0
  %950 = vmatpush1.msra.mxu0 0.0
  %951 = vmatprep.subr.mxu0 0.0
  %952 = vmatpush1.msra.mxu0 0.0
  %953 = vmatprep.subr.mxu0 0.0
  %954 = vmatpush1.msra.mxu0 0.0
  %955 = vmatprep.subr.mxu0 0.0
  %956 = vmatpush1.msra.mxu0 0.0
  %957 = vmatprep.subr.mxu0 0.0
  %958 = vmatpush1.msra.mxu0 0.0
  %959 = vmatprep.subr.mxu0 0.0
  %960 = vmatpush1.msra.mxu0 0.0
  %961 = vmatprep.subr.mxu0 0.0
  %962 = vmatpush1.msra.mxu0 0.0
  %963 = vmatprep.subr.mxu0 0.0
  %964 = vmatpush1.msra.mxu0 0.0
  %965 = vmatprep.subr.mxu0 0.0
  %966 = vmatpush1.msra.mxu0 0.0
  %967 = vmatprep.subr.mxu0 0.0
  %968 = vmatpush1.msra.mxu0 0.0
  %969 = vmatprep.subr.mxu0 0.0
  %970 = vmatpush1.msra.mxu0 0.0
  %971 = vmatprep.mubr.f32.mxu0 0.0
  %972 = vmatmul.mubr.f32.gmra.mrb[0].mxu0 %v339
  %v973 = vpop.f32.mrb[0].mxu0
  %v974 = vadd.f32 0.0, %v973
  %v975 = vpop.f32.mrb[0].mxu0
  %976 = vdwg.mxu0
  %v977 = vadd.f32 %v903, %v974
  %v978 = vmax.f32 %v977, 0.0
  %v980 = vlaneseq
  %v981 = vshrl.u32 %v980, 7
  %v982 = vsub.s32 0, %v981
  %v983 = vrot.slane %v580, %v982
  %v986 = vsel %vm497, %v978, 0
  %988 = vmatprep.subr.mxu0 0.0
  %989 = vmatpush1.msra.mxu0 %v576
  %990 = vmatprep.subr.mxu0 0.0
  %991 = vmatpush1.msra.mxu0 %v577
  %992 = vmatprep.subr.mxu0 0.0
  %993 = vmatpush1.msra.mxu0 %v578
  %994 = vmatprep.subr.mxu0 0.0
  %995 = vmatpush1.msra.mxu0 %v579
  %996 = vmatprep.subr.mxu0 0.0
  %997 = vmatpush1.msra.mxu0 0.0
  %998 = vmatprep.subr.mxu0 0.0
  %999 = vmatpush1.msra.mxu0 0.0
  %1000 = vmatprep.subr.mxu0 0.0
  %1001 = vmatpush1.msra.mxu0 0.0
  %1002 = vmatprep.subr.mxu0 0.0
  %1003 = vmatpush1.msra.mxu0 0.0
  %1004 = vmatprep.subr.mxu0 0.0
  %1005 = vmatpush1.msra.mxu0 0.0
  %1006 = vmatprep.subr.mxu0 0.0
  %1007 = vmatpush1.msra.mxu0 0.0
  %1008 = vmatprep.subr.mxu0 0.0
  %1009 = vmatpush1.msra.mxu0 0.0
  %1010 = vmatprep.subr.mxu0 0.0
  %1011 = vmatpush1.msra.mxu0 0.0
  %1012 = vmatprep.subr.mxu0 0.0
  %1013 = vmatpush1.msra.mxu0 0.0
  %1014 = vmatprep.subr.mxu0 0.0
  %1015 = vmatpush1.msra.mxu0 0.0
  %1016 = vmatprep.subr.mxu0 0.0
  %1017 = vmatpush1.msra.mxu0 0.0
  %1018 = vmatprep.subr.mxu0 0.0
  %1019 = vmatpush1.msra.mxu0 0.0
  %1020 = vmatprep.subr.mxu0 0.0
  %1021 = vmatpush1.msra.mxu0 0.0
  %1022 = vmatprep.subr.mxu0 0.0
  %1023 = vmatpush1.msra.mxu0 0.0
  %1024 = vmatprep.subr.mxu0 0.0
  %1025 = vmatpush1.msra.mxu0 0.0
  %1026 = vmatprep.subr.mxu0 0.0
  %1027 = vmatpush1.msra.mxu0 0.0
  %1028 = vmatprep.subr.mxu0 0.0
  %1029 = vmatpush1.msra.mxu0 0.0
  %1030 = vmatprep.subr.mxu0 0.0
  %1031 = vmatpush1.msra.mxu0 0.0
  %1032 = vmatprep.subr.mxu0 0.0
  %1033 = vmatpush1.msra.mxu0 0.0
  %1034 = vmatprep.subr.mxu0 0.0
  %1035 = vmatpush1.msra.mxu0 0.0
  %1036 = vmatprep.subr.mxu0 0.0
  %1037 = vmatpush1.msra.mxu0 0.0
  %1038 = vmatprep.subr.mxu0 0.0
  %1039 = vmatpush1.msra.mxu0 0.0
  %1040 = vmatprep.subr.mxu0 0.0
  %1041 = vmatpush1.msra.mxu0 0.0
  %1042 = vmatprep.subr.mxu0 0.0
  %1043 = vmatpush1.msra.mxu0 0.0
  %1044 = vmatprep.subr.mxu0 0.0
  %1045 = vmatpush1.msra.mxu0 0.0
  %1046 = vmatprep.subr.mxu0 0.0
  %1047 = vmatpush1.msra.mxu0 0.0
  %1048 = vmatprep.subr.mxu0 0.0
  %1049 = vmatpush1.msra.mxu0 0.0
  %1050 = vmatprep.subr.mxu0 0.0
  %1051 = vmatpush1.msra.mxu0 0.0
  %1052 = vmatprep.mubr.f32.mxu0 0.0
  %1053 = vmatmul.mubr.f32.gmra.mrb[0].mxu0 %v986
  %v1054 = vpop.f32.mrb[0].mxu0
  %v1055 = vadd.f32 %v983, %v1054
  %v1056 = vpop.f32.mrb[0].mxu0
  %1057 = vdwg.mxu0
  %v1058 = vmul.f32 %v1055, %v1055
  %vm1059 = vcmask 125952
  %v1060 = vsel %vm1059, %v1058, 0.0
  %1061 = vadd.xlane.f32.xlu0 %v1060
  %v1062 = vpop.xlane.xlu0 %1061
  %v1063 = vmax.f32 %v1062, 1e-24
  %v1064 = vrsqrt.pop %v1063
  %v1065 = vmul.f32 %v1055, %v1064
  %1066 = vst.msk [vmem:[%s13] sm:$0xf] %vm1059, %v1065
  // Predicated region
  $region54: #{byol_forward.6} parent=0 // pred_check
    _
  $region55: #{byol_forward.6} parent=0 // pred_check_branch
    %1068 = sbr.rel (0) target = $region57
  $region56: #{byol_forward.6} parent=0 // pred_region
    _
  $region57: #{byol_forward.6} parent=0 // pred_fallthru
    _
  // Predicated region
  $region58: #{byol_forward.6} parent=0 // pred_check
    _
  $region59: #{byol_forward.6} parent=0 // pred_check_branch
    %1070 = sbr.rel (0) target = $region61
  $region60: #{byol_forward.6} parent=0 // pred_region
    _
  $region61: #{byol_forward.6} parent=0 // pred_fallthru
    _

// kernel: byol_forward.7
$region0: #{byol_forward.7}
  #allocation0 [shape = 'u32[]', space=smem, size = 0x4, offset = 0x4, fixed_abs, tag = 'smem constant byte address 0x4 - core index']
  #allocation1 [shape = 'u32[144,128]{1,0:T(1,128)}', space=vmem, size = 0x12000, scoped, tag = 'internal scratch']
  %s0 = inlined_call_operand.vmem [shape: f32[4,128], index: 0, kind: input, shape index: {}]
  %s1 = inlined_call_operand.vmem [shape: f32[128,32], index: 1, kind: input, shape index: {}]
  %s2 = inlined_call_operand.vmem [shape: f32[1,32], index: 2, kind: input, shape index: {}, may-alias: {2,4}]
  %s3 = inlined_call_operand.vmem [shape: f32[1,32], index: 3, kind: input, shape index: {}]
  %s4 = inlined_call_operand.vmem [shape: f32[1,32], index: 4, kind: input, shape index: {}, may-alias: {2,4}]
  %s5 = inlined_call_operand.vmem [shape: f32[32,16], index: 5, kind: input, shape index: {}]
  %s6 = inlined_call_operand.vmem [shape: f32[1,16], index: 6, kind: input, shape index: {}]
  %s7 = inlined_call_operand.vmem [shape: f32[4,16], index: 7, kind: output, shape index: {}]
  %s8 = sld [smem:[#allocation0]]
  $region38: #{byol_forward.7} parent=0
    _
  %s10 = ssub.s32 1, %s8
  %s11 = scalar_select 0, %s10, %s8
  // Predicated region
  $region2: #{byol_forward.7} parent=0 // pred_check
    _
  $region3: #{byol_forward.7} parent=0 // pred_check_branch
    %13 = sbr.rel (0) target = $region5
  $region4: #{byol_forward.7} parent=0 // pred_region
    _
  $region5: #{byol_forward.7} parent=0 // pred_fallthru
    _
  // Predicated region
  $region6: #{byol_forward.7} parent=0 // pred_check
    _
  $region7: #{byol_forward.7} parent=0 // pred_check_branch
    %15 = sbr.rel (0) target = $region9
  $region8: #{byol_forward.7} parent=0 // pred_region
    _
  $region9: #{byol_forward.7} parent=0 // pred_fallthru
    _
  // Predicated region
  $region10: #{byol_forward.7} parent=0 // pred_check
    _
  $region11: #{byol_forward.7} parent=0 // pred_check_branch
    %17 = sbr.rel (0) target = $region13
  $region12: #{byol_forward.7} parent=0 // pred_region
    _
  $region13: #{byol_forward.7} parent=0 // pred_fallthru
    _
  // Predicated region
  $region14: #{byol_forward.7} parent=0 // pred_check
    _
  $region15: #{byol_forward.7} parent=0 // pred_check_branch
    %19 = sbr.rel (0) target = $region17
  $region16: #{byol_forward.7} parent=0 // pred_region
    _
  $region17: #{byol_forward.7} parent=0 // pred_fallthru
    _
  // Predicated region
  $region18: #{byol_forward.7} parent=0 // pred_check
    _
  $region19: #{byol_forward.7} parent=0 // pred_check_branch
    %21 = sbr.rel (0) target = $region21
  $region20: #{byol_forward.7} parent=0 // pred_region
    _
  $region21: #{byol_forward.7} parent=0 // pred_fallthru
    _
  // Predicated region
  $region22: #{byol_forward.7} parent=0 // pred_check
    _
  $region23: #{byol_forward.7} parent=0 // pred_check_branch
    %23 = sbr.rel (0) target = $region25
  $region24: #{byol_forward.7} parent=0 // pred_region
    _
  $region25: #{byol_forward.7} parent=0 // pred_fallthru
    _
  // Predicated region
  $region26: #{byol_forward.7} parent=0 // pred_check
    _
  $region27: #{byol_forward.7} parent=0 // pred_check_branch
    %25 = sbr.rel (0) target = $region29
  $region28: #{byol_forward.7} parent=0 // pred_region
    _
  $region29: #{byol_forward.7} parent=0 // pred_fallthru
    _
  %v26 = vld [vmem:[%s0] sm:$0xf]
  %v27 = vld [vmem:[%s1] sm:$0xff]
  %v28 = vld [vmem:[%s1 + $0x8] sm:$0xff]
  %v29 = vld [vmem:[%s1 + $0x10] sm:$0xff]
  %v30 = vld [vmem:[%s1 + $0x18] sm:$0xff]
  %v31 = vld [vmem:[%s1 + $0x20] sm:$0xff]
  %v32 = vld [vmem:[%s1 + $0x28] sm:$0xff]
  %v33 = vld [vmem:[%s1 + $0x30] sm:$0xff]
  %v34 = vld [vmem:[%s1 + $0x38] sm:$0xff]
  %v35 = vld [vmem:[%s1 + $0x40] sm:$0xff]
  %v36 = vld [vmem:[%s1 + $0x48] sm:$0xff]
  %v37 = vld [vmem:[%s1 + $0x50] sm:$0xff]
  %v38 = vld [vmem:[%s1 + $0x58] sm:$0xff]
  %v39 = vld [vmem:[%s1 + $0x60] sm:$0xff]
  %v40 = vld [vmem:[%s1 + $0x68] sm:$0xff]
  %v41 = vld [vmem:[%s1 + $0x70] sm:$0xff]
  %v42 = vld [vmem:[%s1 + $0x78] sm:$0xff]
  %v43 = vld [vmem:[%s2] sm:$0x1]
  %v44 = vld [vmem:[%s3] sm:$0x1]
  %v45 = vld [vmem:[%s4] sm:$0x1]
  %v46 = vld [vmem:[%s5] sm:$0xff]
  %v47 = vld [vmem:[%s5 + $0x8] sm:$0xff]
  %v48 = vld [vmem:[%s5 + $0x10] sm:$0xff]
  %v49 = vld [vmem:[%s5 + $0x18] sm:$0xff]
  %v50 = vld [vmem:[%s6] sm:$0x1]
  %v52 = vlaneseq
  %v53 = vshrl.u32 %v52, 7
  %v54 = vsub.s32 0, %v53
  %v55 = vrot.slane %v43, %v54
  %57 = vmatprep.subr.mxu0 0.0
  %58 = vmatpush1.msra.mxu0 %v27
  %59 = vmatprep.subr.mxu0 0.0
  %60 = vmatpush1.msra.mxu0 %v28
  %61 = vmatprep.subr.mxu0 0.0
  %62 = vmatpush1.msra.mxu0 %v29
  %63 = vmatprep.subr.mxu0 0.0
  %64 = vmatpush1.msra.mxu0 %v30
  %65 = vmatprep.subr.mxu0 0.0
  %66 = vmatpush1.msra.mxu0 %v31
  %67 = vmatprep.subr.mxu0 0.0
  %68 = vmatpush1.msra.mxu0 %v32
  %69 = vmatprep.subr.mxu0 0.0
  %70 = vmatpush1.msra.mxu0 %v33
  %71 = vmatprep.subr.mxu0 0.0
  %72 = vmatpush1.msra.mxu0 %v34
  %73 = vmatprep.subr.mxu0 0.0
  %74 = vmatpush1.msra.mxu0 %v35
  %75 = vmatprep.subr.mxu0 0.0
  %76 = vmatpush1.msra.mxu0 %v36
  %77 = vmatprep.subr.mxu0 0.0
  %78 = vmatpush1.msra.mxu0 %v37
  %79 = vmatprep.subr.mxu0 0.0
  %80 = vmatpush1.msra.mxu0 %v38
  %81 = vmatprep.subr.mxu0 0.0
  %82 = vmatpush1.msra.mxu0 %v39
  %83 = vmatprep.subr.mxu0 0.0
  %84 = vmatpush1.msra.mxu0 %v40
  %85 = vmatprep.subr.mxu0 0.0
  %86 = vmatpush1.msra.mxu0 %v41
  %87 = vmatprep.subr.mxu0 0.0
  %88 = vmatpush1.msra.mxu0 %v42
  %89 = vmatprep.subr.mxu0 0.0
  %90 = vmatpush1.msra.mxu0 0.0
  %91 = vmatprep.subr.mxu0 0.0
  %92 = vmatpush1.msra.mxu0 0.0
  %93 = vmatprep.subr.mxu0 0.0
  %94 = vmatpush1.msra.mxu0 0.0
  %95 = vmatprep.subr.mxu0 0.0
  %96 = vmatpush1.msra.mxu0 0.0
  %97 = vmatprep.subr.mxu0 0.0
  %98 = vmatpush1.msra.mxu0 0.0
  %99 = vmatprep.subr.mxu0 0.0
  %100 = vmatpush1.msra.mxu0 0.0
  %101 = vmatprep.subr.mxu0 0.0
  %102 = vmatpush1.msra.mxu0 0.0
  %103 = vmatprep.subr.mxu0 0.0
  %104 = vmatpush1.msra.mxu0 0.0
  %105 = vmatprep.subr.mxu0 0.0
  %106 = vmatpush1.msra.mxu0 0.0
  %107 = vmatprep.subr.mxu0 0.0
  %108 = vmatpush1.msra.mxu0 0.0
  %109 = vmatprep.subr.mxu0 0.0
  %110 = vmatpush1.msra.mxu0 0.0
  %111 = vmatprep.subr.mxu0 0.0
  %112 = vmatpush1.msra.mxu0 0.0
  %113 = vmatprep.subr.mxu0 0.0
  %114 = vmatpush1.msra.mxu0 0.0
  %115 = vmatprep.subr.mxu0 0.0
  %116 = vmatpush1.msra.mxu0 0.0
  %117 = vmatprep.subr.mxu0 0.0
  %118 = vmatpush1.msra.mxu0 0.0
  %119 = vmatprep.subr.mxu0 0.0
  %120 = vmatpush1.msra.mxu0 0.0
  %121 = vmatprep.mubr.f32.mxu0 0.0
  %122 = vmatmul.mubr.f32.gmra.mrb[0].mxu0 %v26
  %v123 = vpop.f32.mrb[0].mxu0
  %v124 = vadd.f32 %v55, %v123
  %v125 = vpop.f32.mrb[0].mxu0
  %126 = vdwg.mxu0
  %v127 = vlaneseq
  %v128 = vand.u32 %v127, 127
  %v129 = vlaneseq
  %v130 = vshrl.u32 %v129, 7
  %v131 = vmul.u32 %v130, 2
  %vm132 = vcmp.ge.s32.totalorder %v128, %v131
  %v133 = vadd.s32 %v131, 2
  %vm134 = vcmp.lt.s32.totalorder %v128, %v133
  %vm135 = vmand %vm132, %vm134
  %v136 = vsel %vm135, 1, 0
  %v137 = vcvt.s32.f32 %v136
  %v138 = vmul.u32 %v128, 2
  %vm139 = vcmp.ge.s32.totalorder %v130, %v138
  %v140 = vadd.s32 %v138, 2
  %vm141 = vcmp.lt.s32.totalorder %v130, %v140
  %vm142 = vmand %vm139, %vm141
  %v143 = vsel %vm142, 1, 0
  %v144 = vcvt.s32.f32 %v143
  %vm145 = vcmask 31744
  %v147 = vsel %vm145, %v137, 0
  %vm149 = vcmask 1043456
  %v151 = vsel %vm149, %v124, 0
  %153 = vmatprep.subr.mxu0 0.0
  %154 = vmatpush1.msra.mxu0 %v151
  %155 = vmatprep.subr.mxu0 0.0
  %156 = vmatpush1.msra.mxu0 0.0
  %157 = vmatprep.subr.mxu0 0.0
  %158 = vmatpush1.msra.mxu0 0.0
  %159 = vmatprep.subr.mxu0 0.0
  %160 = vmatpush1.msra.mxu0 0.0
  %161 = vmatprep.subr.mxu0 0.0
  %162 = vmatpush1.msra.mxu0 0.0
  %163 = vmatprep.subr.mxu0 0.0
  %164 = vmatpush1.msra.mxu0 0.0
  %165 = vmatprep.subr.mxu0 0.0
  %166 = vmatpush1.msra.mxu0 0.0
  %167 = vmatprep.subr.mxu0 0.0
  %168 = vmatpush1.msra.mxu0 0.0
  %169 = vmatprep.subr.mxu0 0.0
  %170 = vmatpush1.msra.mxu0 0.0
  %171 = vmatprep.subr.mxu0 0.0
  %172 = vmatpush1.msra.mxu0 0.0
  %173 = vmatprep.subr.mxu0 0.0
  %174 = vmatpush1.msra.mxu0 0.0
  %175 = vmatprep.subr.mxu0 0.0
  %176 = vmatpush1.msra.mxu0 0.0
  %177 = vmatprep.subr.mxu0 0.0
  %178 = vmatpush1.msra.mxu0 0.0
  %179 = vmatprep.subr.mxu0 0.0
  %180 = vmatpush1.msra.mxu0 0.0
  %181 = vmatprep.subr.mxu0 0.0
  %182 = vmatpush1.msra.mxu0 0.0
  %183 = vmatprep.subr.mxu0 0.0
  %184 = vmatpush1.msra.mxu0 0.0
  %185 = vmatprep.subr.mxu0 0.0
  %186 = vmatpush1.msra.mxu0 0.0
  %187 = vmatprep.subr.mxu0 0.0
  %188 = vmatpush1.msra.mxu0 0.0
  %189 = vmatprep.subr.mxu0 0.0
  %190 = vmatpush1.msra.mxu0 0.0
  %191 = vmatprep.subr.mxu0 0.0
  %192 = vmatpush1.msra.mxu0 0.0
  %193 = vmatprep.subr.mxu0 0.0
  %194 = vmatpush1.msra.mxu0 0.0
  %195 = vmatprep.subr.mxu0 0.0
  %196 = vmatpush1.msra.mxu0 0.0
  %197 = vmatprep.subr.mxu0 0.0
  %198 = vmatpush1.msra.mxu0 0.0
  %199 = vmatprep.subr.mxu0 0.0
  %200 = vmatpush1.msra.mxu0 0.0
  %201 = vmatprep.subr.mxu0 0.0
  %202 = vmatpush1.msra.mxu0 0.0
  %203 = vmatprep.subr.mxu0 0.0
  %204 = vmatpush1.msra.mxu0 0.0
  %205 = vmatprep.subr.mxu0 0.0
  %206 = vmatpush1.msra.mxu0 0.0
  %207 = vmatprep.subr.mxu0 0.0
  %208 = vmatpush1.msra.mxu0 0.0
  %209 = vmatprep.subr.mxu0 0.0
  %210 = vmatpush1.msra.mxu0 0.0
  %211 = vmatprep.subr.mxu0 0.0
  %212 = vmatpush1.msra.mxu0 0.0
  %213 = vmatprep.subr.mxu0 0.0
  %214 = vmatpush1.msra.mxu0 0.0
  %215 = vmatprep.subr.mxu0 0.0
  %216 = vmatpush1.msra.mxu0 0.0
  %217 = vmatprep.mubr.f32.mxu0 0.0
  %218 = vmatmul.mubr.f32.gmra.mrb[0].mxu0 %v147
  %v219 = vpop.f32.mrb[0].mxu0
  %v220 = vadd.f32 0.0, %v219
  %v221 = vpop.f32.mrb[0].mxu0
  %222 = vdwg.mxu0
  %v223 = vmul.f32 %v220, 0.5
  %v224 = vmul.f32 %v124, %v124
  %v226 = vsel %vm149, %v224, 0
  %228 = vmatprep.subr.mxu0 0.0
  %229 = vmatpush1.msra.mxu0 %v226
  %230 = vmatprep.subr.mxu0 0.0
  %231 = vmatpush1.msra.mxu0 0.0
  %232 = vmatprep.subr.mxu0 0.0
  %233 = vmatpush1.msra.mxu0 0.0
  %234 = vmatprep.subr.mxu0 0.0
  %235 = vmatpush1.msra.mxu0 0.0
  %236 = vmatprep.subr.mxu0 0.0
  %237 = vmatpush1.msra.mxu0 0.0
  %238 = vmatprep.subr.mxu0 0.0
  %239 = vmatpush1.msra.mxu0 0.0
  %240 = vmatprep.subr.mxu0 0.0
  %241 = vmatpush1.msra.mxu0 0.0
  %242 = vmatprep.subr.mxu0 0.0
  %243 = vmatpush1.msra.mxu0 0.0
  %244 = vmatprep.subr.mxu0 0.0
  %245 = vmatpush1.msra.mxu0 0.0
  %246 = vmatprep.subr.mxu0 0.0
  %247 = vmatpush1.msra.mxu0 0.0
  %248 = vmatprep.subr.mxu0 0.0
  %249 = vmatpush1.msra.mxu0 0.0
  %250 = vmatprep.subr.mxu0 0.0
  %251 = vmatpush1.msra.mxu0 0.0
  %252 = vmatprep.subr.mxu0 0.0
  %253 = vmatpush1.msra.mxu0 0.0
  %254 = vmatprep.subr.mxu0 0.0
  %255 = vmatpush1.msra.mxu0 0.0
  %256 = vmatprep.subr.mxu0 0.0
  %257 = vmatpush1.msra.mxu0 0.0
  %258 = vmatprep.subr.mxu0 0.0
  %259 = vmatpush1.msra.mxu0 0.0
  %260 = vmatprep.subr.mxu0 0.0
  %261 = vmatpush1.msra.mxu0 0.0
  %262 = vmatprep.subr.mxu0 0.0
  %263 = vmatpush1.msra.mxu0 0.0
  %264 = vmatprep.subr.mxu0 0.0
  %265 = vmatpush1.msra.mxu0 0.0
  %266 = vmatprep.subr.mxu0 0.0
  %267 = vmatpush1.msra.mxu0 0.0
  %268 = vmatprep.subr.mxu0 0.0
  %269 = vmatpush1.msra.mxu0 0.0
  %270 = vmatprep.subr.mxu0 0.0
  %271 = vmatpush1.msra.mxu0 0.0
  %272 = vmatprep.subr.mxu0 0.0
  %273 = vmatpush1.msra.mxu0 0.0
  %274 = vmatprep.subr.mxu0 0.0
  %275 = vmatpush1.msra.mxu0 0.0
  %276 = vmatprep.subr.mxu0 0.0
  %277 = vmatpush1.msra.mxu0 0.0
  %278 = vmatprep.subr.mxu0 0.0
  %279 = vmatpush1.msra.mxu0 0.0
  %280 = vmatprep.subr.mxu0 0.0
  %281 = vmatpush1.msra.mxu0 0.0
  %282 = vmatprep.subr.mxu0 0.0
  %283 = vmatpush1.msra.mxu0 0.0
  %284 = vmatprep.subr.mxu0 0.0
  %285 = vmatpush1.msra.mxu0 0.0
  %286 = vmatprep.subr.mxu0 0.0
  %287 = vmatpush1.msra.mxu0 0.0
  %288 = vmatprep.subr.mxu0 0.0
  %289 = vmatpush1.msra.mxu0 0.0
  %290 = vmatprep.subr.mxu0 0.0
  %291 = vmatpush1.msra.mxu0 0.0
  %292 = vmatprep.mubr.f32.mxu0 0.0
  %293 = vmatmul.mubr.f32.gmra.mrb[0].mxu0 %v147
  %v294 = vpop.f32.mrb[0].mxu0
  %v295 = vadd.f32 0.0, %v294
  %v296 = vpop.f32.mrb[0].mxu0
  %297 = vdwg.mxu0
  %v298 = vmul.f32 %v295, 0.5
  %v299 = vmul.f32 %v223, %v223
  %v300 = vsub.f32 %v298, %v299
  %v301 = vmax.f32 %v300, 0.0
  %v302 = vadd.f32 %v301, 1e-05
  %v303 = vrsqrt.pop %v302
  %v305 = vlaneseq
  %v306 = vshrl.u32 %v305, 7
  %v307 = vsub.s32 0, %v306
  %v308 = vrot.slane %v44, %v307
  %v310 = vmul.f32 %v308, %v303
  %v311 = vmul.f32 %v223, %v310
  %v313 = vlaneseq
  %v314 = vshrl.u32 %v313, 7
  %v315 = vsub.s32 0, %v314
  %v316 = vrot.slane %v45, %v315
  %v318 = vsub.f32 %v316, %v311
  %vm319 = vcmask 15360
  %v321 = vsel %vm319, %v144, 0
  %vm323 = vcmask 1041408
  %v325 = vsel %vm323, %v310, 0
  %327 = vmatprep.subr.mxu0 0.0
  %328 = vmatpush1.msra.mxu0 %v325
  %329 = vmatprep.subr.mxu0 0.0
  %330 = vmatpush1.msra.mxu0 0.0
  %331 = vmatprep.subr.mxu0 0.0
  %332 = vmatpush1.msra.mxu0 0.0
  %333 = vmatprep.subr.mxu0 0.0
  %334 = vmatpush1.msra.mxu0 0.0
  %335 = vmatprep.subr.mxu0 0.0
  %336 = vmatpush1.msra.mxu0 0.0
  %337 = vmatprep.subr.mxu0 0.0
  %338 = vmatpush1.msra.mxu0 0.0
  %339 = vmatprep.subr.mxu0 0.0
  %340 = vmatpush1.msra.mxu0 0.0
  %341 = vmatprep.subr.mxu0 0.0
  %342 = vmatpush1.msra.mxu0 0.0
  %343 = vmatprep.subr.mxu0 0.0
  %344 = vmatpush1.msra.mxu0 0.0
  %345 = vmatprep.subr.mxu0 0.0
  %346 = vmatpush1.msra.mxu0 0.0
  %347 = vmatprep.subr.mxu0 0.0
  %348 = vmatpush1.msra.mxu0 0.0
  %349 = vmatprep.subr.mxu0 0.0
  %350 = vmatpush1.msra.mxu0 0.0
  %351 = vmatprep.subr.mxu0 0.0
  %352 = vmatpush1.msra.mxu0 0.0
  %353 = vmatprep.subr.mxu0 0.0
  %354 = vmatpush1.msra.mxu0 0.0
  %355 = vmatprep.subr.mxu0 0.0
  %356 = vmatpush1.msra.mxu0 0.0
  %357 = vmatprep.subr.mxu0 0.0
  %358 = vmatpush1.msra.mxu0 0.0
  %359 = vmatprep.subr.mxu0 0.0
  %360 = vmatpush1.msra.mxu0 0.0
  %361 = vmatprep.subr.mxu0 0.0
  %362 = vmatpush1.msra.mxu0 0.0
  %363 = vmatprep.subr.mxu0 0.0
  %364 = vmatpush1.msra.mxu0 0.0
  %365 = vmatprep.subr.mxu0 0.0
  %366 = vmatpush1.msra.mxu0 0.0
  %367 = vmatprep.subr.mxu0 0.0
  %368 = vmatpush1.msra.mxu0 0.0
  %369 = vmatprep.subr.mxu0 0.0
  %370 = vmatpush1.msra.mxu0 0.0
  %371 = vmatprep.subr.mxu0 0.0
  %372 = vmatpush1.msra.mxu0 0.0
  %373 = vmatprep.subr.mxu0 0.0
  %374 = vmatpush1.msra.mxu0 0.0
  %375 = vmatprep.subr.mxu0 0.0
  %376 = vmatpush1.msra.mxu0 0.0
  %377 = vmatprep.subr.mxu0 0.0
  %378 = vmatpush1.msra.mxu0 0.0
  %379 = vmatprep.subr.mxu0 0.0
  %380 = vmatpush1.msra.mxu0 0.0
  %381 = vmatprep.subr.mxu0 0.0
  %382 = vmatpush1.msra.mxu0 0.0
  %383 = vmatprep.subr.mxu0 0.0
  %384 = vmatpush1.msra.mxu0 0.0
  %385 = vmatprep.subr.mxu0 0.0
  %386 = vmatpush1.msra.mxu0 0.0
  %387 = vmatprep.subr.mxu0 0.0
  %388 = vmatpush1.msra.mxu0 0.0
  %389 = vmatprep.subr.mxu0 0.0
  %390 = vmatpush1.msra.mxu0 0.0
  %391 = vmatprep.mubr.f32.mxu0 0.0
  %392 = vmatmul.mubr.f32.gmra.mrb[0].mxu0 %v321
  %v393 = vpop.f32.mrb[0].mxu0
  %v394 = vadd.f32 0.0, %v393
  %v395 = vpop.f32.mrb[0].mxu0
  %396 = vdwg.mxu0
  %v397 = vmul.f32 %v124, %v394
  %v399 = vsel %vm323, %v318, 0
  %401 = vmatprep.subr.mxu0 0.0
  %402 = vmatpush1.msra.mxu0 %v399
  %403 = vmatprep.subr.mxu0 0.0
  %404 = vmatpush1.msra.mxu0 0.0
  %405 = vmatprep.subr.mxu0 0.0
  %406 = vmatpush1.msra.mxu0 0.0
  %407 = vmatprep.subr.mxu0 0.0
  %408 = vmatpush1.msra.mxu0 0.0
  %409 = vmatprep.subr.mxu0 0.0
  %410 = vmatpush1.msra.mxu0 0.0
  %411 = vmatprep.subr.mxu0 0.0
  %412 = vmatpush1.msra.mxu0 0.0
  %413 = vmatprep.subr.mxu0 0.0
  %414 = vmatpush1.msra.mxu0 0.0
  %415 = vmatprep.subr.mxu0 0.0
  %416 = vmatpush1.msra.mxu0 0.0
  %417 = vmatprep.subr.mxu0 0.0
  %418 = vmatpush1.msra.mxu0 0.0
  %419 = vmatprep.subr.mxu0 0.0
  %420 = vmatpush1.msra.mxu0 0.0
  %421 = vmatprep.subr.mxu0 0.0
  %422 = vmatpush1.msra.mxu0 0.0
  %423 = vmatprep.subr.mxu0 0.0
  %424 = vmatpush1.msra.mxu0 0.0
  %425 = vmatprep.subr.mxu0 0.0
  %426 = vmatpush1.msra.mxu0 0.0
  %427 = vmatprep.subr.mxu0 0.0
  %428 = vmatpush1.msra.mxu0 0.0
  %429 = vmatprep.subr.mxu0 0.0
  %430 = vmatpush1.msra.mxu0 0.0
  %431 = vmatprep.subr.mxu0 0.0
  %432 = vmatpush1.msra.mxu0 0.0
  %433 = vmatprep.subr.mxu0 0.0
  %434 = vmatpush1.msra.mxu0 0.0
  %435 = vmatprep.subr.mxu0 0.0
  %436 = vmatpush1.msra.mxu0 0.0
  %437 = vmatprep.subr.mxu0 0.0
  %438 = vmatpush1.msra.mxu0 0.0
  %439 = vmatprep.subr.mxu0 0.0
  %440 = vmatpush1.msra.mxu0 0.0
  %441 = vmatprep.subr.mxu0 0.0
  %442 = vmatpush1.msra.mxu0 0.0
  %443 = vmatprep.subr.mxu0 0.0
  %444 = vmatpush1.msra.mxu0 0.0
  %445 = vmatprep.subr.mxu0 0.0
  %446 = vmatpush1.msra.mxu0 0.0
  %447 = vmatprep.subr.mxu0 0.0
  %448 = vmatpush1.msra.mxu0 0.0
  %449 = vmatprep.subr.mxu0 0.0
  %450 = vmatpush1.msra.mxu0 0.0
  %451 = vmatprep.subr.mxu0 0.0
  %452 = vmatpush1.msra.mxu0 0.0
  %453 = vmatprep.subr.mxu0 0.0
  %454 = vmatpush1.msra.mxu0 0.0
  %455 = vmatprep.subr.mxu0 0.0
  %456 = vmatpush1.msra.mxu0 0.0
  %457 = vmatprep.subr.mxu0 0.0
  %458 = vmatpush1.msra.mxu0 0.0
  %459 = vmatprep.subr.mxu0 0.0
  %460 = vmatpush1.msra.mxu0 0.0
  %461 = vmatprep.subr.mxu0 0.0
  %462 = vmatpush1.msra.mxu0 0.0
  %463 = vmatprep.subr.mxu0 0.0
  %464 = vmatpush1.msra.mxu0 0.0
  %465 = vmatprep.mubr.f32.mxu0 0.0
  %466 = vmatmul.mubr.f32.gmra.mrb[0].mxu0 %v321
  %v467 = vpop.f32.mrb[0].mxu0
  %v468 = vadd.f32 0.0, %v467
  %v469 = vpop.f32.mrb[0].mxu0
  %470 = vdwg.mxu0
  %v471 = vadd.f32 %v397, %v468
  %v472 = vmax.f32 %v471, 0.0
  %v474 = vlaneseq
  %v475 = vshrl.u32 %v474, 7
  %v476 = vsub.s32 0, %v475
  %v477 = vrot.slane %v50, %v476
  %vm479 = vcmask 261120
  %v481 = vsel %vm479, %v472, 0
  %483 = vmatprep.subr.mxu0 0.0
  %484 = vmatpush1.msra.mxu0 %v46
  %485 = vmatprep.subr.mxu0 0.0
  %486 = vmatpush1.msra.mxu0 %v47
  %487 = vmatprep.subr.mxu0 0.0
  %488 = vmatpush1.msra.mxu0 %v48
  %489 = vmatprep.subr.mxu0 0.0
  %490 = vmatpush1.msra.mxu0 %v49
  %491 = vmatprep.subr.mxu0 0.0
  %492 = vmatpush1.msra.mxu0 0.0
  %493 = vmatprep.subr.mxu0 0.0
  %494 = vmatpush1.msra.mxu0 0.0
  %495 = vmatprep.subr.mxu0 0.0
  %496 = vmatpush1.msra.mxu0 0.0
  %497 = vmatprep.subr.mxu0 0.0
  %498 = vmatpush1.msra.mxu0 0.0
  %499 = vmatprep.subr.mxu0 0.0
  %500 = vmatpush1.msra.mxu0 0.0
  %501 = vmatprep.subr.mxu0 0.0
  %502 = vmatpush1.msra.mxu0 0.0
  %503 = vmatprep.subr.mxu0 0.0
  %504 = vmatpush1.msra.mxu0 0.0
  %505 = vmatprep.subr.mxu0 0.0
  %506 = vmatpush1.msra.mxu0 0.0
  %507 = vmatprep.subr.mxu0 0.0
  %508 = vmatpush1.msra.mxu0 0.0
  %509 = vmatprep.subr.mxu0 0.0
  %510 = vmatpush1.msra.mxu0 0.0
  %511 = vmatprep.subr.mxu0 0.0
  %512 = vmatpush1.msra.mxu0 0.0
  %513 = vmatprep.subr.mxu0 0.0
  %514 = vmatpush1.msra.mxu0 0.0
  %515 = vmatprep.subr.mxu0 0.0
  %516 = vmatpush1.msra.mxu0 0.0
  %517 = vmatprep.subr.mxu0 0.0
  %518 = vmatpush1.msra.mxu0 0.0
  %519 = vmatprep.subr.mxu0 0.0
  %520 = vmatpush1.msra.mxu0 0.0
  %521 = vmatprep.subr.mxu0 0.0
  %522 = vmatpush1.msra.mxu0 0.0
  %523 = vmatprep.subr.mxu0 0.0
  %524 = vmatpush1.msra.mxu0 0.0
  %525 = vmatprep.subr.mxu0 0.0
  %526 = vmatpush1.msra.mxu0 0.0
  %527 = vmatprep.subr.mxu0 0.0
  %528 = vmatpush1.msra.mxu0 0.0
  %529 = vmatprep.subr.mxu0 0.0
  %530 = vmatpush1.msra.mxu0 0.0
  %531 = vmatprep.subr.mxu0 0.0
  %532 = vmatpush1.msra.mxu0 0.0
  %533 = vmatprep.subr.mxu0 0.0
  %534 = vmatpush1.msra.mxu0 0.0
  %535 = vmatprep.subr.mxu0 0.0
  %536 = vmatpush1.msra.mxu0 0.0
  %537 = vmatprep.subr.mxu0 0.0
  %538 = vmatpush1.msra.mxu0 0.0
  %539 = vmatprep.subr.mxu0 0.0
  %540 = vmatpush1.msra.mxu0 0.0
  %541 = vmatprep.subr.mxu0 0.0
  %542 = vmatpush1.msra.mxu0 0.0
  %543 = vmatprep.subr.mxu0 0.0
  %544 = vmatpush1.msra.mxu0 0.0
  %545 = vmatprep.subr.mxu0 0.0
  %546 = vmatpush1.msra.mxu0 0.0
  %547 = vmatprep.mubr.f32.mxu0 0.0
  %548 = vmatmul.mubr.f32.gmra.mrb[0].mxu0 %v481
  %v549 = vpop.f32.mrb[0].mxu0
  %v550 = vadd.f32 %v477, %v549
  %v551 = vpop.f32.mrb[0].mxu0
  %552 = vdwg.mxu0
  %v553 = vmul.f32 %v550, %v550
  %vm554 = vcmask 125952
  %v555 = vsel %vm554, %v553, 0.0
  %556 = vadd.xlane.f32.xlu0 %v555
  %v557 = vpop.xlane.xlu0 %556
  %v558 = vmax.f32 %v557, 1e-24
  %v559 = vrsqrt.pop %v558
  %v560 = vmul.f32 %v550, %v559
  %561 = vst.msk [vmem:[%s7] sm:$0xf] %vm554, %v560
  // Predicated region
  $region30: #{byol_forward.7} parent=0 // pred_check
    _
  $region31: #{byol_forward.7} parent=0 // pred_check_branch
    %563 = sbr.rel (0) target = $region33
  $region32: #{byol_forward.7} parent=0 // pred_region
    _
  $region33: #{byol_forward.7} parent=0 // pred_fallthru
    _
  // Predicated region
  $region34: #{byol_forward.7} parent=0 // pred_check
    _
  $region35: #{byol_forward.7} parent=0 // pred_check_branch
    %565 = sbr.rel (0) target = $region37
  $region36: #{byol_forward.7} parent=0 // pred_region
    _
  $region37: #{byol_forward.7} parent=0 // pred_fallthru
    _

</llo_original>
